<compile_context>
chip_gen: v5e
topology: v5e:2x2
jax: 0.10.0
libtpu: 0.0.40
codegen_flags: <defaults>
</compile_context>

<pallas_src>
import numpy as np
import jax
import jax.numpy as jnp
from jax import lax
from jax.experimental import pallas as pl
from jax.experimental.pallas import tpu as pltpu


def _bilinear_matrix(out_size: int, in_size: int) -> np.ndarray:
    """Interp matrix W (out, in) so that y = W @ x matches
    torch.nn.Upsample(mode='bilinear', align_corners=True) along one axis."""
    w = np.zeros((out_size, in_size), np.float32)
    if out_size == 1:
        src = np.zeros((1,), np.float64)
    else:
        src = np.arange(out_size, dtype=np.float64) * (in_size - 1) / (out_size - 1)
    lo = np.clip(np.floor(src).astype(np.int64), 0, in_size - 1)
    hi = np.minimum(lo + 1, in_size - 1)
    frac = (src - lo).astype(np.float32)
    w[np.arange(out_size), lo] += 1.0 - frac
    w[np.arange(out_size), hi] += frac
    return w


def _up_conv_kernel(x_ref, wy_ref, wxt_ref, w_ref, b_ref, o_ref, pad_ref):
    """Fused bilinear upsample + 3x3 conv + folded BN + ELU for one batch element.

    Shapes per grid step (bf16 MXU operands, f32 accumulation):
      x_ref   : (1, C_in*H_in, W_in)   input, rows ordered (ci, hi)
      wy_ref  : (H_out, H_in)          height interpolation matrix
      wxt_ref : (W_in, Wp)             width interp^T with zero col 0 and Wp-1
      w_ref   : (9, C_out, C_in)       BN-folded conv taps, tap = ky*3 + kx
      b_ref   : (C_out, 1)             BN-folded bias (f32)
      o_ref   : (1, C_out, H_out*Wp)   lane-dense output (2 junk cols per row)
      pad_ref : VMEM (C_in, (H_out+3)*Wp) bf16, flat zero-padded activation
    """
    h_out, h_in = wy_ref.shape
    wp = wxt_ref.shape[1]
    c_out = o_ref.shape[1]
    hwp = o_ref.shape[2]                        # = h_out * wp
    c_in = pad_ref.shape[0]

    # Refresh only the never-written rows (top border, bottom border, slack row).
    # Not guarded by pl.when(program_id == 0) so it stays correct when the
    # "parallel" batch axis is sharded across TensorCores (a core may never see
    # program_id 0); the cost is 3 short rows per step.
    pad_ref[:, 0:wp] = jnp.zeros((c_in, wp), pad_ref.dtype)
    pad_ref[:, (h_out + 1) * wp:] = jnp.zeros((c_in, 2 * wp), pad_ref.dtype)

    # ---- bilinear upsample (align_corners=True) as two MXU matmuls ----
    x2 = x_ref[0]                                                   # (C_in*H_in, W_in) bf16
    t = jnp.dot(x2, wxt_ref[...], preferred_element_type=jnp.float32)   # (C_in*H_in, Wp)
    t3 = t.reshape(c_in, h_in, wp).astype(jnp.bfloat16)             # leading-dim split only
    wy_b = jnp.broadcast_to(wy_ref[...], (c_in, h_out, h_in))       # single hoisted broadcast
    u = lax.dot_general(wy_b, t3, (((2,), (1,)), ((0,), (0,))),
                        preferred_element_type=jnp.float32)         # (C_in, H_out, Wp)
    u = u.astype(jnp.bfloat16)

    # Store interior rows [1 .. H_out] of the flat padded activation.  Each row
    # already carries its left/right zero pad column (built into wxt_ref).
    # TODO(synk): a single (C_in, H_out*Wp) store would need a minor-dim reshape;
    #             kept as an unrolled row-store loop for guaranteed lowering.
    for h in range(h_out):
        pad_ref[:, (1 + h) * wp:(2 + h) * wp] = u[:, h, :]

    # ---- 3x3 conv: 9 lane-dense matmuls (C_out, C_in) @ (C_in, H_out*Wp) ----
    # Tap (ky, kx) is just the flat scratch shifted by ky*Wp + kx; columns
    # j in {W_out, W_out+1} of each row are junk and dropped by the wrapper.
    acc = jnp.zeros((c_out, hwp), jnp.float32)
    for ky in range(3):
        for kx in range(3):
            start = ky * wp + kx
            rhs = pad_ref[:, start:start + hwp]                     # (C_in, H_out*Wp) bf16
            acc = acc + jnp.dot(w_ref[ky * 3 + kx], rhs,
                                preferred_element_type=jnp.float32)

    # ---- fused epilogue: folded conv/BN bias + ELU(alpha=1), f32 on VPU/EUP ----
    y = acc + b_ref[...]
    y = jnp.where(y > 0.0, y, jnp.exp(jnp.minimum(y, 0.0)) - 1.0)
    o_ref[0] = y.astype(o_ref.dtype)


def up_conv_forward(x, wy, wxt_pad, w_taps, b_col, out_hw):
    n, c_in, h_in, w_in = x.shape
    c_out = w_taps.shape[1]
    h_out, w_out = out_hw
    wp = w_out + 2                       # padded row width (conv zero pad lives in-row)
    hwp = h_out * wp
    scratch_len = (h_out + 3) * wp       # top border + H_out interior + bottom border + slack

    x2 = x.astype(jnp.bfloat16).reshape(n, c_in * h_in, w_in)

    out_flat = pl.pallas_call(
        _up_conv_kernel,
        out_shape=jax.ShapeDtypeStruct((n, c_out, hwp), jnp.float32),
        grid=(n,),
        in_specs=[
            pl.BlockSpec((1, c_in * h_in, w_in), lambda i: (i, 0, 0)),
            pl.BlockSpec((h_out, h_in), lambda i: (0, 0)),
            pl.BlockSpec((w_in, wp), lambda i: (0, 0)),
            pl.BlockSpec((9, c_out, c_in), lambda i: (0, 0, 0)),
            pl.BlockSpec((c_out, 1), lambda i: (0, 0)),
        ],
        out_specs=pl.BlockSpec((1, c_out, hwp), lambda i: (i, 0, 0)),
        scratch_shapes=[pltpu.VMEM((c_in, scratch_len), jnp.bfloat16)],
        compiler_params=pltpu.CompilerParams(dimension_semantics=("parallel",)),
    )(x2, wy, wxt_pad, w_taps, b_col)

    # Lane-dense (C_out, H_out*Wp) -> NCHW: drop the 2 junk columns per row.
    return out_flat.reshape(n, c_out, h_out, wp)[:, :, :, :w_out]


class UpConv:
    """JAX/Pallas port of the PyTorch up_conv module (inference-mode BatchNorm)."""

    def __init__(self, in_ch, out_ch, size=None, scale_factor=None, *, key, eps=1e-5):
        self.in_ch, self.out_ch = in_ch, out_ch
        self.size, self.scale_factor = size, scale_factor
        self.eps = eps
        ks = jax.random.split(key, 6)
        fan_in = in_ch * 9
        self.w = jax.random.normal(ks[0], (out_ch, in_ch, 3, 3), jnp.float32) / np.sqrt(fan_in)
        self.b = 0.1 * jax.random.normal(ks[1], (out_ch,), jnp.float32)
        self.gamma = 1.0 + 0.1 * jax.random.normal(ks[2], (out_ch,), jnp.float32)
        self.beta = 0.1 * jax.random.normal(ks[3], (out_ch,), jnp.float32)
        self.running_mean = 0.1 * jax.random.normal(ks[4], (out_ch,), jnp.float32)
        self.running_var = 0.5 + jnp.abs(jax.random.normal(ks[5], (out_ch,), jnp.float32))

        # Fold eval-mode BatchNorm into the conv weight / bias ONCE at init.
        scale = self.gamma / jnp.sqrt(self.running_var + eps)
        w_fold = self.w * scale[:, None, None, None]
        b_fold = (self.b - self.running_mean) * scale + self.beta
        self._w_taps = jnp.transpose(w_fold, (2, 3, 0, 1)).reshape(9, out_ch, in_ch)
        self._w_taps = self._w_taps.astype(jnp.bfloat16)          # MXU operand
        self._b_col = b_fold.reshape(out_ch, 1).astype(jnp.float32)
        self._interp_cache = {}                                    # keyed by spatial shapes

    def _out_hw(self, h_in, w_in):
        if self.size is not None:
            if isinstance(self.size, (tuple, list)):
                return int(self.size[0]), int(self.size[1])
            return int(self.size), int(self.size)
        return int(h_in * self.scale_factor), int(w_in * self.scale_factor)

    def _interp(self, h_in, w_in, h_out, w_out):
        cache_key = (h_in, w_in, h_out, w_out)
        if cache_key not in self._interp_cache:
            wy = jnp.asarray(_bilinear_matrix(h_out, h_in)).astype(jnp.bfloat16)
            wx = _bilinear_matrix(w_out, w_in)                     # (W_out, W_in)
            wxt_pad = np.zeros((w_in, w_out + 2), np.float32)      # zero col 0 / W_out+1
            wxt_pad[:, 1:1 + w_out] = wx.T
            self._interp_cache[cache_key] = (wy, jnp.asarray(wxt_pad).astype(jnp.bfloat16))
        return self._interp_cache[cache_key]

    def __call__(self, x):
        h_in, w_in = x.shape[2], x.shape[3]
        h_out, w_out = self._out_hw(h_in, w_in)
        wy, wxt_pad = self._interp(h_in, w_in, h_out, w_out)
        return up_conv_forward(x, wy, wxt_pad, self._w_taps, self._b_col, (h_out, w_out))


def _reference(x, w, b, gamma, beta, mean, var, eps, out_hw):
    """Pure-JAX f32 reference: bilinear(align_corners) -> conv3x3 -> BN(eval) -> ELU."""
    h_out, w_out = out_hw
    wy = jnp.asarray(_bilinear_matrix(h_out, x.shape[2]))
    wx = jnp.asarray(_bilinear_matrix(w_out, x.shape[3]))
    u = jnp.einsum('Hh,nchw->ncHw', wy, x)
    u = jnp.einsum('Ww,ncHw->ncHW', wx, u)
    y = jax.lax.conv_general_dilated(
        u, w, window_strides=(1, 1), padding=((1, 1), (1, 1)),
        dimension_numbers=('NCHW', 'OIHW', 'NCHW'))
    y = y + b[None, :, None, None]
    inv = (gamma / jnp.sqrt(var + eps))[None, :, None, None]
    y = (y - mean[None, :, None, None]) * inv + beta[None, :, None, None]
    return jnp.where(y > 0.0, y, jnp.exp(jnp.minimum(y, 0.0)) - 1.0)


if __name__ == "__main__":
    key = jax.random.PRNGKey(0)
    k_x, k_mod = jax.random.split(key)

    N, C_in, H_in, W_in = 2, 4, 16, 16
    C_out, SCALE = 8, 2
    x = jax.random.normal(k_x, (N, C_in, H_in, W_in), jnp.float32)

    module = UpConv(in_ch=C_in, out_ch=C_out, size=None, scale_factor=SCALE, key=k_mod)
    y = jax.block_until_ready(module(x))

    assert y.shape == (N, C_out, H_in * SCALE, W_in * SCALE), y.shape
    assert y.dtype == jnp.float32

    y_ref = _reference(x, module.w, module.b, module.gamma, module.beta,
                       module.running_mean, module.running_var, module.eps,
                       (H_in * SCALE, W_in * SCALE))
    err = float(jnp.max(jnp.abs(y - y_ref)))
    assert err < 5e-2, f"max abs error vs reference: {err}"

    print("KERNEL_OK")
</pallas_src>

<mosaic_0001>
module attributes {stable_mosaic.version = 11 : i64} {
  func.func @_up_conv_kernel(%arg0: i32, %arg1: memref<1x64x16xbf16, #tpu.memory_space<vmem>>, %arg2: memref<32x16xbf16, #tpu.memory_space<vmem>>, %arg3: memref<16x34xbf16, #tpu.memory_space<vmem>>, %arg4: memref<9x8x4xbf16, #tpu.memory_space<vmem>>, %arg5: memref<8x1xf32, #tpu.memory_space<vmem>>, %arg6: memref<1x8x1088xf32, #tpu.memory_space<vmem>>, %arg7: memref<4x1190xbf16, #tpu.memory_space<vmem>>) attributes {dimension_semantics = [#tpu.dimension_semantics<parallel>], iteration_bounds = array<i64: 2>, scalar_prefetch = 0 : i64, scratch_operands = 1 : i64, tpu.core_type = #tpu.core_type<tc>, window_params = [{transform_indices = @transform_0, window_bounds = array<i64: 1, 64, 16>}, {pipeline_mode = #tpu.pipeline_mode<synchronous>, transform_indices = @transform_1, window_bounds = array<i64: 32, 16>}, {pipeline_mode = #tpu.pipeline_mode<synchronous>, transform_indices = @transform_2, window_bounds = array<i64: 16, 34>}, {pipeline_mode = #tpu.pipeline_mode<synchronous>, transform_indices = @transform_3, window_bounds = array<i64: 9, 8, 4>}, {pipeline_mode = #tpu.pipeline_mode<synchronous>, transform_indices = @transform_4, window_bounds = array<i64: 8, 1>}, {transform_indices = @transform_5, window_bounds = array<i64: 1, 8, 1088>}]} {
    %cst = arith.constant 0.000000e+00 : bf16
    %0 = vector.broadcast %cst : bf16 to vector<4x34xbf16>
    %c0 = arith.constant 0 : index
    %c0_0 = arith.constant 0 : index
    %1 = vector.load %arg7[%c0, %c0_0] : memref<4x1190xbf16, #tpu.memory_space<vmem>>, vector<4x34xbf16>
    tpu.vector_store %arg7[%c0, %c0_0], %0 {strides = array<i32>} : memref<4x1190xbf16, #tpu.memory_space<vmem>>, vector<4x34xbf16>,
    %cst_1 = arith.constant 0.000000e+00 : bf16
    %2 = vector.broadcast %cst_1 : bf16 to vector<4x68xbf16>
    %c0_2 = arith.constant 0 : index
    %c1122 = arith.constant 1122 : index
    %3 = vector.load %arg7[%c0_2, %c1122] : memref<4x1190xbf16, #tpu.memory_space<vmem>>, vector<4x68xbf16>
    tpu.vector_store %arg7[%c0_2, %c1122], %2 {strides = array<i32>} : memref<4x1190xbf16, #tpu.memory_space<vmem>>, vector<4x68xbf16>,
    %c0_3 = arith.constant 0 : index
    %c0_4 = arith.constant 0 : index
    %c0_5 = arith.constant 0 : index
    %4 = vector.load %arg1[%c0_3, %c0_4, %c0_5] : memref<1x64x16xbf16, #tpu.memory_space<vmem>>, vector<1x64x16xbf16>
    %5 = vector.shape_cast %4 : vector<1x64x16xbf16> to vector<64x16xbf16>
    %c0_6 = arith.constant 0 : index
    %c0_7 = arith.constant 0 : index
    %6 = vector.load %arg3[%c0_6, %c0_7] : memref<16x34xbf16, #tpu.memory_space<vmem>>, vector<16x34xbf16>
    %cst_8 = arith.constant dense<0.000000e+00> : vector<64x34xf32>
    %7 = tpu.matmul %5, %6, %cst_8 {dimension_numbers = #tpu.dot_dimension_numbers<[1], [0], [0], [1], [0, 0, 1, 1], [], []>} : vector<64x16xbf16>, vector<16x34xbf16>, vector<64x34xf32> -> vector<64x34xf32>
    %8 = vector.shape_cast %7 : vector<64x34xf32> to vector<4x16x34xf32>
    %9 = arith.truncf %8 : vector<4x16x34xf32> to vector<4x16x34xbf16>
    %c0_9 = arith.constant 0 : index
    %c0_10 = arith.constant 0 : index
    %10 = vector.load %arg2[%c0_9, %c0_10] : memref<32x16xbf16, #tpu.memory_space<vmem>>, vector<32x16xbf16>
    %11 = vector.shape_cast %10 : vector<32x16xbf16> to vector<1x32x16xbf16>
    %12 = vector.broadcast %11 : vector<1x32x16xbf16> to vector<4x32x16xbf16>
    %cst_11 = arith.constant dense<0.000000e+00> : vector<4x32x34xf32>
    %13 = tpu.matmul %12, %9, %cst_11 {dimension_numbers = #tpu.dot_dimension_numbers<[2], [1], [1], [2], [0, 0, 0, 1, 1, 2], [0], [0]>} : vector<4x32x16xbf16>, vector<4x16x34xbf16>, vector<4x32x34xf32> -> vector<4x32x34xf32>
    %14 = arith.truncf %13 : vector<4x32x34xf32> to vector<4x32x34xbf16>
    %15 = vector.extract_strided_slice %14 {offsets = [0, 0, 0], sizes = [4, 1, 34], strides = [1, 1, 1]} : vector<4x32x34xbf16> to vector<4x1x34xbf16>
    %16 = vector.shape_cast %15 : vector<4x1x34xbf16> to vector<4x34xbf16>
    %c0_12 = arith.constant 0 : index
    %c34 = arith.constant 34 : index
    %17 = vector.load %arg7[%c0_12, %c34] : memref<4x1190xbf16, #tpu.memory_space<vmem>>, vector<4x34xbf16>
    tpu.vector_store %arg7[%c0_12, %c34], %16 {strides = array<i32>} : memref<4x1190xbf16, #tpu.memory_space<vmem>>, vector<4x34xbf16>,
    %18 = vector.extract_strided_slice %14 {offsets = [0, 1, 0], sizes = [4, 1, 34], strides = [1, 1, 1]} : vector<4x32x34xbf16> to vector<4x1x34xbf16>
    %19 = vector.shape_cast %18 : vector<4x1x34xbf16> to vector<4x34xbf16>
    %c0_13 = arith.constant 0 : index
    %c68 = arith.constant 68 : index
    %20 = vector.load %arg7[%c0_13, %c68] : memref<4x1190xbf16, #tpu.memory_space<vmem>>, vector<4x34xbf16>
    tpu.vector_store %arg7[%c0_13, %c68], %19 {strides = array<i32>} : memref<4x1190xbf16, #tpu.memory_space<vmem>>, vector<4x34xbf16>,
    %21 = vector.extract_strided_slice %14 {offsets = [0, 2, 0], sizes = [4, 1, 34], strides = [1, 1, 1]} : vector<4x32x34xbf16> to vector<4x1x34xbf16>
    %22 = vector.shape_cast %21 : vector<4x1x34xbf16> to vector<4x34xbf16>
    %c0_14 = arith.constant 0 : index
    %c102 = arith.constant 102 : index
    %23 = vector.load %arg7[%c0_14, %c102] : memref<4x1190xbf16, #tpu.memory_space<vmem>>, vector<4x34xbf16>
    tpu.vector_store %arg7[%c0_14, %c102], %22 {strides = array<i32>} : memref<4x1190xbf16, #tpu.memory_space<vmem>>, vector<4x34xbf16>,
    %24 = vector.extract_strided_slice %14 {offsets = [0, 3, 0], sizes = [4, 1, 34], strides = [1, 1, 1]} : vector<4x32x34xbf16> to vector<4x1x34xbf16>
    %25 = vector.shape_cast %24 : vector<4x1x34xbf16> to vector<4x34xbf16>
    %c0_15 = arith.constant 0 : index
    %c136 = arith.constant 136 : index
    %26 = vector.load %arg7[%c0_15, %c136] : memref<4x1190xbf16, #tpu.memory_space<vmem>>, vector<4x34xbf16>
    tpu.vector_store %arg7[%c0_15, %c136], %25 {strides = array<i32>} : memref<4x1190xbf16, #tpu.memory_space<vmem>>, vector<4x34xbf16>,
    %27 = vector.extract_strided_slice %14 {offsets = [0, 4, 0], sizes = [4, 1, 34], strides = [1, 1, 1]} : vector<4x32x34xbf16> to vector<4x1x34xbf16>
    %28 = vector.shape_cast %27 : vector<4x1x34xbf16> to vector<4x34xbf16>
    %c0_16 = arith.constant 0 : index
    %c170 = arith.constant 170 : index
    %29 = vector.load %arg7[%c0_16, %c170] : memref<4x1190xbf16, #tpu.memory_space<vmem>>, vector<4x34xbf16>
    tpu.vector_store %arg7[%c0_16, %c170], %28 {strides = array<i32>} : memref<4x1190xbf16, #tpu.memory_space<vmem>>, vector<4x34xbf16>,
    %30 = vector.extract_strided_slice %14 {offsets = [0, 5, 0], sizes = [4, 1, 34], strides = [1, 1, 1]} : vector<4x32x34xbf16> to vector<4x1x34xbf16>
    %31 = vector.shape_cast %30 : vector<4x1x34xbf16> to vector<4x34xbf16>
    %c0_17 = arith.constant 0 : index
    %c204 = arith.constant 204 : index
    %32 = vector.load %arg7[%c0_17, %c204] : memref<4x1190xbf16, #tpu.memory_space<vmem>>, vector<4x34xbf16>
    tpu.vector_store %arg7[%c0_17, %c204], %31 {strides = array<i32>} : memref<4x1190xbf16, #tpu.memory_space<vmem>>, vector<4x34xbf16>,
    %33 = vector.extract_strided_slice %14 {offsets = [0, 6, 0], sizes = [4, 1, 34], strides = [1, 1, 1]} : vector<4x32x34xbf16> to vector<4x1x34xbf16>
    %34 = vector.shape_cast %33 : vector<4x1x34xbf16> to vector<4x34xbf16>
    %c0_18 = arith.constant 0 : index
    %c238 = arith.constant 238 : index
    %35 = vector.load %arg7[%c0_18, %c238] : memref<4x1190xbf16, #tpu.memory_space<vmem>>, vector<4x34xbf16>
    tpu.vector_store %arg7[%c0_18, %c238], %34 {strides = array<i32>} : memref<4x1190xbf16, #tpu.memory_space<vmem>>, vector<4x34xbf16>,
    %36 = vector.extract_strided_slice %14 {offsets = [0, 7, 0], sizes = [4, 1, 34], strides = [1, 1, 1]} : vector<4x32x34xbf16> to vector<4x1x34xbf16>
    %37 = vector.shape_cast %36 : vector<4x1x34xbf16> to vector<4x34xbf16>
    %c0_19 = arith.constant 0 : index
    %c272 = arith.constant 272 : index
    %38 = vector.load %arg7[%c0_19, %c272] : memref<4x1190xbf16, #tpu.memory_space<vmem>>, vector<4x34xbf16>
    tpu.vector_store %arg7[%c0_19, %c272], %37 {strides = array<i32>} : memref<4x1190xbf16, #tpu.memory_space<vmem>>, vector<4x34xbf16>,
    %39 = vector.extract_strided_slice %14 {offsets = [0, 8, 0], sizes = [4, 1, 34], strides = [1, 1, 1]} : vector<4x32x34xbf16> to vector<4x1x34xbf16>
    %40 = vector.shape_cast %39 : vector<4x1x34xbf16> to vector<4x34xbf16>
    %c0_20 = arith.constant 0 : index
    %c306 = arith.constant 306 : index
    %41 = vector.load %arg7[%c0_20, %c306] : memref<4x1190xbf16, #tpu.memory_space<vmem>>, vector<4x34xbf16>
    tpu.vector_store %arg7[%c0_20, %c306], %40 {strides = array<i32>} : memref<4x1190xbf16, #tpu.memory_space<vmem>>, vector<4x34xbf16>,
    %42 = vector.extract_strided_slice %14 {offsets = [0, 9, 0], sizes = [4, 1, 34], strides = [1, 1, 1]} : vector<4x32x34xbf16> to vector<4x1x34xbf16>
    %43 = vector.shape_cast %42 : vector<4x1x34xbf16> to vector<4x34xbf16>
    %c0_21 = arith.constant 0 : index
    %c340 = arith.constant 340 : index
    %44 = vector.load %arg7[%c0_21, %c340] : memref<4x1190xbf16, #tpu.memory_space<vmem>>, vector<4x34xbf16>
    tpu.vector_store %arg7[%c0_21, %c340], %43 {strides = array<i32>} : memref<4x1190xbf16, #tpu.memory_space<vmem>>, vector<4x34xbf16>,
    %45 = vector.extract_strided_slice %14 {offsets = [0, 10, 0], sizes = [4, 1, 34], strides = [1, 1, 1]} : vector<4x32x34xbf16> to vector<4x1x34xbf16>
    %46 = vector.shape_cast %45 : vector<4x1x34xbf16> to vector<4x34xbf16>
    %c0_22 = arith.constant 0 : index
    %c374 = arith.constant 374 : index
    %47 = vector.load %arg7[%c0_22, %c374] : memref<4x1190xbf16, #tpu.memory_space<vmem>>, vector<4x34xbf16>
    tpu.vector_store %arg7[%c0_22, %c374], %46 {strides = array<i32>} : memref<4x1190xbf16, #tpu.memory_space<vmem>>, vector<4x34xbf16>,
    %48 = vector.extract_strided_slice %14 {offsets = [0, 11, 0], sizes = [4, 1, 34], strides = [1, 1, 1]} : vector<4x32x34xbf16> to vector<4x1x34xbf16>
    %49 = vector.shape_cast %48 : vector<4x1x34xbf16> to vector<4x34xbf16>
    %c0_23 = arith.constant 0 : index
    %c408 = arith.constant 408 : index
    %50 = vector.load %arg7[%c0_23, %c408] : memref<4x1190xbf16, #tpu.memory_space<vmem>>, vector<4x34xbf16>
    tpu.vector_store %arg7[%c0_23, %c408], %49 {strides = array<i32>} : memref<4x1190xbf16, #tpu.memory_space<vmem>>, vector<4x34xbf16>,
    %51 = vector.extract_strided_slice %14 {offsets = [0, 12, 0], sizes = [4, 1, 34], strides = [1, 1, 1]} : vector<4x32x34xbf16> to vector<4x1x34xbf16>
    %52 = vector.shape_cast %51 : vector<4x1x34xbf16> to vector<4x34xbf16>
    %c0_24 = arith.constant 0 : index
    %c442 = arith.constant 442 : index
    %53 = vector.load %arg7[%c0_24, %c442] : memref<4x1190xbf16, #tpu.memory_space<vmem>>, vector<4x34xbf16>
    tpu.vector_store %arg7[%c0_24, %c442], %52 {strides = array<i32>} : memref<4x1190xbf16, #tpu.memory_space<vmem>>, vector<4x34xbf16>,
    %54 = vector.extract_strided_slice %14 {offsets = [0, 13, 0], sizes = [4, 1, 34], strides = [1, 1, 1]} : vector<4x32x34xbf16> to vector<4x1x34xbf16>
    %55 = vector.shape_cast %54 : vector<4x1x34xbf16> to vector<4x34xbf16>
    %c0_25 = arith.constant 0 : index
    %c476 = arith.constant 476 : index
    %56 = vector.load %arg7[%c0_25, %c476] : memref<4x1190xbf16, #tpu.memory_space<vmem>>, vector<4x34xbf16>
    tpu.vector_store %arg7[%c0_25, %c476], %55 {strides = array<i32>} : memref<4x1190xbf16, #tpu.memory_space<vmem>>, vector<4x34xbf16>,
    %57 = vector.extract_strided_slice %14 {offsets = [0, 14, 0], sizes = [4, 1, 34], strides = [1, 1, 1]} : vector<4x32x34xbf16> to vector<4x1x34xbf16>
    %58 = vector.shape_cast %57 : vector<4x1x34xbf16> to vector<4x34xbf16>
    %c0_26 = arith.constant 0 : index
    %c510 = arith.constant 510 : index
    %59 = vector.load %arg7[%c0_26, %c510] : memref<4x1190xbf16, #tpu.memory_space<vmem>>, vector<4x34xbf16>
    tpu.vector_store %arg7[%c0_26, %c510], %58 {strides = array<i32>} : memref<4x1190xbf16, #tpu.memory_space<vmem>>, vector<4x34xbf16>,
    %60 = vector.extract_strided_slice %14 {offsets = [0, 15, 0], sizes = [4, 1, 34], strides = [1, 1, 1]} : vector<4x32x34xbf16> to vector<4x1x34xbf16>
    %61 = vector.shape_cast %60 : vector<4x1x34xbf16> to vector<4x34xbf16>
    %c0_27 = arith.constant 0 : index
    %c544 = arith.constant 544 : index
    %62 = vector.load %arg7[%c0_27, %c544] : memref<4x1190xbf16, #tpu.memory_space<vmem>>, vector<4x34xbf16>
    tpu.vector_store %arg7[%c0_27, %c544], %61 {strides = array<i32>} : memref<4x1190xbf16, #tpu.memory_space<vmem>>, vector<4x34xbf16>,
    %63 = vector.extract_strided_slice %14 {offsets = [0, 16, 0], sizes = [4, 1, 34], strides = [1, 1, 1]} : vector<4x32x34xbf16> to vector<4x1x34xbf16>
    %64 = vector.shape_cast %63 : vector<4x1x34xbf16> to vector<4x34xbf16>
    %c0_28 = arith.constant 0 : index
    %c578 = arith.constant 578 : index
    %65 = vector.load %arg7[%c0_28, %c578] : memref<4x1190xbf16, #tpu.memory_space<vmem>>, vector<4x34xbf16>
    tpu.vector_store %arg7[%c0_28, %c578], %64 {strides = array<i32>} : memref<4x1190xbf16, #tpu.memory_space<vmem>>, vector<4x34xbf16>,
    %66 = vector.extract_strided_slice %14 {offsets = [0, 17, 0], sizes = [4, 1, 34], strides = [1, 1, 1]} : vector<4x32x34xbf16> to vector<4x1x34xbf16>
    %67 = vector.shape_cast %66 : vector<4x1x34xbf16> to vector<4x34xbf16>
    %c0_29 = arith.constant 0 : index
    %c612 = arith.constant 612 : index
    %68 = vector.load %arg7[%c0_29, %c612] : memref<4x1190xbf16, #tpu.memory_space<vmem>>, vector<4x34xbf16>
    tpu.vector_store %arg7[%c0_29, %c612], %67 {strides = array<i32>} : memref<4x1190xbf16, #tpu.memory_space<vmem>>, vector<4x34xbf16>,
    %69 = vector.extract_strided_slice %14 {offsets = [0, 18, 0], sizes = [4, 1, 34], strides = [1, 1, 1]} : vector<4x32x34xbf16> to vector<4x1x34xbf16>
    %70 = vector.shape_cast %69 : vector<4x1x34xbf16> to vector<4x34xbf16>
    %c0_30 = arith.constant 0 : index
    %c646 = arith.constant 646 : index
    %71 = vector.load %arg7[%c0_30, %c646] : memref<4x1190xbf16, #tpu.memory_space<vmem>>, vector<4x34xbf16>
    tpu.vector_store %arg7[%c0_30, %c646], %70 {strides = array<i32>} : memref<4x1190xbf16, #tpu.memory_space<vmem>>, vector<4x34xbf16>,
    %72 = vector.extract_strided_slice %14 {offsets = [0, 19, 0], sizes = [4, 1, 34], strides = [1, 1, 1]} : vector<4x32x34xbf16> to vector<4x1x34xbf16>
    %73 = vector.shape_cast %72 : vector<4x1x34xbf16> to vector<4x34xbf16>
    %c0_31 = arith.constant 0 : index
    %c680 = arith.constant 680 : index
    %74 = vector.load %arg7[%c0_31, %c680] : memref<4x1190xbf16, #tpu.memory_space<vmem>>, vector<4x34xbf16>
    tpu.vector_store %arg7[%c0_31, %c680], %73 {strides = array<i32>} : memref<4x1190xbf16, #tpu.memory_space<vmem>>, vector<4x34xbf16>,
    %75 = vector.extract_strided_slice %14 {offsets = [0, 20, 0], sizes = [4, 1, 34], strides = [1, 1, 1]} : vector<4x32x34xbf16> to vector<4x1x34xbf16>
    %76 = vector.shape_cast %75 : vector<4x1x34xbf16> to vector<4x34xbf16>
    %c0_32 = arith.constant 0 : index
    %c714 = arith.constant 714 : index
    %77 = vector.load %arg7[%c0_32, %c714] : memref<4x1190xbf16, #tpu.memory_space<vmem>>, vector<4x34xbf16>
    tpu.vector_store %arg7[%c0_32, %c714], %76 {strides = array<i32>} : memref<4x1190xbf16, #tpu.memory_space<vmem>>, vector<4x34xbf16>,
    %78 = vector.extract_strided_slice %14 {offsets = [0, 21, 0], sizes = [4, 1, 34], strides = [1, 1, 1]} : vector<4x32x34xbf16> to vector<4x1x34xbf16>
    %79 = vector.shape_cast %78 : vector<4x1x34xbf16> to vector<4x34xbf16>
    %c0_33 = arith.constant 0 : index
    %c748 = arith.constant 748 : index
    %80 = vector.load %arg7[%c0_33, %c748] : memref<4x1190xbf16, #tpu.memory_space<vmem>>, vector<4x34xbf16>
    tpu.vector_store %arg7[%c0_33, %c748], %79 {strides = array<i32>} : memref<4x1190xbf16, #tpu.memory_space<vmem>>, vector<4x34xbf16>,
    %81 = vector.extract_strided_slice %14 {offsets = [0, 22, 0], sizes = [4, 1, 34], strides = [1, 1, 1]} : vector<4x32x34xbf16> to vector<4x1x34xbf16>
    %82 = vector.shape_cast %81 : vector<4x1x34xbf16> to vector<4x34xbf16>
    %c0_34 = arith.constant 0 : index
    %c782 = arith.constant 782 : index
    %83 = vector.load %arg7[%c0_34, %c782] : memref<4x1190xbf16, #tpu.memory_space<vmem>>, vector<4x34xbf16>
    tpu.vector_store %arg7[%c0_34, %c782], %82 {strides = array<i32>} : memref<4x1190xbf16, #tpu.memory_space<vmem>>, vector<4x34xbf16>,
    %84 = vector.extract_strided_slice %14 {offsets = [0, 23, 0], sizes = [4, 1, 34], strides = [1, 1, 1]} : vector<4x32x34xbf16> to vector<4x1x34xbf16>
    %85 = vector.shape_cast %84 : vector<4x1x34xbf16> to vector<4x34xbf16>
    %c0_35 = arith.constant 0 : index
    %c816 = arith.constant 816 : index
    %86 = vector.load %arg7[%c0_35, %c816] : memref<4x1190xbf16, #tpu.memory_space<vmem>>, vector<4x34xbf16>
    tpu.vector_store %arg7[%c0_35, %c816], %85 {strides = array<i32>} : memref<4x1190xbf16, #tpu.memory_space<vmem>>, vector<4x34xbf16>,
    %87 = vector.extract_strided_slice %14 {offsets = [0, 24, 0], sizes = [4, 1, 34], strides = [1, 1, 1]} : vector<4x32x34xbf16> to vector<4x1x34xbf16>
    %88 = vector.shape_cast %87 : vector<4x1x34xbf16> to vector<4x34xbf16>
    %c0_36 = arith.constant 0 : index
    %c850 = arith.constant 850 : index
    %89 = vector.load %arg7[%c0_36, %c850] : memref<4x1190xbf16, #tpu.memory_space<vmem>>, vector<4x34xbf16>
    tpu.vector_store %arg7[%c0_36, %c850], %88 {strides = array<i32>} : memref<4x1190xbf16, #tpu.memory_space<vmem>>, vector<4x34xbf16>,
    %90 = vector.extract_strided_slice %14 {offsets = [0, 25, 0], sizes = [4, 1, 34], strides = [1, 1, 1]} : vector<4x32x34xbf16> to vector<4x1x34xbf16>
    %91 = vector.shape_cast %90 : vector<4x1x34xbf16> to vector<4x34xbf16>
    %c0_37 = arith.constant 0 : index
    %c884 = arith.constant 884 : index
    %92 = vector.load %arg7[%c0_37, %c884] : memref<4x1190xbf16, #tpu.memory_space<vmem>>, vector<4x34xbf16>
    tpu.vector_store %arg7[%c0_37, %c884], %91 {strides = array<i32>} : memref<4x1190xbf16, #tpu.memory_space<vmem>>, vector<4x34xbf16>,
    %93 = vector.extract_strided_slice %14 {offsets = [0, 26, 0], sizes = [4, 1, 34], strides = [1, 1, 1]} : vector<4x32x34xbf16> to vector<4x1x34xbf16>
    %94 = vector.shape_cast %93 : vector<4x1x34xbf16> to vector<4x34xbf16>
    %c0_38 = arith.constant 0 : index
    %c918 = arith.constant 918 : index
    %95 = vector.load %arg7[%c0_38, %c918] : memref<4x1190xbf16, #tpu.memory_space<vmem>>, vector<4x34xbf16>
    tpu.vector_store %arg7[%c0_38, %c918], %94 {strides = array<i32>} : memref<4x1190xbf16, #tpu.memory_space<vmem>>, vector<4x34xbf16>,
    %96 = vector.extract_strided_slice %14 {offsets = [0, 27, 0], sizes = [4, 1, 34], strides = [1, 1, 1]} : vector<4x32x34xbf16> to vector<4x1x34xbf16>
    %97 = vector.shape_cast %96 : vector<4x1x34xbf16> to vector<4x34xbf16>
    %c0_39 = arith.constant 0 : index
    %c952 = arith.constant 952 : index
    %98 = vector.load %arg7[%c0_39, %c952] : memref<4x1190xbf16, #tpu.memory_space<vmem>>, vector<4x34xbf16>
    tpu.vector_store %arg7[%c0_39, %c952], %97 {strides = array<i32>} : memref<4x1190xbf16, #tpu.memory_space<vmem>>, vector<4x34xbf16>,
    %99 = vector.extract_strided_slice %14 {offsets = [0, 28, 0], sizes = [4, 1, 34], strides = [1, 1, 1]} : vector<4x32x34xbf16> to vector<4x1x34xbf16>
    %100 = vector.shape_cast %99 : vector<4x1x34xbf16> to vector<4x34xbf16>
    %c0_40 = arith.constant 0 : index
    %c986 = arith.constant 986 : index
    %101 = vector.load %arg7[%c0_40, %c986] : memref<4x1190xbf16, #tpu.memory_space<vmem>>, vector<4x34xbf16>
    tpu.vector_store %arg7[%c0_40, %c986], %100 {strides = array<i32>} : memref<4x1190xbf16, #tpu.memory_space<vmem>>, vector<4x34xbf16>,
    %102 = vector.extract_strided_slice %14 {offsets = [0, 29, 0], sizes = [4, 1, 34], strides = [1, 1, 1]} : vector<4x32x34xbf16> to vector<4x1x34xbf16>
    %103 = vector.shape_cast %102 : vector<4x1x34xbf16> to vector<4x34xbf16>
    %c0_41 = arith.constant 0 : index
    %c1020 = arith.constant 1020 : index
    %104 = vector.load %arg7[%c0_41, %c1020] : memref<4x1190xbf16, #tpu.memory_space<vmem>>, vector<4x34xbf16>
    tpu.vector_store %arg7[%c0_41, %c1020], %103 {strides = array<i32>} : memref<4x1190xbf16, #tpu.memory_space<vmem>>, vector<4x34xbf16>,
    %105 = vector.extract_strided_slice %14 {offsets = [0, 30, 0], sizes = [4, 1, 34], strides = [1, 1, 1]} : vector<4x32x34xbf16> to vector<4x1x34xbf16>
    %106 = vector.shape_cast %105 : vector<4x1x34xbf16> to vector<4x34xbf16>
    %c0_42 = arith.constant 0 : index
    %c1054 = arith.constant 1054 : index
    %107 = vector.load %arg7[%c0_42, %c1054] : memref<4x1190xbf16, #tpu.memory_space<vmem>>, vector<4x34xbf16>
    tpu.vector_store %arg7[%c0_42, %c1054], %106 {strides = array<i32>} : memref<4x1190xbf16, #tpu.memory_space<vmem>>, vector<4x34xbf16>,
    %108 = vector.extract_strided_slice %14 {offsets = [0, 31, 0], sizes = [4, 1, 34], strides = [1, 1, 1]} : vector<4x32x34xbf16> to vector<4x1x34xbf16>
    %109 = vector.shape_cast %108 : vector<4x1x34xbf16> to vector<4x34xbf16>
    %c0_43 = arith.constant 0 : index
    %c1088 = arith.constant 1088 : index
    %110 = vector.load %arg7[%c0_43, %c1088] : memref<4x1190xbf16, #tpu.memory_space<vmem>>, vector<4x34xbf16>
    tpu.vector_store %arg7[%c0_43, %c1088], %109 {strides = array<i32>} : memref<4x1190xbf16, #tpu.memory_space<vmem>>, vector<4x34xbf16>,
    %cst_44 = arith.constant 0.000000e+00 : f32
    %111 = vector.broadcast %cst_44 : f32 to vector<8x1088xf32>
    %c0_45 = arith.constant 0 : index
    %c0_46 = arith.constant 0 : index
    %112 = vector.load %arg7[%c0_45, %c0_46] : memref<4x1190xbf16, #tpu.memory_space<vmem>>, vector<4x1088xbf16>
    %c0_47 = arith.constant 0 : index
    %c0_48 = arith.constant 0 : index
    %c0_49 = arith.constant 0 : index
    %113 = vector.load %arg4[%c0_47, %c0_48, %c0_49] : memref<9x8x4xbf16, #tpu.memory_space<vmem>>, vector<1x8x4xbf16>
    %114 = vector.shape_cast %113 : vector<1x8x4xbf16> to vector<8x4xbf16>
    %cst_50 = arith.constant dense<0.000000e+00> : vector<8x1088xf32>
    %115 = tpu.matmul %114, %112, %cst_50 {dimension_numbers = #tpu.dot_dimension_numbers<[1], [0], [0], [1], [0, 0, 1, 1], [], []>} : vector<8x4xbf16>, vector<4x1088xbf16>, vector<8x1088xf32> -> vector<8x1088xf32>
    %116 = arith.addf %111, %115 : vector<8x1088xf32>
    %c0_51 = arith.constant 0 : index
    %c1 = arith.constant 1 : index
    %117 = vector.load %arg7[%c0_51, %c1] : memref<4x1190xbf16, #tpu.memory_space<vmem>>, vector<4x1088xbf16>
    %c1_52 = arith.constant 1 : index
    %c0_53 = arith.constant 0 : index
    %c0_54 = arith.constant 0 : index
    %118 = vector.load %arg4[%c1_52, %c0_53, %c0_54] : memref<9x8x4xbf16, #tpu.memory_space<vmem>>, vector<1x8x4xbf16>
    %119 = vector.shape_cast %118 : vector<1x8x4xbf16> to vector<8x4xbf16>
    %cst_55 = arith.constant dense<0.000000e+00> : vector<8x1088xf32>
    %120 = tpu.matmul %119, %117, %cst_55 {dimension_numbers = #tpu.dot_dimension_numbers<[1], [0], [0], [1], [0, 0, 1, 1], [], []>} : vector<8x4xbf16>, vector<4x1088xbf16>, vector<8x1088xf32> -> vector<8x1088xf32>
    %121 = arith.addf %116, %120 : vector<8x1088xf32>
    %c0_56 = arith.constant 0 : index
    %c2 = arith.constant 2 : index
    %122 = vector.load %arg7[%c0_56, %c2] : memref<4x1190xbf16, #tpu.memory_space<vmem>>, vector<4x1088xbf16>
    %c2_57 = arith.constant 2 : index
    %c0_58 = arith.constant 0 : index
    %c0_59 = arith.constant 0 : index
    %123 = vector.load %arg4[%c2_57, %c0_58, %c0_59] : memref<9x8x4xbf16, #tpu.memory_space<vmem>>, vector<1x8x4xbf16>
    %124 = vector.shape_cast %123 : vector<1x8x4xbf16> to vector<8x4xbf16>
    %cst_60 = arith.constant dense<0.000000e+00> : vector<8x1088xf32>
    %125 = tpu.matmul %124, %122, %cst_60 {dimension_numbers = #tpu.dot_dimension_numbers<[1], [0], [0], [1], [0, 0, 1, 1], [], []>} : vector<8x4xbf16>, vector<4x1088xbf16>, vector<8x1088xf32> -> vector<8x1088xf32>
    %126 = arith.addf %121, %125 : vector<8x1088xf32>
    %c0_61 = arith.constant 0 : index
    %c34_62 = arith.constant 34 : index
    %127 = vector.load %arg7[%c0_61, %c34_62] : memref<4x1190xbf16, #tpu.memory_space<vmem>>, vector<4x1088xbf16>
    %c3 = arith.constant 3 : index
    %c0_63 = arith.constant 0 : index
    %c0_64 = arith.constant 0 : index
    %128 = vector.load %arg4[%c3, %c0_63, %c0_64] : memref<9x8x4xbf16, #tpu.memory_space<vmem>>, vector<1x8x4xbf16>
    %129 = vector.shape_cast %128 : vector<1x8x4xbf16> to vector<8x4xbf16>
    %cst_65 = arith.constant dense<0.000000e+00> : vector<8x1088xf32>
    %130 = tpu.matmul %129, %127, %cst_65 {dimension_numbers = #tpu.dot_dimension_numbers<[1], [0], [0], [1], [0, 0, 1, 1], [], []>} : vector<8x4xbf16>, vector<4x1088xbf16>, vector<8x1088xf32> -> vector<8x1088xf32>
    %131 = arith.addf %126, %130 : vector<8x1088xf32>
    %c0_66 = arith.constant 0 : index
    %c35 = arith.constant 35 : index
    %132 = vector.load %arg7[%c0_66, %c35] : memref<4x1190xbf16, #tpu.memory_space<vmem>>, vector<4x1088xbf16>
    %c4 = arith.constant 4 : index
    %c0_67 = arith.constant 0 : index
    %c0_68 = arith.constant 0 : index
    %133 = vector.load %arg4[%c4, %c0_67, %c0_68] : memref<9x8x4xbf16, #tpu.memory_space<vmem>>, vector<1x8x4xbf16>
    %134 = vector.shape_cast %133 : vector<1x8x4xbf16> to vector<8x4xbf16>
    %cst_69 = arith.constant dense<0.000000e+00> : vector<8x1088xf32>
    %135 = tpu.matmul %134, %132, %cst_69 {dimension_numbers = #tpu.dot_dimension_numbers<[1], [0], [0], [1], [0, 0, 1, 1], [], []>} : vector<8x4xbf16>, vector<4x1088xbf16>, vector<8x1088xf32> -> vector<8x1088xf32>
    %136 = arith.addf %131, %135 : vector<8x1088xf32>
    %c0_70 = arith.constant 0 : index
    %c36 = arith.constant 36 : index
    %137 = vector.load %arg7[%c0_70, %c36] : memref<4x1190xbf16, #tpu.memory_space<vmem>>, vector<4x1088xbf16>
    %c5 = arith.constant 5 : index
    %c0_71 = arith.constant 0 : index
    %c0_72 = arith.constant 0 : index
    %138 = vector.load %arg4[%c5, %c0_71, %c0_72] : memref<9x8x4xbf16, #tpu.memory_space<vmem>>, vector<1x8x4xbf16>
    %139 = vector.shape_cast %138 : vector<1x8x4xbf16> to vector<8x4xbf16>
    %cst_73 = arith.constant dense<0.000000e+00> : vector<8x1088xf32>
    %140 = tpu.matmul %139, %137, %cst_73 {dimension_numbers = #tpu.dot_dimension_numbers<[1], [0], [0], [1], [0, 0, 1, 1], [], []>} : vector<8x4xbf16>, vector<4x1088xbf16>, vector<8x1088xf32> -> vector<8x1088xf32>
    %141 = arith.addf %136, %140 : vector<8x1088xf32>
    %c0_74 = arith.constant 0 : index
    %c68_75 = arith.constant 68 : index
    %142 = vector.load %arg7[%c0_74, %c68_75] : memref<4x1190xbf16, #tpu.memory_space<vmem>>, vector<4x1088xbf16>
    %c6 = arith.constant 6 : index
    %c0_76 = arith.constant 0 : index
    %c0_77 = arith.constant 0 : index
    %143 = vector.load %arg4[%c6, %c0_76, %c0_77] : memref<9x8x4xbf16, #tpu.memory_space<vmem>>, vector<1x8x4xbf16>
    %144 = vector.shape_cast %143 : vector<1x8x4xbf16> to vector<8x4xbf16>
    %cst_78 = arith.constant dense<0.000000e+00> : vector<8x1088xf32>
    %145 = tpu.matmul %144, %142, %cst_78 {dimension_numbers = #tpu.dot_dimension_numbers<[1], [0], [0], [1], [0, 0, 1, 1], [], []>} : vector<8x4xbf16>, vector<4x1088xbf16>, vector<8x1088xf32> -> vector<8x1088xf32>
    %146 = arith.addf %141, %145 : vector<8x1088xf32>
    %c0_79 = arith.constant 0 : index
    %c69 = arith.constant 69 : index
    %147 = vector.load %arg7[%c0_79, %c69] : memref<4x1190xbf16, #tpu.memory_space<vmem>>, vector<4x1088xbf16>
    %c7 = arith.constant 7 : index
    %c0_80 = arith.constant 0 : index
    %c0_81 = arith.constant 0 : index
    %148 = vector.load %arg4[%c7, %c0_80, %c0_81] : memref<9x8x4xbf16, #tpu.memory_space<vmem>>, vector<1x8x4xbf16>
    %149 = vector.shape_cast %148 : vector<1x8x4xbf16> to vector<8x4xbf16>
    %cst_82 = arith.constant dense<0.000000e+00> : vector<8x1088xf32>
    %150 = tpu.matmul %149, %147, %cst_82 {dimension_numbers = #tpu.dot_dimension_numbers<[1], [0], [0], [1], [0, 0, 1, 1], [], []>} : vector<8x4xbf16>, vector<4x1088xbf16>, vector<8x1088xf32> -> vector<8x1088xf32>
    %151 = arith.addf %146, %150 : vector<8x1088xf32>
    %c0_83 = arith.constant 0 : index
    %c70 = arith.constant 70 : index
    %152 = vector.load %arg7[%c0_83, %c70] : memref<4x1190xbf16, #tpu.memory_space<vmem>>, vector<4x1088xbf16>
    %c8 = arith.constant 8 : index
    %c0_84 = arith.constant 0 : index
    %c0_85 = arith.constant 0 : index
    %153 = vector.load %arg4[%c8, %c0_84, %c0_85] : memref<9x8x4xbf16, #tpu.memory_space<vmem>>, vector<1x8x4xbf16>
    %154 = vector.shape_cast %153 : vector<1x8x4xbf16> to vector<8x4xbf16>
    %cst_86 = arith.constant dense<0.000000e+00> : vector<8x1088xf32>
    %155 = tpu.matmul %154, %152, %cst_86 {dimension_numbers = #tpu.dot_dimension_numbers<[1], [0], [0], [1], [0, 0, 1, 1], [], []>} : vector<8x4xbf16>, vector<4x1088xbf16>, vector<8x1088xf32> -> vector<8x1088xf32>
    %156 = arith.addf %151, %155 : vector<8x1088xf32>
    %c0_87 = arith.constant 0 : index
    %c0_88 = arith.constant 0 : index
    %157 = vector.load %arg5[%c0_87, %c0_88] : memref<8x1xf32, #tpu.memory_space<vmem>>, vector<8x1xf32>
    %158 = vector.broadcast %157 : vector<8x1xf32> to vector<8x1088xf32>
    %159 = arith.addf %156, %158 : vector<8x1088xf32>
    %cst_89 = arith.constant 0.000000e+00 : f32
    %160 = vector.broadcast %cst_89 : f32 to vector<8x1088xf32>
    %161 = arith.cmpf ogt, %159, %160 : vector<8x1088xf32>
    %cst_90 = arith.constant 0.000000e+00 : f32
    %162 = vector.broadcast %cst_90 : f32 to vector<8x1088xf32>
    %163 = arith.minimumf %159, %162 : vector<8x1088xf32>
    %164 = math.exp %163 : vector<8x1088xf32>
    %cst_91 = arith.constant 1.000000e+00 : f32
    %165 = vector.broadcast %cst_91 : f32 to vector<8x1088xf32>
    %166 = arith.subf %164, %165 : vector<8x1088xf32>
    %167 = arith.select %161, %159, %166 : vector<8x1088xi1>, vector<8x1088xf32>
    %c0_92 = arith.constant 0 : index
    %c0_93 = arith.constant 0 : index
    %c0_94 = arith.constant 0 : index
    %168 = vector.load %arg6[%c0_92, %c0_93, %c0_94] : memref<1x8x1088xf32, #tpu.memory_space<vmem>>, vector<1x8x1088xf32>
    %169 = vector.shape_cast %168 : vector<1x8x1088xf32> to vector<8x1088xf32>
    %170 = vector.shape_cast %167 : vector<8x1088xf32> to vector<1x8x1088xf32>
    tpu.vector_store %arg6[%c0_92, %c0_93, %c0_94], %170 {strides = array<i32>} : memref<1x8x1088xf32, #tpu.memory_space<vmem>>, vector<1x8x1088xf32>,
    return
  }
  func.func @transform_0(%arg0: i32) -> (i32, i32, i32) {
    %c0_i32 = arith.constant 0 : i32
    %c0_i32_0 = arith.constant 0 : i32
    %c0_i32_1 = arith.constant 0 : i32
    return %arg0, %c0_i32, %c0_i32_0 : i32, i32, i32
  }
  func.func @transform_1(%arg0: i32) -> (i32, i32) {
    %c0_i32 = arith.constant 0 : i32
    %c0_i32_0 = arith.constant 0 : i32
    %c0_i32_1 = arith.constant 0 : i32
    return %c0_i32, %c0_i32_0 : i32, i32
  }
  func.func @transform_2(%arg0: i32) -> (i32, i32) {
    %c0_i32 = arith.constant 0 : i32
    %c0_i32_0 = arith.constant 0 : i32
    %c0_i32_1 = arith.constant 0 : i32
    return %c0_i32, %c0_i32_0 : i32, i32
  }
  func.func @transform_3(%arg0: i32) -> (i32, i32, i32) {
    %c0_i32 = arith.constant 0 : i32
    %c0_i32_0 = arith.constant 0 : i32
    %c0_i32_1 = arith.constant 0 : i32
    %c0_i32_2 = arith.constant 0 : i32
    return %c0_i32, %c0_i32_0, %c0_i32_1 : i32, i32, i32
  }
  func.func @transform_4(%arg0: i32) -> (i32, i32) {
    %c0_i32 = arith.constant 0 : i32
    %c0_i32_0 = arith.constant 0 : i32
    %c0_i32_1 = arith.constant 0 : i32
    return %c0_i32, %c0_i32_0 : i32, i32
  }
  func.func @transform_5(%arg0: i32) -> (i32, i32, i32) {
    %c0_i32 = arith.constant 0 : i32
    %c0_i32_0 = arith.constant 0 : i32
    %c0_i32_1 = arith.constant 0 : i32
    return %arg0, %c0_i32, %c0_i32_0 : i32, i32, i32
  }
}

</mosaic_0001>

<llo_original>
// kernel: tpu_custom_call.1
$region0: #{tpu_custom_call.1}
  #allocation0 [shape = 'u32[]', space=smem, size = 0x4, offset = 0x4, fixed_abs, tag = 'smem constant byte address 0x4 - core index']
  #allocation1 [shape = 'u32[72,128]{1,0:T(1,128)}', space=vmem, size = 0x9000, scoped, tag = 'internal scratch']
  #allocation2 [shape = 'bf16[4,1190]{1,0:T(4,128)(2,1)}', space=vmem, size = 0x2800, scoped, tag = 'scratch operand']
  %s0 = inlined_call_operand.vmem [shape: bf16[2,64,16], index: 0, kind: input, shape index: {}]
  %s1 = inlined_call_operand.vmem [shape: bf16[32,16], index: 1, kind: input, shape index: {}]
  %s2 = inlined_call_operand.vmem [shape: bf16[16,34], index: 2, kind: input, shape index: {}]
  %s3 = inlined_call_operand.vmem [shape: bf16[9,8,4], index: 3, kind: input, shape index: {}]
  %s4 = inlined_call_operand.vmem [shape: f32[8,1], index: 4, kind: input, shape index: {}]
  %s5 = inlined_call_operand.hbm [shape: f32[2,8,1088], index: 5, kind: output, shape index: {}]
  %s6 = sld [smem:[#allocation0]]
  $region53: #{tpu_custom_call.1} parent=0
    _
  %s8 = ssub.s32 1, %s6
  %s9 = scalar_select 0, %s8, %s6
  $region1: #{tpu_custom_call.1} parent=0
    #allocation3 [shape = 'u8[73728]{0}', space=vmem, size = 0x12000, scoped, tag = 'output window, operand 0']
    #allocation4 [shape = 's32[2]{0}', space=sflag, size = 0x8, scoped, tag = 'scoped memory for tpu_custom_call.1']
    %10 = vsyncpa [#allocation4], 0
    %s11 = scalar_lea.sflag [#allocation4], 1
    %12 = vsyncpa %s11, 0
    loop: start=0, step=1, limit=4
    $region2: #{tpu_custom_call.1} parent=1 // loop_pre_header
      _
    $region3: #{tpu_custom_call.1} parent=1 // loop_header
      %s14 = sphi 0, %s18
      %p15 = scmp.ge.s32.totalorder %s14, 4
      %s24 = sphi 0, %s26
      %s27 = sphi 0, %s24
      %s28 = sphi 0, %s27
      %s44 = sphi 0, %s28
      %s48 = sphi 0, %s48
      %s50 = sphi 0, %s48
      %s51 = sphi 0, %s50
      %s65 = sphi 0, %s51
      %s69 = sphi 0, %s69
      %s71 = sphi 0, %s69
      %s72 = sphi 0, %s71
      %s86 = sphi 0, %s72
      %s90 = sphi 0, %s90
      %s92 = sphi 0, %s90
      %s93 = sphi 0, %s92
      %s107 = sphi 0, %s93
      %s111 = sphi 0, %s111
      %s113 = sphi 0, %s111
      %s114 = sphi 0, %s113
      %s128 = sphi 0, %s114
      %s134 = sphi 0, %s136
      %s137 = sphi 0, %s134
      %s138 = sphi 0, %s137
      %s154 = sphi 0, %s138
    $region4: #{tpu_custom_call.1} parent=1 // loop_header_branch
      %17 = sbr.rel (%p15) target = $region8
    $region5: #{tpu_custom_call.1} parent=1 // loop_body
      %s19 = ssub.s32 %s14, 1
      %s20 = ssub.s32 %s14, 2
      %s21 = sadd.s32 %s14, 1
      %s22 = ssub.s32 %s14, %s21
      %p23 = scmp.eq.s32.totalorder %s22, 0
      %s25 = sadd.s32 %s24, 1
      %s26 = scalar_select %p23, %s24, %s25
      %p29 = pneg %p23
      %p30 = scmp.eq.s32.totalorder %s14, 1
      %p31 = por %p29, %p30
      %p32 = scmp.ne.s32.totalorder %s24, %s27
      %p33 = scmp.eq.s32.totalorder %s14, 0
      %p34 = por %p32, %p33
      %p35 = scmp.ne.s32.totalorder %s24, %s27
      %p36 = scmp.eq.s32.totalorder %s19, 1
      %p37 = por %p35, %p36
      %p38 = scmp.ne.s32.totalorder %s27, %s28
      %p39 = scmp.eq.s32.totalorder %s19, 0
      %p40 = por %p38, %p39
      %p41 = scmp.ne.s32.totalorder %s27, %s28
      %p42 = scmp.eq.s32.totalorder %s20, 1
      %p43 = por %p41, %p42
      %p45 = scmp.ne.s32.totalorder %s28, %s44
      %p46 = scmp.eq.s32.totalorder %s20, 0
      %p47 = por %p45, %p46
      %s49 = sadd.s32 %s48, 1
      %p52 = scmp.eq.s32.totalorder %s14, 1
      %p53 = scmp.ne.s32.totalorder %s48, %s50
      %p54 = scmp.eq.s32.totalorder %s14, 0
      %p55 = por %p53, %p54
      %p56 = scmp.ne.s32.totalorder %s48, %s50
      %p57 = scmp.eq.s32.totalorder %s19, 1
      %p58 = por %p56, %p57
      %p59 = scmp.ne.s32.totalorder %s50, %s51
      %p60 = scmp.eq.s32.totalorder %s19, 0
      %p61 = por %p59, %p60
      %p62 = scmp.ne.s32.totalorder %s50, %s51
      %p63 = scmp.eq.s32.totalorder %s20, 1
      %p64 = por %p62, %p63
      %p66 = scmp.ne.s32.totalorder %s51, %s65
      %p67 = scmp.eq.s32.totalorder %s20, 0
      %p68 = por %p66, %p67
      %s70 = sadd.s32 %s69, 1
      %p73 = scmp.eq.s32.totalorder %s14, 1
      %p74 = scmp.ne.s32.totalorder %s69, %s71
      %p75 = scmp.eq.s32.totalorder %s14, 0
      %p76 = por %p74, %p75
      %p77 = scmp.ne.s32.totalorder %s69, %s71
      %p78 = scmp.eq.s32.totalorder %s19, 1
      %p79 = por %p77, %p78
      %p80 = scmp.ne.s32.totalorder %s71, %s72
      %p81 = scmp.eq.s32.totalorder %s19, 0
      %p82 = por %p80, %p81
      %p83 = scmp.ne.s32.totalorder %s71, %s72
      %p84 = scmp.eq.s32.totalorder %s20, 1
      %p85 = por %p83, %p84
      %p87 = scmp.ne.s32.totalorder %s72, %s86
      %p88 = scmp.eq.s32.totalorder %s20, 0
      %p89 = por %p87, %p88
      %s91 = sadd.s32 %s90, 1
      %p94 = scmp.eq.s32.totalorder %s14, 1
      %p95 = scmp.ne.s32.totalorder %s90, %s92
      %p96 = scmp.eq.s32.totalorder %s14, 0
      %p97 = por %p95, %p96
      %p98 = scmp.ne.s32.totalorder %s90, %s92
      %p99 = scmp.eq.s32.totalorder %s19, 1
      %p100 = por %p98, %p99
      %p101 = scmp.ne.s32.totalorder %s92, %s93
      %p102 = scmp.eq.s32.totalorder %s19, 0
      %p103 = por %p101, %p102
      %p104 = scmp.ne.s32.totalorder %s92, %s93
      %p105 = scmp.eq.s32.totalorder %s20, 1
      %p106 = por %p104, %p105
      %p108 = scmp.ne.s32.totalorder %s93, %s107
      %p109 = scmp.eq.s32.totalorder %s20, 0
      %p110 = por %p108, %p109
      %s112 = sadd.s32 %s111, 1
      %p115 = scmp.eq.s32.totalorder %s14, 1
      %p116 = scmp.ne.s32.totalorder %s111, %s113
      %p117 = scmp.eq.s32.totalorder %s14, 0
      %p118 = por %p116, %p117
      %p119 = scmp.ne.s32.totalorder %s111, %s113
      %p120 = scmp.eq.s32.totalorder %s19, 1
      %p121 = por %p119, %p120
      %p122 = scmp.ne.s32.totalorder %s113, %s114
      %p123 = scmp.eq.s32.totalorder %s19, 0
      %p124 = por %p122, %p123
      %p125 = scmp.ne.s32.totalorder %s113, %s114
      %p126 = scmp.eq.s32.totalorder %s20, 1
      %p127 = por %p125, %p126
      %p129 = scmp.ne.s32.totalorder %s114, %s128
      %p130 = scmp.eq.s32.totalorder %s20, 0
      %p131 = por %p129, %p130
      %s132 = ssub.s32 %s14, %s21
      %p133 = scmp.eq.s32.totalorder %s132, 0
      %s135 = sadd.s32 %s134, 1
      %s136 = scalar_select %p133, %s134, %s135
      %p139 = pneg %p133
      %p140 = scmp.eq.s32.totalorder %s14, 1
      %p141 = por %p139, %p140
      %p142 = scmp.ne.s32.totalorder %s134, %s137
      %p143 = scmp.eq.s32.totalorder %s14, 0
      %p144 = por %p142, %p143
      %p145 = scmp.ne.s32.totalorder %s134, %s137
      %p146 = scmp.eq.s32.totalorder %s19, 1
      %p147 = por %p145, %p146
      %p148 = scmp.ne.s32.totalorder %s137, %s138
      %p149 = scmp.eq.s32.totalorder %s19, 0
      %p150 = por %p148, %p149
      %p151 = scmp.ne.s32.totalorder %s137, %s138
      %p152 = scmp.eq.s32.totalorder %s20, 1
      %p153 = por %p151, %p152
      %p155 = scmp.ne.s32.totalorder %s138, %s154
      %p156 = scmp.eq.s32.totalorder %s20, 0
      %p157 = por %p155, %p156
      %p158 = scmp.le.s32.totalorder 1, %s14
      %p159 = scmp.lt.s32.totalorder %s14, 3
      %p160 = pnand %p158, %p159
      %p161 = pneg %p160
      // Predicated region
      $region9: #{tpu_custom_call.1} parent=5 // pred_check
        _
      $region10: #{tpu_custom_call.1} parent=5 // pred_check_branch
        %163 = sbr.rel (%p160) target = $region12
      $region11: #{tpu_custom_call.1} parent=5 // pred_region
        %s164 = ssub.s32 %s14, 1
        // Predicated region
        $region13: #{tpu_custom_call.1} parent=11 // pred_check
          %p165 = pneg %p61
        $region14: #{tpu_custom_call.1} parent=11 // pred_check_branch
          %167 = sbr.rel (%p165) target = $region16
        $region15: #{tpu_custom_call.1} parent=11 // pred_region
          _
        $region16: #{tpu_custom_call.1} parent=11 // pred_fallthru
          _
        // Predicated region
        $region17: #{tpu_custom_call.1} parent=11 // pred_check
          %p168 = pneg %p82
        $region18: #{tpu_custom_call.1} parent=11 // pred_check_branch
          %170 = sbr.rel (%p168) target = $region20
        $region19: #{tpu_custom_call.1} parent=11 // pred_region
          _
        $region20: #{tpu_custom_call.1} parent=11 // pred_fallthru
          _
        // Predicated region
        $region21: #{tpu_custom_call.1} parent=11 // pred_check
          %p171 = pneg %p103
        $region22: #{tpu_custom_call.1} parent=11 // pred_check_branch
          %173 = sbr.rel (%p171) target = $region24
        $region23: #{tpu_custom_call.1} parent=11 // pred_region
          _
        $region24: #{tpu_custom_call.1} parent=11 // pred_fallthru
          _
        // Predicated region
        $region25: #{tpu_custom_call.1} parent=11 // pred_check
          %p174 = pneg %p124
        $region26: #{tpu_custom_call.1} parent=11 // pred_check_branch
          %176 = sbr.rel (%p174) target = $region28
        $region27: #{tpu_custom_call.1} parent=11 // pred_region
          _
        $region28: #{tpu_custom_call.1} parent=11 // pred_fallthru
          _
      $region12: #{tpu_custom_call.1} parent=5 // pred_fallthru
        _
      %p177 = scmp.lt.s32.totalorder %s14, 2
      // Predicated region
      $region29: #{tpu_custom_call.1} parent=5 // pred_check
        %p178 = pneg %p177
      $region30: #{tpu_custom_call.1} parent=5 // pred_check_branch
        %180 = sbr.rel (%p178) target = $region32
      $region31: #{tpu_custom_call.1} parent=5 // pred_region
        // Predicated region
        $region33: #{tpu_custom_call.1} parent=31 // pred_check
          %p181 = pneg %p34
        $region34: #{tpu_custom_call.1} parent=31 // pred_check_branch
          %183 = sbr.rel (%p181) target = $region36
        $region35: #{tpu_custom_call.1} parent=31 // pred_region
          %p184 = scmp.lt.s32.totalorder %s14, 1
          %s185 = scalar_select %p184, %s14, 1
          %s186 = smul.addr %s185, 8
          %s187 = smul.addr %s186, 4
          %s188 = scalar_lea.vmem %s0, %s187
        $region36: #{tpu_custom_call.1} parent=31 // pred_fallthru
          _
      $region32: #{tpu_custom_call.1} parent=5 // pred_fallthru
        _
      %p189 = scmp.le.s32.totalorder 1, %s14
      %p190 = scmp.lt.s32.totalorder %s14, 3
      %p191 = pnand %p189, %p190
      %p192 = pneg %p191
      // Predicated region
      $region37: #{tpu_custom_call.1} parent=5 // pred_check
        _
      $region38: #{tpu_custom_call.1} parent=5 // pred_check_branch
        %194 = sbr.rel (%p191) target = $region40
      $region39: #{tpu_custom_call.1} parent=5 // pred_region
        %s195 = ssub.s32 %s14, 1
        %p196 = scmp.lt.s32.totalorder %s19, 1
        %s197 = scalar_select %p196, %s19, 1
        %s198 = smul.addr %s197, 8
        %s199 = smul.addr %s198, 4
        %s200 = scalar_lea.vmem %s0, %s199
        %p201 = pneg %p40
        %p202 = pneg %p37
        %p203 = pneg %p61
        %p204 = pneg %p58
        %p205 = pneg %p82
        %p206 = pneg %p79
        %p207 = pneg %p103
        %p208 = pneg %p100
        %p209 = pneg %p124
        %p210 = pneg %p121
        %p211 = pneg %p150
        %p212 = pneg %p147
        %s213 = sand.u32 %s137, 1
        %s214 = scalar_lea.sflag [#allocation4], %s213
        %s215 = sand.u32 %s137, 1
        %s216 = smul.addr %s215, 72
        %s217 = scalar_lea.vmem [#allocation3], %s216
        %p218 = scmp.lt.s32.totalorder %s19, 1
        %s219 = scalar_select %p218, %s19, 1
        %s220 = smul.addr %s219, 8
        %s221 = smul.addr %s220, 4
        %s222 = scalar_lea.vmem %s0, %s221
        %vm224 = vcmask 271360
        %225 = vst.msk [vmem:[#allocation2] sm:$0x3] %vm224, 0
        %vm226 = vcmask 1042192
        %vm227 = vcmask 306178
        %vm228 = vmor %vm227, %vm226
        %229 = vst.msk [vmem:[#allocation2 + $0x10] sm:$0xf] %vm228, 0
        %v230 = vld [vmem:[%s222] sm:$0xf]
        %v231 = vld [vmem:[%s222 + $0x4] sm:$0xf]
        %v232 = vld [vmem:[%s222 + $0x8] sm:$0xf]
        %v233 = vld [vmem:[%s222 + $0xc] sm:$0xf]
        %v234 = vld [vmem:[%s222 + $0x10] sm:$0xf]
        %v235 = vld [vmem:[%s222 + $0x14] sm:$0xf]
        %v236 = vld [vmem:[%s222 + $0x18] sm:$0xf]
        %v237 = vld [vmem:[%s222 + $0x1c] sm:$0xf]
        %v238 = vld [vmem:[%s2] sm:$0xf]
        %v239 = vld [vmem:[%s2 + $0x4] sm:$0xf]
        %v248 = vunpack.c.l.b16 %v230
        %v249 = vunpack.c.l.b16 %v231
        %v250 = vunpack.c.l.b16 %v232
        %v251 = vunpack.c.l.b16 %v233
        %v252 = vunpack.c.l.b16 %v234
        %v253 = vunpack.c.l.b16 %v235
        %v254 = vunpack.c.l.b16 %v236
        %v255 = vunpack.c.l.b16 %v237
        %v256 = vpack.c.b16 %v249, %v248
        %v257 = vpack.c.b16 %v251, %v250
        %v258 = vpack.c.b16 %v253, %v252
        %v259 = vpack.c.b16 %v255, %v254
        %v262 = vunpack.c.l.b16 %v238
        %v263 = vunpack.c.l.b16 %v239
        %v264 = vpack.c.b16 %v263, %v262
        %vm266 = vcmask 130048
        %v268 = vsel %vm266, %v256, 0
        %v271 = vsel %vm266, %v257, 0
        %v274 = vsel %vm266, %v258, 0
        %v277 = vsel %vm266, %v259, 0
        %279 = vmatpush.bf16.msra.mxu0 0
        %280 = vmatpush.bf16.msra.mxu0 0
        %281 = vmatpush.bf16.msra.mxu0 0
        %282 = vmatpush.bf16.msra.mxu0 0
        %283 = vmatpush.bf16.msra.mxu0 0
        %284 = vmatpush.bf16.msra.mxu0 0
        %285 = vmatpush.bf16.msra.mxu0 0
        %286 = vmatpush.bf16.msra.mxu0 %v264
        %287 = vmatmul.bf16.gmra.mxu0 %v268
        %v288 = vpop.f32.mrf.mxu0
        %v289 = vadd.f32 0.0, %v288
        %v290 = vpop.f32.mrf.mxu0
        %v291 = vadd.f32 0.0, %v290
        %292 = vmatmul.bf16.gmra.mxu0 %v271
        %v293 = vpop.f32.mrf.mxu0
        %v294 = vadd.f32 0.0, %v293
        %v295 = vpop.f32.mrf.mxu0
        %v296 = vadd.f32 0.0, %v295
        %297 = vmatmul.bf16.gmra.mxu0 %v274
        %v298 = vpop.f32.mrf.mxu0
        %v299 = vadd.f32 0.0, %v298
        %v300 = vpop.f32.mrf.mxu0
        %v301 = vadd.f32 0.0, %v300
        %302 = vmatmul.bf16.gmra.mxu0 %v277
        %v303 = vpop.f32.mrf.mxu0
        %v304 = vadd.f32 0.0, %v303
        %v305 = vpop.f32.mrf.mxu0
        %v306 = vadd.f32 0.0, %v305
        %307 = vdwg.mxu0
        %v308 = vpack.c.bf16 %v289, %v289
        %v309 = vpack.c.bf16 %v291, %v291
        %v310 = vpack.c.bf16 %v294, %v294
        %v311 = vpack.c.bf16 %v296, %v296
        %v312 = vpack.c.bf16 %v299, %v299
        %v313 = vpack.c.bf16 %v301, %v301
        %v314 = vpack.c.bf16 %v304, %v304
        %v315 = vpack.c.bf16 %v306, %v306
        %v316 = vld [vmem:[%s1] sm:$0xf]
        %v317 = vld [vmem:[%s1 + $0x4] sm:$0xf]
        %v318 = vld [vmem:[%s1 + $0x8] sm:$0xf]
        %v319 = vld [vmem:[%s1 + $0xc] sm:$0xf]
        %v324 = vunpack.c.l.b16 %v316
        %v325 = vunpack.c.l.b16 %v317
        %v326 = vunpack.c.l.b16 %v318
        %v327 = vunpack.c.l.b16 %v319
        %v328 = vpack.c.b16 %v325, %v324
        %v329 = vpack.c.b16 %v327, %v326
        %v332 = vunpack.c.l.b16 %v308
        %v333 = vunpack.c.l.b16 %v309
        %v334 = vpack.c.b16 %v333, %v332
        %v337 = vsel %vm266, %v328, 0
        %v340 = vsel %vm266, %v329, 0
        %342 = vmatpush.bf16.msra.mxu0 0
        %343 = vmatpush.bf16.msra.mxu0 0
        %344 = vmatpush.bf16.msra.mxu0 0
        %345 = vmatpush.bf16.msra.mxu0 0
        %346 = vmatpush.bf16.msra.mxu0 0
        %347 = vmatpush.bf16.msra.mxu0 0
        %348 = vmatpush.bf16.msra.mxu0 0
        %349 = vmatpush.bf16.msra.mxu0 %v334
        %350 = vmatmul.bf16.gmra.mxu0 %v337
        %v351 = vpop.f32.mrf.mxu0
        %v352 = vadd.f32 0.0, %v351
        %v353 = vpop.f32.mrf.mxu0
        %v354 = vadd.f32 0.0, %v353
        %355 = vmatmul.bf16.gmra.mxu0 %v340
        %v356 = vpop.f32.mrf.mxu0
        %v357 = vadd.f32 0.0, %v356
        %v358 = vpop.f32.mrf.mxu0
        %v359 = vadd.f32 0.0, %v358
        %360 = vdwg.mxu0
        %v363 = vunpack.c.l.b16 %v310
        %v364 = vunpack.c.l.b16 %v311
        %v365 = vpack.c.b16 %v364, %v363
        %367 = vmatpush.bf16.msra.mxu0 0
        %368 = vmatpush.bf16.msra.mxu0 0
        %369 = vmatpush.bf16.msra.mxu0 0
        %370 = vmatpush.bf16.msra.mxu0 0
        %371 = vmatpush.bf16.msra.mxu0 0
        %372 = vmatpush.bf16.msra.mxu0 0
        %373 = vmatpush.bf16.msra.mxu0 0
        %374 = vmatpush.bf16.msra.mxu0 %v365
        %375 = vmatmul.bf16.gmra.mxu0 %v337
        %v376 = vpop.f32.mrf.mxu0
        %v377 = vadd.f32 0.0, %v376
        %v378 = vpop.f32.mrf.mxu0
        %v379 = vadd.f32 0.0, %v378
        %380 = vmatmul.bf16.gmra.mxu0 %v340
        %v381 = vpop.f32.mrf.mxu0
        %v382 = vadd.f32 0.0, %v381
        %v383 = vpop.f32.mrf.mxu0
        %v384 = vadd.f32 0.0, %v383
        %385 = vdwg.mxu0
        %v388 = vunpack.c.l.b16 %v312
        %v389 = vunpack.c.l.b16 %v313
        %v390 = vpack.c.b16 %v389, %v388
        %392 = vmatpush.bf16.msra.mxu0 0
        %393 = vmatpush.bf16.msra.mxu0 0
        %394 = vmatpush.bf16.msra.mxu0 0
        %395 = vmatpush.bf16.msra.mxu0 0
        %396 = vmatpush.bf16.msra.mxu0 0
        %397 = vmatpush.bf16.msra.mxu0 0
        %398 = vmatpush.bf16.msra.mxu0 0
        %399 = vmatpush.bf16.msra.mxu0 %v390
        %400 = vmatmul.bf16.gmra.mxu0 %v337
        %v401 = vpop.f32.mrf.mxu0
        %v402 = vadd.f32 0.0, %v401
        %v403 = vpop.f32.mrf.mxu0
        %v404 = vadd.f32 0.0, %v403
        %405 = vmatmul.bf16.gmra.mxu0 %v340
        %v406 = vpop.f32.mrf.mxu0
        %v407 = vadd.f32 0.0, %v406
        %v408 = vpop.f32.mrf.mxu0
        %v409 = vadd.f32 0.0, %v408
        %410 = vdwg.mxu0
        %v413 = vunpack.c.l.b16 %v314
        %v414 = vunpack.c.l.b16 %v315
        %v415 = vpack.c.b16 %v414, %v413
        %417 = vmatpush.bf16.msra.mxu0 0
        %418 = vmatpush.bf16.msra.mxu0 0
        %419 = vmatpush.bf16.msra.mxu0 0
        %420 = vmatpush.bf16.msra.mxu0 0
        %421 = vmatpush.bf16.msra.mxu0 0
        %422 = vmatpush.bf16.msra.mxu0 0
        %423 = vmatpush.bf16.msra.mxu0 0
        %424 = vmatpush.bf16.msra.mxu0 %v415
        %425 = vmatmul.bf16.gmra.mxu0 %v337
        %v426 = vpop.f32.mrf.mxu0
        %v427 = vadd.f32 0.0, %v426
        %v428 = vpop.f32.mrf.mxu0
        %v429 = vadd.f32 0.0, %v428
        %430 = vmatmul.bf16.gmra.mxu0 %v340
        %v431 = vpop.f32.mrf.mxu0
        %v432 = vadd.f32 0.0, %v431
        %v433 = vpop.f32.mrf.mxu0
        %v434 = vadd.f32 0.0, %v433
        %435 = vdwg.mxu0
        %v436 = vpack.c.bf16 %v352, %v352
        %v437 = vpack.c.bf16 %v354, %v354
        %v438 = vpack.c.bf16 %v357, %v357
        %v439 = vpack.c.bf16 %v359, %v359
        %v440 = vpack.c.bf16 %v377, %v377
        %v441 = vpack.c.bf16 %v379, %v379
        %v442 = vpack.c.bf16 %v382, %v382
        %v443 = vpack.c.bf16 %v384, %v384
        %v444 = vpack.c.bf16 %v402, %v402
        %v445 = vpack.c.bf16 %v404, %v404
        %v446 = vpack.c.bf16 %v407, %v407
        %v447 = vpack.c.bf16 %v409, %v409
        %v448 = vpack.c.bf16 %v427, %v427
        %v449 = vpack.c.bf16 %v429, %v429
        %v450 = vpack.c.bf16 %v432, %v432
        %v451 = vpack.c.bf16 %v434, %v434
        %v456 = vrot.slane %v436, 2
        %v457 = vrot.slane %v440, 2
        %v458 = vrot.slane %v444, 2
        %v459 = vrot.slane %v448, 2
        %vm460 = vcmask 1041408
        %v463 = vsel %vm460, %v436, %v456
        %v466 = vsel %vm460, %v440, %v457
        %v469 = vsel %vm460, %v444, %v458
        %v472 = vsel %vm460, %v448, %v459
        %473 = vst [vmem:[#allocation1] ss:$2 sm:$0xff] %v463
        %v474 = vld.sshfl [vmem:[#allocation1] sm:$0xff pattern:$0x75643120]
        %s476 = scalar_lea.vmem [#allocation1], 16
        %477 = vst [vmem:[%s476] ss:$2 sm:$0xff] %v466
        %v478 = vld.sshfl [vmem:[#allocation1 + $0x10] sm:$0xff pattern:$0x75643120]
        %s480 = scalar_lea.vmem [#allocation1], 32
        %481 = vst [vmem:[%s480] ss:$2 sm:$0xff] %v469
        %v482 = vld.sshfl [vmem:[#allocation1 + $0x20] sm:$0xff pattern:$0x75643120]
        %s484 = scalar_lea.vmem [#allocation1], 48
        %485 = vst [vmem:[%s484] ss:$2 sm:$0xff] %v472
        %v486 = vld.sshfl [vmem:[#allocation1 + $0x30] sm:$0xff pattern:$0x75643120]
        %v488 = vunpack.c.l.b16 %v474
        %v489 = vunpack.c.l.b16 %v478
        %v490 = vunpack.c.l.b16 %v482
        %v491 = vunpack.c.l.b16 %v486
        %v492 = vrot.slane %v489, 7
        %vm493 = vcmask 1041409
        %v494 = vsel %vm493, %v492, %v488
        %v495 = vrot.slane %v490, 6
        %vm496 = vcmask 1042434
        %v497 = vsel %vm496, %v495, %v494
        %v498 = vrot.slane %v491, 5
        %vm499 = vcmask 1043459
        %v500 = vsel %vm499, %v498, %v497
        %v501 = vpack.c.b16 %v500, %v500
        %v502 = vrot.slane %v501, 2
        %v505 = vsel %vm460, %v501, %v502
        %507 = vrot.lane.b32.xlu0 %v505, 34
        %v508 = vpop.permute.xlu0 %507
        %vm510 = vcmask 550160
        %511 = vst.msk [vmem:[#allocation2] sm:$0x3] %vm510, %v508
        %512 = vst [vmem:[#allocation1] ss:$2 sm:$0xff] %v463
        %v513 = vld.sshfl [vmem:[#allocation1] sm:$0xff pattern:$0x75643120]
        %s515 = scalar_lea.vmem [#allocation1], 16
        %516 = vst [vmem:[%s515] ss:$2 sm:$0xff] %v466
        %v517 = vld.sshfl [vmem:[#allocation1 + $0x10] sm:$0xff pattern:$0x75643120]
        %s519 = scalar_lea.vmem [#allocation1], 32
        %520 = vst [vmem:[%s519] ss:$2 sm:$0xff] %v469
        %v521 = vld.sshfl [vmem:[#allocation1 + $0x20] sm:$0xff pattern:$0x75643120]
        %s523 = scalar_lea.vmem [#allocation1], 48
        %524 = vst [vmem:[%s523] ss:$2 sm:$0xff] %v472
        %v525 = vld.sshfl [vmem:[#allocation1 + $0x30] sm:$0xff pattern:$0x75643120]
        %v527 = vunpack.c.l.b16 %v513
        %v528 = vunpack.c.l.b16 %v517
        %v529 = vunpack.c.l.b16 %v521
        %v530 = vunpack.c.l.b16 %v525
        %v531 = vrot.slane %v527, 1
        %v532 = vsel %vm493, %v528, %v531
        %v533 = vrot.slane %v529, 7
        %v534 = vsel %vm496, %v533, %v532
        %v535 = vrot.slane %v530, 6
        %v536 = vsel %vm499, %v535, %v534
        %v537 = vpack.c.b16 %v536, %v536
        %v538 = vrot.slane %v537, 2
        %v541 = vsel %vm460, %v537, %v538
        %543 = vrot.lane.b32.xlu0 %v541, 68
        %v544 = vpop.permute.xlu0 %543
        %vm546 = vcmask 828960
        %547 = vst.msk [vmem:[#allocation2] sm:$0x3] %vm546, %v544
        %548 = vst [vmem:[#allocation1] ss:$2 sm:$0xff] %v463
        %v549 = vld.sshfl [vmem:[#allocation1] sm:$0xff pattern:$0x75643120]
        %s551 = scalar_lea.vmem [#allocation1], 16
        %552 = vst [vmem:[%s551] ss:$2 sm:$0xff] %v466
        %v553 = vld.sshfl [vmem:[#allocation1 + $0x10] sm:$0xff pattern:$0x75643120]
        %s555 = scalar_lea.vmem [#allocation1], 32
        %556 = vst [vmem:[%s555] ss:$2 sm:$0xff] %v469
        %v557 = vld.sshfl [vmem:[#allocation1 + $0x20] sm:$0xff pattern:$0x75643120]
        %s559 = scalar_lea.vmem [#allocation1], 48
        %560 = vst [vmem:[%s559] ss:$2 sm:$0xff] %v472
        %v561 = vld.sshfl [vmem:[#allocation1 + $0x30] sm:$0xff pattern:$0x75643120]
        %v563 = vunpack.c.l.b16 %v549
        %v564 = vunpack.c.l.b16 %v553
        %v565 = vunpack.c.l.b16 %v557
        %v566 = vunpack.c.l.b16 %v561
        %v567 = vrot.slane %v563, 2
        %v568 = vrot.slane %v564, 1
        %v569 = vsel %vm493, %v568, %v567
        %v570 = vsel %vm496, %v565, %v569
        %v571 = vrot.slane %v566, 7
        %v572 = vsel %vm499, %v571, %v570
        %v573 = vpack.c.b16 %v572, %v572
        %v574 = vrot.slane %v573, 2
        %v577 = vsel %vm460, %v573, %v574
        %579 = vrot.lane.b32.xlu0 %v577, 102
        %v580 = vpop.permute.xlu0 %579
        %v581 = vrot.slane %v580, 6
        %vm582 = vcmask 834560
        %v583 = vsel %vm582, %v581, %v580
        %vm585 = vcmask 1042224
        %vm586 = vcmask 60418
        %vm587 = vmor %vm586, %vm585
        %588 = vst.msk [vmem:[#allocation2] sm:$0xf] %vm587, %v583
        %589 = vst [vmem:[#allocation1] ss:$2 sm:$0xff] %v463
        %v590 = vld.sshfl [vmem:[#allocation1] sm:$0xff pattern:$0x75643120]
        %s592 = scalar_lea.vmem [#allocation1], 16
        %593 = vst [vmem:[%s592] ss:$2 sm:$0xff] %v466
        %v594 = vld.sshfl [vmem:[#allocation1 + $0x10] sm:$0xff pattern:$0x75643120]
        %s596 = scalar_lea.vmem [#allocation1], 32
        %597 = vst [vmem:[%s596] ss:$2 sm:$0xff] %v469
        %v598 = vld.sshfl [vmem:[#allocation1 + $0x20] sm:$0xff pattern:$0x75643120]
        %s600 = scalar_lea.vmem [#allocation1], 48
        %601 = vst [vmem:[%s600] ss:$2 sm:$0xff] %v472
        %v602 = vld.sshfl [vmem:[#allocation1 + $0x30] sm:$0xff pattern:$0x75643120]
        %v604 = vunpack.c.l.b16 %v590
        %v605 = vunpack.c.l.b16 %v594
        %v606 = vunpack.c.l.b16 %v598
        %v607 = vunpack.c.l.b16 %v602
        %v608 = vrot.slane %v604, 3
        %v609 = vrot.slane %v605, 2
        %v610 = vsel %vm493, %v609, %v608
        %v611 = vrot.slane %v606, 1
        %v612 = vsel %vm496, %v611, %v610
        %v613 = vsel %vm499, %v607, %v612
        %v614 = vpack.c.b16 %v613, %v613
        %v615 = vrot.slane %v614, 2
        %v618 = vsel %vm460, %v614, %v615
        %620 = vrot.lane.b32.xlu0 %v618, 8
        %v621 = vpop.permute.xlu0 %620
        %vm623 = vcmask 336960
        %624 = vst.msk [vmem:[#allocation2 + $0x2] sm:$0x3] %vm623, %v621
        %625 = vst.sshfl [vmem:[#allocation1] sm:$0xff pattern:$0x75643120] %v436
        %s626 = scalar_lea.vmem [#allocation1], 1
        %v627 = vld [vmem:[%s626] ss:$2 sm:$0xff]
        %628 = vst.sshfl [vmem:[#allocation1 + $0x10] sm:$0xff pattern:$0x75643120] %v440
        %s629 = scalar_lea.vmem [#allocation1], 17
        %v630 = vld [vmem:[%s629] ss:$2 sm:$0xff]
        %631 = vst.sshfl [vmem:[#allocation1 + $0x20] sm:$0xff pattern:$0x75643120] %v444
        %s632 = scalar_lea.vmem [#allocation1], 33
        %v633 = vld [vmem:[%s632] ss:$2 sm:$0xff]
        %634 = vst.sshfl [vmem:[#allocation1 + $0x30] sm:$0xff pattern:$0x75643120] %v448
        %s635 = scalar_lea.vmem [#allocation1], 49
        %v636 = vld [vmem:[%s635] ss:$2 sm:$0xff]
        %637 = vst [vmem:[#allocation1] ss:$2 sm:$0xff] %v627
        %v638 = vld.sshfl [vmem:[#allocation1] sm:$0xff pattern:$0x75643120]
        %s640 = scalar_lea.vmem [#allocation1], 16
        %641 = vst [vmem:[%s640] ss:$2 sm:$0xff] %v630
        %v642 = vld.sshfl [vmem:[#allocation1 + $0x10] sm:$0xff pattern:$0x75643120]
        %s644 = scalar_lea.vmem [#allocation1], 32
        %645 = vst [vmem:[%s644] ss:$2 sm:$0xff] %v633
        %v646 = vld.sshfl [vmem:[#allocation1 + $0x20] sm:$0xff pattern:$0x75643120]
        %s648 = scalar_lea.vmem [#allocation1], 48
        %649 = vst [vmem:[%s648] ss:$2 sm:$0xff] %v636
        %v650 = vld.sshfl [vmem:[#allocation1 + $0x30] sm:$0xff pattern:$0x75643120]
        %v652 = vunpack.c.l.b16 %v638
        %v653 = vunpack.c.l.b16 %v642
        %v654 = vunpack.c.l.b16 %v646
        %v655 = vunpack.c.l.b16 %v650
        %v656 = vrot.slane %v653, 7
        %v657 = vsel %vm493, %v656, %v652
        %v658 = vrot.slane %v654, 6
        %v659 = vsel %vm496, %v658, %v657
        %v660 = vrot.slane %v655, 5
        %v661 = vsel %vm499, %v660, %v659
        %v662 = vpack.c.b16 %v661, %v661
        %v663 = vrot.slane %v662, 2
        %v666 = vsel %vm460, %v662, %v663
        %668 = vrot.lane.b32.xlu0 %v666, 42
        %v669 = vpop.permute.xlu0 %668
        %vm671 = vcmask 615760
        %672 = vst.msk [vmem:[#allocation2 + $0x2] sm:$0x3] %vm671, %v669
        %673 = vst.sshfl [vmem:[#allocation1] sm:$0xff pattern:$0x75643120] %v436
        %s674 = scalar_lea.vmem [#allocation1], 1
        %v675 = vld [vmem:[%s674] ss:$2 sm:$0xff]
        %676 = vst.sshfl [vmem:[#allocation1 + $0x10] sm:$0xff pattern:$0x75643120] %v440
        %s677 = scalar_lea.vmem [#allocation1], 17
        %v678 = vld [vmem:[%s677] ss:$2 sm:$0xff]
        %679 = vst.sshfl [vmem:[#allocation1 + $0x20] sm:$0xff pattern:$0x75643120] %v444
        %s680 = scalar_lea.vmem [#allocation1], 33
        %v681 = vld [vmem:[%s680] ss:$2 sm:$0xff]
        %682 = vst.sshfl [vmem:[#allocation1 + $0x30] sm:$0xff pattern:$0x75643120] %v448
        %s683 = scalar_lea.vmem [#allocation1], 49
        %v684 = vld [vmem:[%s683] ss:$2 sm:$0xff]
        %685 = vst [vmem:[#allocation1] ss:$2 sm:$0xff] %v675
        %v686 = vld.sshfl [vmem:[#allocation1] sm:$0xff pattern:$0x75643120]
        %s688 = scalar_lea.vmem [#allocation1], 16
        %689 = vst [vmem:[%s688] ss:$2 sm:$0xff] %v678
        %v690 = vld.sshfl [vmem:[#allocation1 + $0x10] sm:$0xff pattern:$0x75643120]
        %s692 = scalar_lea.vmem [#allocation1], 32
        %693 = vst [vmem:[%s692] ss:$2 sm:$0xff] %v681
        %v694 = vld.sshfl [vmem:[#allocation1 + $0x20] sm:$0xff pattern:$0x75643120]
        %s696 = scalar_lea.vmem [#allocation1], 48
        %697 = vst [vmem:[%s696] ss:$2 sm:$0xff] %v684
        %v698 = vld.sshfl [vmem:[#allocation1 + $0x30] sm:$0xff pattern:$0x75643120]
        %v700 = vunpack.c.l.b16 %v686
        %v701 = vunpack.c.l.b16 %v690
        %v702 = vunpack.c.l.b16 %v694
        %v703 = vunpack.c.l.b16 %v698
        %v704 = vrot.slane %v700, 1
        %v705 = vsel %vm493, %v701, %v704
        %v706 = vrot.slane %v702, 7
        %v707 = vsel %vm496, %v706, %v705
        %v708 = vrot.slane %v703, 6
        %v709 = vsel %vm499, %v708, %v707
        %v710 = vpack.c.b16 %v709, %v709
        %v711 = vrot.slane %v710, 2
        %v714 = vsel %vm460, %v710, %v711
        %716 = vrot.lane.b32.xlu0 %v714, 76
        %v717 = vpop.permute.xlu0 %716
        %vm719 = vcmask 894560
        %720 = vst.msk [vmem:[#allocation2 + $0x2] sm:$0x3] %vm719, %v717
        %721 = vst.sshfl [vmem:[#allocation1] sm:$0xff pattern:$0x75643120] %v436
        %s722 = scalar_lea.vmem [#allocation1], 1
        %v723 = vld [vmem:[%s722] ss:$2 sm:$0xff]
        %724 = vst.sshfl [vmem:[#allocation1 + $0x10] sm:$0xff pattern:$0x75643120] %v440
        %s725 = scalar_lea.vmem [#allocation1], 17
        %v726 = vld [vmem:[%s725] ss:$2 sm:$0xff]
        %727 = vst.sshfl [vmem:[#allocation1 + $0x20] sm:$0xff pattern:$0x75643120] %v444
        %s728 = scalar_lea.vmem [#allocation1], 33
        %v729 = vld [vmem:[%s728] ss:$2 sm:$0xff]
        %730 = vst.sshfl [vmem:[#allocation1 + $0x30] sm:$0xff pattern:$0x75643120] %v448
        %s731 = scalar_lea.vmem [#allocation1], 49
        %v732 = vld [vmem:[%s731] ss:$2 sm:$0xff]
        %733 = vst [vmem:[#allocation1] ss:$2 sm:$0xff] %v723
        %v734 = vld.sshfl [vmem:[#allocation1] sm:$0xff pattern:$0x75643120]
        %s736 = scalar_lea.vmem [#allocation1], 16
        %737 = vst [vmem:[%s736] ss:$2 sm:$0xff] %v726
        %v738 = vld.sshfl [vmem:[#allocation1 + $0x10] sm:$0xff pattern:$0x75643120]
        %s740 = scalar_lea.vmem [#allocation1], 32
        %741 = vst [vmem:[%s740] ss:$2 sm:$0xff] %v729
        %v742 = vld.sshfl [vmem:[#allocation1 + $0x20] sm:$0xff pattern:$0x75643120]
        %s744 = scalar_lea.vmem [#allocation1], 48
        %745 = vst [vmem:[%s744] ss:$2 sm:$0xff] %v732
        %v746 = vld.sshfl [vmem:[#allocation1 + $0x30] sm:$0xff pattern:$0x75643120]
        %v748 = vunpack.c.l.b16 %v734
        %v749 = vunpack.c.l.b16 %v738
        %v750 = vunpack.c.l.b16 %v742
        %v751 = vunpack.c.l.b16 %v746
        %v752 = vrot.slane %v748, 2
        %v753 = vrot.slane %v749, 1
        %v754 = vsel %vm493, %v753, %v752
        %v755 = vsel %vm496, %v750, %v754
        %v756 = vrot.slane %v751, 7
        %v757 = vsel %vm499, %v756, %v755
        %v758 = vpack.c.b16 %v757, %v757
        %v759 = vrot.slane %v758, 2
        %v762 = vsel %vm460, %v758, %v759
        %764 = vrot.lane.b32.xlu0 %v762, 110
        %v765 = vpop.permute.xlu0 %764
        %v766 = vrot.slane %v765, 6
        %vm767 = vcmask 900096
        %v768 = vsel %vm767, %v766, %v765
        %vm770 = vcmask 1042288
        %vm771 = vcmask 125954
        %vm772 = vmor %vm771, %vm770
        %773 = vst.msk [vmem:[#allocation2 + $0x2] sm:$0xf] %vm772, %v768
        %774 = vst.sshfl [vmem:[#allocation1] sm:$0xff pattern:$0x75643120] %v436
        %s775 = scalar_lea.vmem [#allocation1], 1
        %v776 = vld [vmem:[%s775] ss:$2 sm:$0xff]
        %777 = vst.sshfl [vmem:[#allocation1 + $0x10] sm:$0xff pattern:$0x75643120] %v440
        %s778 = scalar_lea.vmem [#allocation1], 17
        %v779 = vld [vmem:[%s778] ss:$2 sm:$0xff]
        %780 = vst.sshfl [vmem:[#allocation1 + $0x20] sm:$0xff pattern:$0x75643120] %v444
        %s781 = scalar_lea.vmem [#allocation1], 33
        %v782 = vld [vmem:[%s781] ss:$2 sm:$0xff]
        %783 = vst.sshfl [vmem:[#allocation1 + $0x30] sm:$0xff pattern:$0x75643120] %v448
        %s784 = scalar_lea.vmem [#allocation1], 49
        %v785 = vld [vmem:[%s784] ss:$2 sm:$0xff]
        %786 = vst [vmem:[#allocation1] ss:$2 sm:$0xff] %v776
        %v787 = vld.sshfl [vmem:[#allocation1] sm:$0xff pattern:$0x75643120]
        %s789 = scalar_lea.vmem [#allocation1], 16
        %790 = vst [vmem:[%s789] ss:$2 sm:$0xff] %v779
        %v791 = vld.sshfl [vmem:[#allocation1 + $0x10] sm:$0xff pattern:$0x75643120]
        %s793 = scalar_lea.vmem [#allocation1], 32
        %794 = vst [vmem:[%s793] ss:$2 sm:$0xff] %v782
        %v795 = vld.sshfl [vmem:[#allocation1 + $0x20] sm:$0xff pattern:$0x75643120]
        %s797 = scalar_lea.vmem [#allocation1], 48
        %798 = vst [vmem:[%s797] ss:$2 sm:$0xff] %v785
        %v799 = vld.sshfl [vmem:[#allocation1 + $0x30] sm:$0xff pattern:$0x75643120]
        %v801 = vunpack.c.l.b16 %v787
        %v802 = vunpack.c.l.b16 %v791
        %v803 = vunpack.c.l.b16 %v795
        %v804 = vunpack.c.l.b16 %v799
        %v805 = vrot.slane %v801, 3
        %v806 = vrot.slane %v802, 2
        %v807 = vsel %vm493, %v806, %v805
        %v808 = vrot.slane %v803, 1
        %v809 = vsel %vm496, %v808, %v807
        %v810 = vsel %vm499, %v804, %v809
        %v811 = vpack.c.b16 %v810, %v810
        %v812 = vrot.slane %v811, 2
        %v815 = vsel %vm460, %v811, %v812
        %817 = vrot.lane.b32.xlu0 %v815, 16
        %v818 = vpop.permute.xlu0 %817
        %vm820 = vcmask 402560
        %821 = vst.msk [vmem:[#allocation2 + $0x4] sm:$0x3] %vm820, %v818
        %v826 = vrot.slane %v437, 2
        %v827 = vrot.slane %v441, 2
        %v828 = vrot.slane %v445, 2
        %v829 = vrot.slane %v449, 2
        %v832 = vsel %vm460, %v437, %v826
        %v835 = vsel %vm460, %v441, %v827
        %v838 = vsel %vm460, %v445, %v828
        %v841 = vsel %vm460, %v449, %v829
        %842 = vst [vmem:[#allocation1] ss:$2 sm:$0xff] %v832
        %v843 = vld.sshfl [vmem:[#allocation1] sm:$0xff pattern:$0x75643120]
        %s845 = scalar_lea.vmem [#allocation1], 16
        %846 = vst [vmem:[%s845] ss:$2 sm:$0xff] %v835
        %v847 = vld.sshfl [vmem:[#allocation1 + $0x10] sm:$0xff pattern:$0x75643120]
        %s849 = scalar_lea.vmem [#allocation1], 32
        %850 = vst [vmem:[%s849] ss:$2 sm:$0xff] %v838
        %v851 = vld.sshfl [vmem:[#allocation1 + $0x20] sm:$0xff pattern:$0x75643120]
        %s853 = scalar_lea.vmem [#allocation1], 48
        %854 = vst [vmem:[%s853] ss:$2 sm:$0xff] %v841
        %v855 = vld.sshfl [vmem:[#allocation1 + $0x30] sm:$0xff pattern:$0x75643120]
        %v857 = vunpack.c.l.b16 %v843
        %v858 = vunpack.c.l.b16 %v847
        %v859 = vunpack.c.l.b16 %v851
        %v860 = vunpack.c.l.b16 %v855
        %v861 = vrot.slane %v858, 7
        %v862 = vsel %vm493, %v861, %v857
        %v863 = vrot.slane %v859, 6
        %v864 = vsel %vm496, %v863, %v862
        %v865 = vrot.slane %v860, 5
        %v866 = vsel %vm499, %v865, %v864
        %v867 = vpack.c.b16 %v866, %v866
        %v868 = vrot.slane %v867, 2
        %v871 = vsel %vm460, %v867, %v868
        %873 = vrot.lane.b32.xlu0 %v871, 50
        %v874 = vpop.permute.xlu0 %873
        %vm876 = vcmask 681360
        %877 = vst.msk [vmem:[#allocation2 + $0x4] sm:$0x3] %vm876, %v874
        %878 = vst [vmem:[#allocation1] ss:$2 sm:$0xff] %v832
        %v879 = vld.sshfl [vmem:[#allocation1] sm:$0xff pattern:$0x75643120]
        %s881 = scalar_lea.vmem [#allocation1], 16
        %882 = vst [vmem:[%s881] ss:$2 sm:$0xff] %v835
        %v883 = vld.sshfl [vmem:[#allocation1 + $0x10] sm:$0xff pattern:$0x75643120]
        %s885 = scalar_lea.vmem [#allocation1], 32
        %886 = vst [vmem:[%s885] ss:$2 sm:$0xff] %v838
        %v887 = vld.sshfl [vmem:[#allocation1 + $0x20] sm:$0xff pattern:$0x75643120]
        %s889 = scalar_lea.vmem [#allocation1], 48
        %890 = vst [vmem:[%s889] ss:$2 sm:$0xff] %v841
        %v891 = vld.sshfl [vmem:[#allocation1 + $0x30] sm:$0xff pattern:$0x75643120]
        %v893 = vunpack.c.l.b16 %v879
        %v894 = vunpack.c.l.b16 %v883
        %v895 = vunpack.c.l.b16 %v887
        %v896 = vunpack.c.l.b16 %v891
        %v897 = vrot.slane %v893, 1
        %v898 = vsel %vm493, %v894, %v897
        %v899 = vrot.slane %v895, 7
        %v900 = vsel %vm496, %v899, %v898
        %v901 = vrot.slane %v896, 6
        %v902 = vsel %vm499, %v901, %v900
        %v903 = vpack.c.b16 %v902, %v902
        %v904 = vrot.slane %v903, 2
        %v907 = vsel %vm460, %v903, %v904
        %909 = vrot.lane.b32.xlu0 %v907, 84
        %v910 = vpop.permute.xlu0 %909
        %vm912 = vcmask 960160
        %913 = vst.msk [vmem:[#allocation2 + $0x4] sm:$0x3] %vm912, %v910
        %914 = vst [vmem:[#allocation1] ss:$2 sm:$0xff] %v832
        %v915 = vld.sshfl [vmem:[#allocation1] sm:$0xff pattern:$0x75643120]
        %s917 = scalar_lea.vmem [#allocation1], 16
        %918 = vst [vmem:[%s917] ss:$2 sm:$0xff] %v835
        %v919 = vld.sshfl [vmem:[#allocation1 + $0x10] sm:$0xff pattern:$0x75643120]
        %s921 = scalar_lea.vmem [#allocation1], 32
        %922 = vst [vmem:[%s921] ss:$2 sm:$0xff] %v838
        %v923 = vld.sshfl [vmem:[#allocation1 + $0x20] sm:$0xff pattern:$0x75643120]
        %s925 = scalar_lea.vmem [#allocation1], 48
        %926 = vst [vmem:[%s925] ss:$2 sm:$0xff] %v841
        %v927 = vld.sshfl [vmem:[#allocation1 + $0x30] sm:$0xff pattern:$0x75643120]
        %v929 = vunpack.c.l.b16 %v915
        %v930 = vunpack.c.l.b16 %v919
        %v931 = vunpack.c.l.b16 %v923
        %v932 = vunpack.c.l.b16 %v927
        %v933 = vrot.slane %v929, 2
        %v934 = vrot.slane %v930, 1
        %v935 = vsel %vm493, %v934, %v933
        %v936 = vsel %vm496, %v931, %v935
        %v937 = vrot.slane %v932, 7
        %v938 = vsel %vm499, %v937, %v936
        %v939 = vpack.c.b16 %v938, %v938
        %v940 = vrot.slane %v939, 2
        %v943 = vsel %vm460, %v939, %v940
        %945 = vrot.lane.b32.xlu0 %v943, 118
        %v946 = vpop.permute.xlu0 %945
        %v947 = vrot.slane %v946, 6
        %vm948 = vcmask 965632
        %v949 = vsel %vm948, %v947, %v946
        %vm951 = vcmask 1042352
        %vm952 = vcmask 191490
        %vm953 = vmor %vm952, %vm951
        %954 = vst.msk [vmem:[#allocation2 + $0x4] sm:$0xf] %vm953, %v949
        %955 = vst [vmem:[#allocation1] ss:$2 sm:$0xff] %v832
        %v956 = vld.sshfl [vmem:[#allocation1] sm:$0xff pattern:$0x75643120]
        %s958 = scalar_lea.vmem [#allocation1], 16
        %959 = vst [vmem:[%s958] ss:$2 sm:$0xff] %v835
        %v960 = vld.sshfl [vmem:[#allocation1 + $0x10] sm:$0xff pattern:$0x75643120]
        %s962 = scalar_lea.vmem [#allocation1], 32
        %963 = vst [vmem:[%s962] ss:$2 sm:$0xff] %v838
        %v964 = vld.sshfl [vmem:[#allocation1 + $0x20] sm:$0xff pattern:$0x75643120]
        %s966 = scalar_lea.vmem [#allocation1], 48
        %967 = vst [vmem:[%s966] ss:$2 sm:$0xff] %v841
        %v968 = vld.sshfl [vmem:[#allocation1 + $0x30] sm:$0xff pattern:$0x75643120]
        %v970 = vunpack.c.l.b16 %v956
        %v971 = vunpack.c.l.b16 %v960
        %v972 = vunpack.c.l.b16 %v964
        %v973 = vunpack.c.l.b16 %v968
        %v974 = vrot.slane %v970, 3
        %v975 = vrot.slane %v971, 2
        %v976 = vsel %vm493, %v975, %v974
        %v977 = vrot.slane %v972, 1
        %v978 = vsel %vm496, %v977, %v976
        %v979 = vsel %vm499, %v973, %v978
        %v980 = vpack.c.b16 %v979, %v979
        %v981 = vrot.slane %v980, 2
        %v984 = vsel %vm460, %v980, %v981
        %986 = vrot.lane.b32.xlu0 %v984, 24
        %v987 = vpop.permute.xlu0 %986
        %vm989 = vcmask 468160
        %990 = vst.msk [vmem:[#allocation2 + $0x6] sm:$0x3] %vm989, %v987
        %991 = vst.sshfl [vmem:[#allocation1] sm:$0xff pattern:$0x75643120] %v437
        %s992 = scalar_lea.vmem [#allocation1], 1
        %v993 = vld [vmem:[%s992] ss:$2 sm:$0xff]
        %994 = vst.sshfl [vmem:[#allocation1 + $0x10] sm:$0xff pattern:$0x75643120] %v441
        %s995 = scalar_lea.vmem [#allocation1], 17
        %v996 = vld [vmem:[%s995] ss:$2 sm:$0xff]
        %997 = vst.sshfl [vmem:[#allocation1 + $0x20] sm:$0xff pattern:$0x75643120] %v445
        %s998 = scalar_lea.vmem [#allocation1], 33
        %v999 = vld [vmem:[%s998] ss:$2 sm:$0xff]
        %1000 = vst.sshfl [vmem:[#allocation1 + $0x30] sm:$0xff pattern:$0x75643120] %v449
        %s1001 = scalar_lea.vmem [#allocation1], 49
        %v1002 = vld [vmem:[%s1001] ss:$2 sm:$0xff]
        %1003 = vst [vmem:[#allocation1] ss:$2 sm:$0xff] %v993
        %v1004 = vld.sshfl [vmem:[#allocation1] sm:$0xff pattern:$0x75643120]
        %s1006 = scalar_lea.vmem [#allocation1], 16
        %1007 = vst [vmem:[%s1006] ss:$2 sm:$0xff] %v996
        %v1008 = vld.sshfl [vmem:[#allocation1 + $0x10] sm:$0xff pattern:$0x75643120]
        %s1010 = scalar_lea.vmem [#allocation1], 32
        %1011 = vst [vmem:[%s1010] ss:$2 sm:$0xff] %v999
        %v1012 = vld.sshfl [vmem:[#allocation1 + $0x20] sm:$0xff pattern:$0x75643120]
        %s1014 = scalar_lea.vmem [#allocation1], 48
        %1015 = vst [vmem:[%s1014] ss:$2 sm:$0xff] %v1002
        %v1016 = vld.sshfl [vmem:[#allocation1 + $0x30] sm:$0xff pattern:$0x75643120]
        %v1018 = vunpack.c.l.b16 %v1004
        %v1019 = vunpack.c.l.b16 %v1008
        %v1020 = vunpack.c.l.b16 %v1012
        %v1021 = vunpack.c.l.b16 %v1016
        %v1022 = vrot.slane %v1019, 7
        %v1023 = vsel %vm493, %v1022, %v1018
        %v1024 = vrot.slane %v1020, 6
        %v1025 = vsel %vm496, %v1024, %v1023
        %v1026 = vrot.slane %v1021, 5
        %v1027 = vsel %vm499, %v1026, %v1025
        %v1028 = vpack.c.b16 %v1027, %v1027
        %v1029 = vrot.slane %v1028, 2
        %v1032 = vsel %vm460, %v1028, %v1029
        %1034 = vrot.lane.b32.xlu0 %v1032, 58
        %v1035 = vpop.permute.xlu0 %1034
        %vm1037 = vcmask 746960
        %1038 = vst.msk [vmem:[#allocation2 + $0x6] sm:$0x3] %vm1037, %v1035
        %1039 = vst.sshfl [vmem:[#allocation1] sm:$0xff pattern:$0x75643120] %v437
        %s1040 = scalar_lea.vmem [#allocation1], 1
        %v1041 = vld [vmem:[%s1040] ss:$2 sm:$0xff]
        %1042 = vst.sshfl [vmem:[#allocation1 + $0x10] sm:$0xff pattern:$0x75643120] %v441
        %s1043 = scalar_lea.vmem [#allocation1], 17
        %v1044 = vld [vmem:[%s1043] ss:$2 sm:$0xff]
        %1045 = vst.sshfl [vmem:[#allocation1 + $0x20] sm:$0xff pattern:$0x75643120] %v445
        %s1046 = scalar_lea.vmem [#allocation1], 33
        %v1047 = vld [vmem:[%s1046] ss:$2 sm:$0xff]
        %1048 = vst.sshfl [vmem:[#allocation1 + $0x30] sm:$0xff pattern:$0x75643120] %v449
        %s1049 = scalar_lea.vmem [#allocation1], 49
        %v1050 = vld [vmem:[%s1049] ss:$2 sm:$0xff]
        %1051 = vst [vmem:[#allocation1] ss:$2 sm:$0xff] %v1041
        %v1052 = vld.sshfl [vmem:[#allocation1] sm:$0xff pattern:$0x75643120]
        %s1054 = scalar_lea.vmem [#allocation1], 16
        %1055 = vst [vmem:[%s1054] ss:$2 sm:$0xff] %v1044
        %v1056 = vld.sshfl [vmem:[#allocation1 + $0x10] sm:$0xff pattern:$0x75643120]
        %s1058 = scalar_lea.vmem [#allocation1], 32
        %1059 = vst [vmem:[%s1058] ss:$2 sm:$0xff] %v1047
        %v1060 = vld.sshfl [vmem:[#allocation1 + $0x20] sm:$0xff pattern:$0x75643120]
        %s1062 = scalar_lea.vmem [#allocation1], 48
        %1063 = vst [vmem:[%s1062] ss:$2 sm:$0xff] %v1050
        %v1064 = vld.sshfl [vmem:[#allocation1 + $0x30] sm:$0xff pattern:$0x75643120]
        %v1066 = vunpack.c.l.b16 %v1052
        %v1067 = vunpack.c.l.b16 %v1056
        %v1068 = vunpack.c.l.b16 %v1060
        %v1069 = vunpack.c.l.b16 %v1064
        %v1070 = vrot.slane %v1066, 1
        %v1071 = vsel %vm493, %v1067, %v1070
        %v1072 = vrot.slane %v1068, 7
        %v1073 = vsel %vm496, %v1072, %v1071
        %v1074 = vrot.slane %v1069, 6
        %v1075 = vsel %vm499, %v1074, %v1073
        %v1076 = vpack.c.b16 %v1075, %v1075
        %v1077 = vrot.slane %v1076, 2
        %v1080 = vsel %vm460, %v1076, %v1077
        %1082 = vrot.lane.b32.xlu0 %v1080, 92
        %v1083 = vpop.permute.xlu0 %1082
        %vm1085 = vcmask 1025760
        %1086 = vst.msk [vmem:[#allocation2 + $0x6] sm:$0x3] %vm1085, %v1083
        %1087 = vst.sshfl [vmem:[#allocation1] sm:$0xff pattern:$0x75643120] %v437
        %s1088 = scalar_lea.vmem [#allocation1], 1
        %v1089 = vld [vmem:[%s1088] ss:$2 sm:$0xff]
        %1090 = vst.sshfl [vmem:[#allocation1 + $0x10] sm:$0xff pattern:$0x75643120] %v441
        %s1091 = scalar_lea.vmem [#allocation1], 17
        %v1092 = vld [vmem:[%s1091] ss:$2 sm:$0xff]
        %1093 = vst.sshfl [vmem:[#allocation1 + $0x20] sm:$0xff pattern:$0x75643120] %v445
        %s1094 = scalar_lea.vmem [#allocation1], 33
        %v1095 = vld [vmem:[%s1094] ss:$2 sm:$0xff]
        %1096 = vst.sshfl [vmem:[#allocation1 + $0x30] sm:$0xff pattern:$0x75643120] %v449
        %s1097 = scalar_lea.vmem [#allocation1], 49
        %v1098 = vld [vmem:[%s1097] ss:$2 sm:$0xff]
        %1099 = vst [vmem:[#allocation1] ss:$2 sm:$0xff] %v1089
        %v1100 = vld.sshfl [vmem:[#allocation1] sm:$0xff pattern:$0x75643120]
        %s1102 = scalar_lea.vmem [#allocation1], 16
        %1103 = vst [vmem:[%s1102] ss:$2 sm:$0xff] %v1092
        %v1104 = vld.sshfl [vmem:[#allocation1 + $0x10] sm:$0xff pattern:$0x75643120]
        %s1106 = scalar_lea.vmem [#allocation1], 32
        %1107 = vst [vmem:[%s1106] ss:$2 sm:$0xff] %v1095
        %v1108 = vld.sshfl [vmem:[#allocation1 + $0x20] sm:$0xff pattern:$0x75643120]
        %s1110 = scalar_lea.vmem [#allocation1], 48
        %1111 = vst [vmem:[%s1110] ss:$2 sm:$0xff] %v1098
        %v1112 = vld.sshfl [vmem:[#allocation1 + $0x30] sm:$0xff pattern:$0x75643120]
        %v1114 = vunpack.c.l.b16 %v1100
        %v1115 = vunpack.c.l.b16 %v1104
        %v1116 = vunpack.c.l.b16 %v1108
        %v1117 = vunpack.c.l.b16 %v1112
        %v1118 = vrot.slane %v1114, 2
        %v1119 = vrot.slane %v1115, 1
        %v1120 = vsel %vm493, %v1119, %v1118
        %v1121 = vsel %vm496, %v1116, %v1120
        %v1122 = vrot.slane %v1117, 7
        %v1123 = vsel %vm499, %v1122, %v1121
        %v1124 = vpack.c.b16 %v1123, %v1123
        %v1125 = vrot.slane %v1124, 2
        %v1128 = vsel %vm460, %v1124, %v1125
        %1130 = vrot.lane.b32.xlu0 %v1128, 126
        %v1131 = vpop.permute.xlu0 %1130
        %v1132 = vrot.slane %v1131, 6
        %vm1133 = vcmask 1031168
        %v1134 = vsel %vm1133, %v1132, %v1131
        %vm1136 = vcmask 1042416
        %vm1137 = vcmask 257026
        %vm1138 = vmor %vm1137, %vm1136
        %1139 = vst.msk [vmem:[#allocation2 + $0x6] sm:$0xf] %vm1138, %v1134
        %1140 = vst.sshfl [vmem:[#allocation1] sm:$0xff pattern:$0x75643120] %v437
        %s1141 = scalar_lea.vmem [#allocation1], 1
        %v1142 = vld [vmem:[%s1141] ss:$2 sm:$0xff]
        %1143 = vst.sshfl [vmem:[#allocation1 + $0x10] sm:$0xff pattern:$0x75643120] %v441
        %s1144 = scalar_lea.vmem [#allocation1], 17
        %v1145 = vld [vmem:[%s1144] ss:$2 sm:$0xff]
        %1146 = vst.sshfl [vmem:[#allocation1 + $0x20] sm:$0xff pattern:$0x75643120] %v445
        %s1147 = scalar_lea.vmem [#allocation1], 33
        %v1148 = vld [vmem:[%s1147] ss:$2 sm:$0xff]
        %1149 = vst.sshfl [vmem:[#allocation1 + $0x30] sm:$0xff pattern:$0x75643120] %v449
        %s1150 = scalar_lea.vmem [#allocation1], 49
        %v1151 = vld [vmem:[%s1150] ss:$2 sm:$0xff]
        %1152 = vst [vmem:[#allocation1] ss:$2 sm:$0xff] %v1142
        %v1153 = vld.sshfl [vmem:[#allocation1] sm:$0xff pattern:$0x75643120]
        %s1155 = scalar_lea.vmem [#allocation1], 16
        %1156 = vst [vmem:[%s1155] ss:$2 sm:$0xff] %v1145
        %v1157 = vld.sshfl [vmem:[#allocation1 + $0x10] sm:$0xff pattern:$0x75643120]
        %s1159 = scalar_lea.vmem [#allocation1], 32
        %1160 = vst [vmem:[%s1159] ss:$2 sm:$0xff] %v1148
        %v1161 = vld.sshfl [vmem:[#allocation1 + $0x20] sm:$0xff pattern:$0x75643120]
        %s1163 = scalar_lea.vmem [#allocation1], 48
        %1164 = vst [vmem:[%s1163] ss:$2 sm:$0xff] %v1151
        %v1165 = vld.sshfl [vmem:[#allocation1 + $0x30] sm:$0xff pattern:$0x75643120]
        %v1167 = vunpack.c.l.b16 %v1153
        %v1168 = vunpack.c.l.b16 %v1157
        %v1169 = vunpack.c.l.b16 %v1161
        %v1170 = vunpack.c.l.b16 %v1165
        %v1171 = vrot.slane %v1167, 3
        %v1172 = vrot.slane %v1168, 2
        %v1173 = vsel %vm493, %v1172, %v1171
        %v1174 = vrot.slane %v1169, 1
        %v1175 = vsel %vm496, %v1174, %v1173
        %v1176 = vsel %vm499, %v1170, %v1175
        %v1177 = vpack.c.b16 %v1176, %v1176
        %v1178 = vrot.slane %v1177, 2
        %v1181 = vsel %vm460, %v1177, %v1178
        %1183 = vrot.lane.b32.xlu0 %v1181, 32
        %v1184 = vpop.permute.xlu0 %1183
        %vm1186 = vcmask 533760
        %1187 = vst.msk [vmem:[#allocation2 + $0x8] sm:$0x3] %vm1186, %v1184
        %v1192 = vrot.slane %v438, 2
        %v1193 = vrot.slane %v442, 2
        %v1194 = vrot.slane %v446, 2
        %v1195 = vrot.slane %v450, 2
        %v1198 = vsel %vm460, %v438, %v1192
        %v1201 = vsel %vm460, %v442, %v1193
        %v1204 = vsel %vm460, %v446, %v1194
        %v1207 = vsel %vm460, %v450, %v1195
        %1208 = vst [vmem:[#allocation1] ss:$2 sm:$0xff] %v1198
        %v1209 = vld.sshfl [vmem:[#allocation1] sm:$0xff pattern:$0x75643120]
        %s1211 = scalar_lea.vmem [#allocation1], 16
        %1212 = vst [vmem:[%s1211] ss:$2 sm:$0xff] %v1201
        %v1213 = vld.sshfl [vmem:[#allocation1 + $0x10] sm:$0xff pattern:$0x75643120]
        %s1215 = scalar_lea.vmem [#allocation1], 32
        %1216 = vst [vmem:[%s1215] ss:$2 sm:$0xff] %v1204
        %v1217 = vld.sshfl [vmem:[#allocation1 + $0x20] sm:$0xff pattern:$0x75643120]
        %s1219 = scalar_lea.vmem [#allocation1], 48
        %1220 = vst [vmem:[%s1219] ss:$2 sm:$0xff] %v1207
        %v1221 = vld.sshfl [vmem:[#allocation1 + $0x30] sm:$0xff pattern:$0x75643120]
        %v1223 = vunpack.c.l.b16 %v1209
        %v1224 = vunpack.c.l.b16 %v1213
        %v1225 = vunpack.c.l.b16 %v1217
        %v1226 = vunpack.c.l.b16 %v1221
        %v1227 = vrot.slane %v1224, 7
        %v1228 = vsel %vm493, %v1227, %v1223
        %v1229 = vrot.slane %v1225, 6
        %v1230 = vsel %vm496, %v1229, %v1228
        %v1231 = vrot.slane %v1226, 5
        %v1232 = vsel %vm499, %v1231, %v1230
        %v1233 = vpack.c.b16 %v1232, %v1232
        %v1234 = vrot.slane %v1233, 2
        %v1237 = vsel %vm460, %v1233, %v1234
        %1239 = vrot.lane.b32.xlu0 %v1237, 66
        %v1240 = vpop.permute.xlu0 %1239
        %vm1242 = vcmask 812560
        %1243 = vst.msk [vmem:[#allocation2 + $0x8] sm:$0x3] %vm1242, %v1240
        %1244 = vst [vmem:[#allocation1] ss:$2 sm:$0xff] %v1198
        %v1245 = vld.sshfl [vmem:[#allocation1] sm:$0xff pattern:$0x75643120]
        %s1247 = scalar_lea.vmem [#allocation1], 16
        %1248 = vst [vmem:[%s1247] ss:$2 sm:$0xff] %v1201
        %v1249 = vld.sshfl [vmem:[#allocation1 + $0x10] sm:$0xff pattern:$0x75643120]
        %s1251 = scalar_lea.vmem [#allocation1], 32
        %1252 = vst [vmem:[%s1251] ss:$2 sm:$0xff] %v1204
        %v1253 = vld.sshfl [vmem:[#allocation1 + $0x20] sm:$0xff pattern:$0x75643120]
        %s1255 = scalar_lea.vmem [#allocation1], 48
        %1256 = vst [vmem:[%s1255] ss:$2 sm:$0xff] %v1207
        %v1257 = vld.sshfl [vmem:[#allocation1 + $0x30] sm:$0xff pattern:$0x75643120]
        %v1259 = vunpack.c.l.b16 %v1245
        %v1260 = vunpack.c.l.b16 %v1249
        %v1261 = vunpack.c.l.b16 %v1253
        %v1262 = vunpack.c.l.b16 %v1257
        %v1263 = vrot.slane %v1259, 1
        %v1264 = vsel %vm493, %v1260, %v1263
        %v1265 = vrot.slane %v1261, 7
        %v1266 = vsel %vm496, %v1265, %v1264
        %v1267 = vrot.slane %v1262, 6
        %v1268 = vsel %vm499, %v1267, %v1266
        %v1269 = vpack.c.b16 %v1268, %v1268
        %v1270 = vrot.slane %v1269, 2
        %v1273 = vsel %vm460, %v1269, %v1270
        %1275 = vrot.lane.b32.xlu0 %v1273, 100
        %v1276 = vpop.permute.xlu0 %1275
        %v1277 = vrot.slane %v1276, 6
        %vm1278 = vcmask 818176
        %v1279 = vsel %vm1278, %v1277, %v1276
        %vm1281 = vcmask 1042208
        %vm1282 = vcmask 44034
        %vm1283 = vmor %vm1282, %vm1281
        %1284 = vst.msk [vmem:[#allocation2 + $0x8] sm:$0xf] %vm1283, %v1279
        %1285 = vst [vmem:[#allocation1] ss:$2 sm:$0xff] %v1198
        %v1286 = vld.sshfl [vmem:[#allocation1] sm:$0xff pattern:$0x75643120]
        %s1288 = scalar_lea.vmem [#allocation1], 16
        %1289 = vst [vmem:[%s1288] ss:$2 sm:$0xff] %v1201
        %v1290 = vld.sshfl [vmem:[#allocation1 + $0x10] sm:$0xff pattern:$0x75643120]
        %s1292 = scalar_lea.vmem [#allocation1], 32
        %1293 = vst [vmem:[%s1292] ss:$2 sm:$0xff] %v1204
        %v1294 = vld.sshfl [vmem:[#allocation1 + $0x20] sm:$0xff pattern:$0x75643120]
        %s1296 = scalar_lea.vmem [#allocation1], 48
        %1297 = vst [vmem:[%s1296] ss:$2 sm:$0xff] %v1207
        %v1298 = vld.sshfl [vmem:[#allocation1 + $0x30] sm:$0xff pattern:$0x75643120]
        %v1300 = vunpack.c.l.b16 %v1286
        %v1301 = vunpack.c.l.b16 %v1290
        %v1302 = vunpack.c.l.b16 %v1294
        %v1303 = vunpack.c.l.b16 %v1298
        %v1304 = vrot.slane %v1300, 2
        %v1305 = vrot.slane %v1301, 1
        %v1306 = vsel %vm493, %v1305, %v1304
        %v1307 = vsel %vm496, %v1302, %v1306
        %v1308 = vrot.slane %v1303, 7
        %v1309 = vsel %vm499, %v1308, %v1307
        %v1310 = vpack.c.b16 %v1309, %v1309
        %v1311 = vrot.slane %v1310, 2
        %v1314 = vsel %vm460, %v1310, %v1311
        %1316 = vrot.lane.b32.xlu0 %v1314, 6
        %v1317 = vpop.permute.xlu0 %1316
        %vm1319 = vcmask 320560
        %1320 = vst.msk [vmem:[#allocation2 + $0xa] sm:$0x3] %vm1319, %v1317
        %1321 = vst [vmem:[#allocation1] ss:$2 sm:$0xff] %v1198
        %v1322 = vld.sshfl [vmem:[#allocation1] sm:$0xff pattern:$0x75643120]
        %s1324 = scalar_lea.vmem [#allocation1], 16
        %1325 = vst [vmem:[%s1324] ss:$2 sm:$0xff] %v1201
        %v1326 = vld.sshfl [vmem:[#allocation1 + $0x10] sm:$0xff pattern:$0x75643120]
        %s1328 = scalar_lea.vmem [#allocation1], 32
        %1329 = vst [vmem:[%s1328] ss:$2 sm:$0xff] %v1204
        %v1330 = vld.sshfl [vmem:[#allocation1 + $0x20] sm:$0xff pattern:$0x75643120]
        %s1332 = scalar_lea.vmem [#allocation1], 48
        %1333 = vst [vmem:[%s1332] ss:$2 sm:$0xff] %v1207
        %v1334 = vld.sshfl [vmem:[#allocation1 + $0x30] sm:$0xff pattern:$0x75643120]
        %v1336 = vunpack.c.l.b16 %v1322
        %v1337 = vunpack.c.l.b16 %v1326
        %v1338 = vunpack.c.l.b16 %v1330
        %v1339 = vunpack.c.l.b16 %v1334
        %v1340 = vrot.slane %v1336, 3
        %v1341 = vrot.slane %v1337, 2
        %v1342 = vsel %vm493, %v1341, %v1340
        %v1343 = vrot.slane %v1338, 1
        %v1344 = vsel %vm496, %v1343, %v1342
        %v1345 = vsel %vm499, %v1339, %v1344
        %v1346 = vpack.c.b16 %v1345, %v1345
        %v1347 = vrot.slane %v1346, 2
        %v1350 = vsel %vm460, %v1346, %v1347
        %1352 = vrot.lane.b32.xlu0 %v1350, 40
        %v1353 = vpop.permute.xlu0 %1352
        %vm1355 = vcmask 599360
        %1356 = vst.msk [vmem:[#allocation2 + $0xa] sm:$0x3] %vm1355, %v1353
        %1357 = vst.sshfl [vmem:[#allocation1] sm:$0xff pattern:$0x75643120] %v438
        %s1358 = scalar_lea.vmem [#allocation1], 1
        %v1359 = vld [vmem:[%s1358] ss:$2 sm:$0xff]
        %1360 = vst.sshfl [vmem:[#allocation1 + $0x10] sm:$0xff pattern:$0x75643120] %v442
        %s1361 = scalar_lea.vmem [#allocation1], 17
        %v1362 = vld [vmem:[%s1361] ss:$2 sm:$0xff]
        %1363 = vst.sshfl [vmem:[#allocation1 + $0x20] sm:$0xff pattern:$0x75643120] %v446
        %s1364 = scalar_lea.vmem [#allocation1], 33
        %v1365 = vld [vmem:[%s1364] ss:$2 sm:$0xff]
        %1366 = vst.sshfl [vmem:[#allocation1 + $0x30] sm:$0xff pattern:$0x75643120] %v450
        %s1367 = scalar_lea.vmem [#allocation1], 49
        %v1368 = vld [vmem:[%s1367] ss:$2 sm:$0xff]
        %1369 = vst [vmem:[#allocation1] ss:$2 sm:$0xff] %v1359
        %v1370 = vld.sshfl [vmem:[#allocation1] sm:$0xff pattern:$0x75643120]
        %s1372 = scalar_lea.vmem [#allocation1], 16
        %1373 = vst [vmem:[%s1372] ss:$2 sm:$0xff] %v1362
        %v1374 = vld.sshfl [vmem:[#allocation1 + $0x10] sm:$0xff pattern:$0x75643120]
        %s1376 = scalar_lea.vmem [#allocation1], 32
        %1377 = vst [vmem:[%s1376] ss:$2 sm:$0xff] %v1365
        %v1378 = vld.sshfl [vmem:[#allocation1 + $0x20] sm:$0xff pattern:$0x75643120]
        %s1380 = scalar_lea.vmem [#allocation1], 48
        %1381 = vst [vmem:[%s1380] ss:$2 sm:$0xff] %v1368
        %v1382 = vld.sshfl [vmem:[#allocation1 + $0x30] sm:$0xff pattern:$0x75643120]
        %v1384 = vunpack.c.l.b16 %v1370
        %v1385 = vunpack.c.l.b16 %v1374
        %v1386 = vunpack.c.l.b16 %v1378
        %v1387 = vunpack.c.l.b16 %v1382
        %v1388 = vrot.slane %v1385, 7
        %v1389 = vsel %vm493, %v1388, %v1384
        %v1390 = vrot.slane %v1386, 6
        %v1391 = vsel %vm496, %v1390, %v1389
        %v1392 = vrot.slane %v1387, 5
        %v1393 = vsel %vm499, %v1392, %v1391
        %v1394 = vpack.c.b16 %v1393, %v1393
        %v1395 = vrot.slane %v1394, 2
        %v1398 = vsel %vm460, %v1394, %v1395
        %1400 = vrot.lane.b32.xlu0 %v1398, 74
        %v1401 = vpop.permute.xlu0 %1400
        %vm1403 = vcmask 878160
        %1404 = vst.msk [vmem:[#allocation2 + $0xa] sm:$0x3] %vm1403, %v1401
        %1405 = vst.sshfl [vmem:[#allocation1] sm:$0xff pattern:$0x75643120] %v438
        %s1406 = scalar_lea.vmem [#allocation1], 1
        %v1407 = vld [vmem:[%s1406] ss:$2 sm:$0xff]
        %1408 = vst.sshfl [vmem:[#allocation1 + $0x10] sm:$0xff pattern:$0x75643120] %v442
        %s1409 = scalar_lea.vmem [#allocation1], 17
        %v1410 = vld [vmem:[%s1409] ss:$2 sm:$0xff]
        %1411 = vst.sshfl [vmem:[#allocation1 + $0x20] sm:$0xff pattern:$0x75643120] %v446
        %s1412 = scalar_lea.vmem [#allocation1], 33
        %v1413 = vld [vmem:[%s1412] ss:$2 sm:$0xff]
        %1414 = vst.sshfl [vmem:[#allocation1 + $0x30] sm:$0xff pattern:$0x75643120] %v450
        %s1415 = scalar_lea.vmem [#allocation1], 49
        %v1416 = vld [vmem:[%s1415] ss:$2 sm:$0xff]
        %1417 = vst [vmem:[#allocation1] ss:$2 sm:$0xff] %v1407
        %v1418 = vld.sshfl [vmem:[#allocation1] sm:$0xff pattern:$0x75643120]
        %s1420 = scalar_lea.vmem [#allocation1], 16
        %1421 = vst [vmem:[%s1420] ss:$2 sm:$0xff] %v1410
        %v1422 = vld.sshfl [vmem:[#allocation1 + $0x10] sm:$0xff pattern:$0x75643120]
        %s1424 = scalar_lea.vmem [#allocation1], 32
        %1425 = vst [vmem:[%s1424] ss:$2 sm:$0xff] %v1413
        %v1426 = vld.sshfl [vmem:[#allocation1 + $0x20] sm:$0xff pattern:$0x75643120]
        %s1428 = scalar_lea.vmem [#allocation1], 48
        %1429 = vst [vmem:[%s1428] ss:$2 sm:$0xff] %v1416
        %v1430 = vld.sshfl [vmem:[#allocation1 + $0x30] sm:$0xff pattern:$0x75643120]
        %v1432 = vunpack.c.l.b16 %v1418
        %v1433 = vunpack.c.l.b16 %v1422
        %v1434 = vunpack.c.l.b16 %v1426
        %v1435 = vunpack.c.l.b16 %v1430
        %v1436 = vrot.slane %v1432, 1
        %v1437 = vsel %vm493, %v1433, %v1436
        %v1438 = vrot.slane %v1434, 7
        %v1439 = vsel %vm496, %v1438, %v1437
        %v1440 = vrot.slane %v1435, 6
        %v1441 = vsel %vm499, %v1440, %v1439
        %v1442 = vpack.c.b16 %v1441, %v1441
        %v1443 = vrot.slane %v1442, 2
        %v1446 = vsel %vm460, %v1442, %v1443
        %1448 = vrot.lane.b32.xlu0 %v1446, 108
        %v1449 = vpop.permute.xlu0 %1448
        %v1450 = vrot.slane %v1449, 6
        %vm1451 = vcmask 883712
        %v1452 = vsel %vm1451, %v1450, %v1449
        %vm1454 = vcmask 1042272
        %vm1455 = vcmask 109570
        %vm1456 = vmor %vm1455, %vm1454
        %1457 = vst.msk [vmem:[#allocation2 + $0xa] sm:$0xf] %vm1456, %v1452
        %1458 = vst.sshfl [vmem:[#allocation1] sm:$0xff pattern:$0x75643120] %v438
        %s1459 = scalar_lea.vmem [#allocation1], 1
        %v1460 = vld [vmem:[%s1459] ss:$2 sm:$0xff]
        %1461 = vst.sshfl [vmem:[#allocation1 + $0x10] sm:$0xff pattern:$0x75643120] %v442
        %s1462 = scalar_lea.vmem [#allocation1], 17
        %v1463 = vld [vmem:[%s1462] ss:$2 sm:$0xff]
        %1464 = vst.sshfl [vmem:[#allocation1 + $0x20] sm:$0xff pattern:$0x75643120] %v446
        %s1465 = scalar_lea.vmem [#allocation1], 33
        %v1466 = vld [vmem:[%s1465] ss:$2 sm:$0xff]
        %1467 = vst.sshfl [vmem:[#allocation1 + $0x30] sm:$0xff pattern:$0x75643120] %v450
        %s1468 = scalar_lea.vmem [#allocation1], 49
        %v1469 = vld [vmem:[%s1468] ss:$2 sm:$0xff]
        %1470 = vst [vmem:[#allocation1] ss:$2 sm:$0xff] %v1460
        %v1471 = vld.sshfl [vmem:[#allocation1] sm:$0xff pattern:$0x75643120]
        %s1473 = scalar_lea.vmem [#allocation1], 16
        %1474 = vst [vmem:[%s1473] ss:$2 sm:$0xff] %v1463
        %v1475 = vld.sshfl [vmem:[#allocation1 + $0x10] sm:$0xff pattern:$0x75643120]
        %s1477 = scalar_lea.vmem [#allocation1], 32
        %1478 = vst [vmem:[%s1477] ss:$2 sm:$0xff] %v1466
        %v1479 = vld.sshfl [vmem:[#allocation1 + $0x20] sm:$0xff pattern:$0x75643120]
        %s1481 = scalar_lea.vmem [#allocation1], 48
        %1482 = vst [vmem:[%s1481] ss:$2 sm:$0xff] %v1469
        %v1483 = vld.sshfl [vmem:[#allocation1 + $0x30] sm:$0xff pattern:$0x75643120]
        %v1485 = vunpack.c.l.b16 %v1471
        %v1486 = vunpack.c.l.b16 %v1475
        %v1487 = vunpack.c.l.b16 %v1479
        %v1488 = vunpack.c.l.b16 %v1483
        %v1489 = vrot.slane %v1485, 2
        %v1490 = vrot.slane %v1486, 1
        %v1491 = vsel %vm493, %v1490, %v1489
        %v1492 = vsel %vm496, %v1487, %v1491
        %v1493 = vrot.slane %v1488, 7
        %v1494 = vsel %vm499, %v1493, %v1492
        %v1495 = vpack.c.b16 %v1494, %v1494
        %v1496 = vrot.slane %v1495, 2
        %v1499 = vsel %vm460, %v1495, %v1496
        %1501 = vrot.lane.b32.xlu0 %v1499, 14
        %v1502 = vpop.permute.xlu0 %1501
        %vm1504 = vcmask 386160
        %1505 = vst.msk [vmem:[#allocation2 + $0xc] sm:$0x3] %vm1504, %v1502
        %1506 = vst.sshfl [vmem:[#allocation1] sm:$0xff pattern:$0x75643120] %v438
        %s1507 = scalar_lea.vmem [#allocation1], 1
        %v1508 = vld [vmem:[%s1507] ss:$2 sm:$0xff]
        %1509 = vst.sshfl [vmem:[#allocation1 + $0x10] sm:$0xff pattern:$0x75643120] %v442
        %s1510 = scalar_lea.vmem [#allocation1], 17
        %v1511 = vld [vmem:[%s1510] ss:$2 sm:$0xff]
        %1512 = vst.sshfl [vmem:[#allocation1 + $0x20] sm:$0xff pattern:$0x75643120] %v446
        %s1513 = scalar_lea.vmem [#allocation1], 33
        %v1514 = vld [vmem:[%s1513] ss:$2 sm:$0xff]
        %1515 = vst.sshfl [vmem:[#allocation1 + $0x30] sm:$0xff pattern:$0x75643120] %v450
        %s1516 = scalar_lea.vmem [#allocation1], 49
        %v1517 = vld [vmem:[%s1516] ss:$2 sm:$0xff]
        %1518 = vst [vmem:[#allocation1] ss:$2 sm:$0xff] %v1508
        %v1519 = vld.sshfl [vmem:[#allocation1] sm:$0xff pattern:$0x75643120]
        %s1521 = scalar_lea.vmem [#allocation1], 16
        %1522 = vst [vmem:[%s1521] ss:$2 sm:$0xff] %v1511
        %v1523 = vld.sshfl [vmem:[#allocation1 + $0x10] sm:$0xff pattern:$0x75643120]
        %s1525 = scalar_lea.vmem [#allocation1], 32
        %1526 = vst [vmem:[%s1525] ss:$2 sm:$0xff] %v1514
        %v1527 = vld.sshfl [vmem:[#allocation1 + $0x20] sm:$0xff pattern:$0x75643120]
        %s1529 = scalar_lea.vmem [#allocation1], 48
        %1530 = vst [vmem:[%s1529] ss:$2 sm:$0xff] %v1517
        %v1531 = vld.sshfl [vmem:[#allocation1 + $0x30] sm:$0xff pattern:$0x75643120]
        %v1533 = vunpack.c.l.b16 %v1519
        %v1534 = vunpack.c.l.b16 %v1523
        %v1535 = vunpack.c.l.b16 %v1527
        %v1536 = vunpack.c.l.b16 %v1531
        %v1537 = vrot.slane %v1533, 3
        %v1538 = vrot.slane %v1534, 2
        %v1539 = vsel %vm493, %v1538, %v1537
        %v1540 = vrot.slane %v1535, 1
        %v1541 = vsel %vm496, %v1540, %v1539
        %v1542 = vsel %vm499, %v1536, %v1541
        %v1543 = vpack.c.b16 %v1542, %v1542
        %v1544 = vrot.slane %v1543, 2
        %v1547 = vsel %vm460, %v1543, %v1544
        %1549 = vrot.lane.b32.xlu0 %v1547, 48
        %v1550 = vpop.permute.xlu0 %1549
        %vm1552 = vcmask 664960
        %1553 = vst.msk [vmem:[#allocation2 + $0xc] sm:$0x3] %vm1552, %v1550
        %v1558 = vrot.slane %v439, 2
        %v1559 = vrot.slane %v443, 2
        %v1560 = vrot.slane %v447, 2
        %v1561 = vrot.slane %v451, 2
        %v1564 = vsel %vm460, %v439, %v1558
        %v1567 = vsel %vm460, %v443, %v1559
        %v1570 = vsel %vm460, %v447, %v1560
        %v1573 = vsel %vm460, %v451, %v1561
        %1574 = vst [vmem:[#allocation1] ss:$2 sm:$0xff] %v1564
        %v1575 = vld.sshfl [vmem:[#allocation1] sm:$0xff pattern:$0x75643120]
        %s1577 = scalar_lea.vmem [#allocation1], 16
        %1578 = vst [vmem:[%s1577] ss:$2 sm:$0xff] %v1567
        %v1579 = vld.sshfl [vmem:[#allocation1 + $0x10] sm:$0xff pattern:$0x75643120]
        %s1581 = scalar_lea.vmem [#allocation1], 32
        %1582 = vst [vmem:[%s1581] ss:$2 sm:$0xff] %v1570
        %v1583 = vld.sshfl [vmem:[#allocation1 + $0x20] sm:$0xff pattern:$0x75643120]
        %s1585 = scalar_lea.vmem [#allocation1], 48
        %1586 = vst [vmem:[%s1585] ss:$2 sm:$0xff] %v1573
        %v1587 = vld.sshfl [vmem:[#allocation1 + $0x30] sm:$0xff pattern:$0x75643120]
        %v1589 = vunpack.c.l.b16 %v1575
        %v1590 = vunpack.c.l.b16 %v1579
        %v1591 = vunpack.c.l.b16 %v1583
        %v1592 = vunpack.c.l.b16 %v1587
        %v1593 = vrot.slane %v1590, 7
        %v1594 = vsel %vm493, %v1593, %v1589
        %v1595 = vrot.slane %v1591, 6
        %v1596 = vsel %vm496, %v1595, %v1594
        %v1597 = vrot.slane %v1592, 5
        %v1598 = vsel %vm499, %v1597, %v1596
        %v1599 = vpack.c.b16 %v1598, %v1598
        %v1600 = vrot.slane %v1599, 2
        %v1603 = vsel %vm460, %v1599, %v1600
        %1605 = vrot.lane.b32.xlu0 %v1603, 82
        %v1606 = vpop.permute.xlu0 %1605
        %vm1608 = vcmask 943760
        %1609 = vst.msk [vmem:[#allocation2 + $0xc] sm:$0x3] %vm1608, %v1606
        %1610 = vst [vmem:[#allocation1] ss:$2 sm:$0xff] %v1564
        %v1611 = vld.sshfl [vmem:[#allocation1] sm:$0xff pattern:$0x75643120]
        %s1613 = scalar_lea.vmem [#allocation1], 16
        %1614 = vst [vmem:[%s1613] ss:$2 sm:$0xff] %v1567
        %v1615 = vld.sshfl [vmem:[#allocation1 + $0x10] sm:$0xff pattern:$0x75643120]
        %s1617 = scalar_lea.vmem [#allocation1], 32
        %1618 = vst [vmem:[%s1617] ss:$2 sm:$0xff] %v1570
        %v1619 = vld.sshfl [vmem:[#allocation1 + $0x20] sm:$0xff pattern:$0x75643120]
        %s1621 = scalar_lea.vmem [#allocation1], 48
        %1622 = vst [vmem:[%s1621] ss:$2 sm:$0xff] %v1573
        %v1623 = vld.sshfl [vmem:[#allocation1 + $0x30] sm:$0xff pattern:$0x75643120]
        %v1625 = vunpack.c.l.b16 %v1611
        %v1626 = vunpack.c.l.b16 %v1615
        %v1627 = vunpack.c.l.b16 %v1619
        %v1628 = vunpack.c.l.b16 %v1623
        %v1629 = vrot.slane %v1625, 1
        %v1630 = vsel %vm493, %v1626, %v1629
        %v1631 = vrot.slane %v1627, 7
        %v1632 = vsel %vm496, %v1631, %v1630
        %v1633 = vrot.slane %v1628, 6
        %v1634 = vsel %vm499, %v1633, %v1632
        %v1635 = vpack.c.b16 %v1634, %v1634
        %v1636 = vrot.slane %v1635, 2
        %v1639 = vsel %vm460, %v1635, %v1636
        %1641 = vrot.lane.b32.xlu0 %v1639, 116
        %v1642 = vpop.permute.xlu0 %1641
        %v1643 = vrot.slane %v1642, 6
        %vm1644 = vcmask 949248
        %v1645 = vsel %vm1644, %v1643, %v1642
        %vm1647 = vcmask 1042336
        %vm1648 = vcmask 175106
        %vm1649 = vmor %vm1648, %vm1647
        %1650 = vst.msk [vmem:[#allocation2 + $0xc] sm:$0xf] %vm1649, %v1645
        %1651 = vst [vmem:[#allocation1] ss:$2 sm:$0xff] %v1564
        %v1652 = vld.sshfl [vmem:[#allocation1] sm:$0xff pattern:$0x75643120]
        %s1654 = scalar_lea.vmem [#allocation1], 16
        %1655 = vst [vmem:[%s1654] ss:$2 sm:$0xff] %v1567
        %v1656 = vld.sshfl [vmem:[#allocation1 + $0x10] sm:$0xff pattern:$0x75643120]
        %s1658 = scalar_lea.vmem [#allocation1], 32
        %1659 = vst [vmem:[%s1658] ss:$2 sm:$0xff] %v1570
        %v1660 = vld.sshfl [vmem:[#allocation1 + $0x20] sm:$0xff pattern:$0x75643120]
        %s1662 = scalar_lea.vmem [#allocation1], 48
        %1663 = vst [vmem:[%s1662] ss:$2 sm:$0xff] %v1573
        %v1664 = vld.sshfl [vmem:[#allocation1 + $0x30] sm:$0xff pattern:$0x75643120]
        %v1666 = vunpack.c.l.b16 %v1652
        %v1667 = vunpack.c.l.b16 %v1656
        %v1668 = vunpack.c.l.b16 %v1660
        %v1669 = vunpack.c.l.b16 %v1664
        %v1670 = vrot.slane %v1666, 2
        %v1671 = vrot.slane %v1667, 1
        %v1672 = vsel %vm493, %v1671, %v1670
        %v1673 = vsel %vm496, %v1668, %v1672
        %v1674 = vrot.slane %v1669, 7
        %v1675 = vsel %vm499, %v1674, %v1673
        %v1676 = vpack.c.b16 %v1675, %v1675
        %v1677 = vrot.slane %v1676, 2
        %v1680 = vsel %vm460, %v1676, %v1677
        %1682 = vrot.lane.b32.xlu0 %v1680, 22
        %v1683 = vpop.permute.xlu0 %1682
        %vm1685 = vcmask 451760
        %1686 = vst.msk [vmem:[#allocation2 + $0xe] sm:$0x3] %vm1685, %v1683
        %1687 = vst [vmem:[#allocation1] ss:$2 sm:$0xff] %v1564
        %v1688 = vld.sshfl [vmem:[#allocation1] sm:$0xff pattern:$0x75643120]
        %s1690 = scalar_lea.vmem [#allocation1], 16
        %1691 = vst [vmem:[%s1690] ss:$2 sm:$0xff] %v1567
        %v1692 = vld.sshfl [vmem:[#allocation1 + $0x10] sm:$0xff pattern:$0x75643120]
        %s1694 = scalar_lea.vmem [#allocation1], 32
        %1695 = vst [vmem:[%s1694] ss:$2 sm:$0xff] %v1570
        %v1696 = vld.sshfl [vmem:[#allocation1 + $0x20] sm:$0xff pattern:$0x75643120]
        %s1698 = scalar_lea.vmem [#allocation1], 48
        %1699 = vst [vmem:[%s1698] ss:$2 sm:$0xff] %v1573
        %v1700 = vld.sshfl [vmem:[#allocation1 + $0x30] sm:$0xff pattern:$0x75643120]
        %v1702 = vunpack.c.l.b16 %v1688
        %v1703 = vunpack.c.l.b16 %v1692
        %v1704 = vunpack.c.l.b16 %v1696
        %v1705 = vunpack.c.l.b16 %v1700
        %v1706 = vrot.slane %v1702, 3
        %v1707 = vrot.slane %v1703, 2
        %v1708 = vsel %vm493, %v1707, %v1706
        %v1709 = vrot.slane %v1704, 1
        %v1710 = vsel %vm496, %v1709, %v1708
        %v1711 = vsel %vm499, %v1705, %v1710
        %v1712 = vpack.c.b16 %v1711, %v1711
        %v1713 = vrot.slane %v1712, 2
        %v1716 = vsel %vm460, %v1712, %v1713
        %1718 = vrot.lane.b32.xlu0 %v1716, 56
        %v1719 = vpop.permute.xlu0 %1718
        %vm1721 = vcmask 730560
        %1722 = vst.msk [vmem:[#allocation2 + $0xe] sm:$0x3] %vm1721, %v1719
        %1723 = vst.sshfl [vmem:[#allocation1] sm:$0xff pattern:$0x75643120] %v439
        %s1724 = scalar_lea.vmem [#allocation1], 1
        %v1725 = vld [vmem:[%s1724] ss:$2 sm:$0xff]
        %1726 = vst.sshfl [vmem:[#allocation1 + $0x10] sm:$0xff pattern:$0x75643120] %v443
        %s1727 = scalar_lea.vmem [#allocation1], 17
        %v1728 = vld [vmem:[%s1727] ss:$2 sm:$0xff]
        %1729 = vst.sshfl [vmem:[#allocation1 + $0x20] sm:$0xff pattern:$0x75643120] %v447
        %s1730 = scalar_lea.vmem [#allocation1], 33
        %v1731 = vld [vmem:[%s1730] ss:$2 sm:$0xff]
        %1732 = vst.sshfl [vmem:[#allocation1 + $0x30] sm:$0xff pattern:$0x75643120] %v451
        %s1733 = scalar_lea.vmem [#allocation1], 49
        %v1734 = vld [vmem:[%s1733] ss:$2 sm:$0xff]
        %1735 = vst [vmem:[#allocation1] ss:$2 sm:$0xff] %v1725
        %v1736 = vld.sshfl [vmem:[#allocation1] sm:$0xff pattern:$0x75643120]
        %s1738 = scalar_lea.vmem [#allocation1], 16
        %1739 = vst [vmem:[%s1738] ss:$2 sm:$0xff] %v1728
        %v1740 = vld.sshfl [vmem:[#allocation1 + $0x10] sm:$0xff pattern:$0x75643120]
        %s1742 = scalar_lea.vmem [#allocation1], 32
        %1743 = vst [vmem:[%s1742] ss:$2 sm:$0xff] %v1731
        %v1744 = vld.sshfl [vmem:[#allocation1 + $0x20] sm:$0xff pattern:$0x75643120]
        %s1746 = scalar_lea.vmem [#allocation1], 48
        %1747 = vst [vmem:[%s1746] ss:$2 sm:$0xff] %v1734
        %v1748 = vld.sshfl [vmem:[#allocation1 + $0x30] sm:$0xff pattern:$0x75643120]
        %v1750 = vunpack.c.l.b16 %v1736
        %v1751 = vunpack.c.l.b16 %v1740
        %v1752 = vunpack.c.l.b16 %v1744
        %v1753 = vunpack.c.l.b16 %v1748
        %v1754 = vrot.slane %v1751, 7
        %v1755 = vsel %vm493, %v1754, %v1750
        %v1756 = vrot.slane %v1752, 6
        %v1757 = vsel %vm496, %v1756, %v1755
        %v1758 = vrot.slane %v1753, 5
        %v1759 = vsel %vm499, %v1758, %v1757
        %v1760 = vpack.c.b16 %v1759, %v1759
        %v1761 = vrot.slane %v1760, 2
        %v1764 = vsel %vm460, %v1760, %v1761
        %1766 = vrot.lane.b32.xlu0 %v1764, 90
        %v1767 = vpop.permute.xlu0 %1766
        %vm1769 = vcmask 1009360
        %1770 = vst.msk [vmem:[#allocation2 + $0xe] sm:$0x3] %vm1769, %v1767
        %1771 = vst.sshfl [vmem:[#allocation1] sm:$0xff pattern:$0x75643120] %v439
        %s1772 = scalar_lea.vmem [#allocation1], 1
        %v1773 = vld [vmem:[%s1772] ss:$2 sm:$0xff]
        %1774 = vst.sshfl [vmem:[#allocation1 + $0x10] sm:$0xff pattern:$0x75643120] %v443
        %s1775 = scalar_lea.vmem [#allocation1], 17
        %v1776 = vld [vmem:[%s1775] ss:$2 sm:$0xff]
        %1777 = vst.sshfl [vmem:[#allocation1 + $0x20] sm:$0xff pattern:$0x75643120] %v447
        %s1778 = scalar_lea.vmem [#allocation1], 33
        %v1779 = vld [vmem:[%s1778] ss:$2 sm:$0xff]
        %1780 = vst.sshfl [vmem:[#allocation1 + $0x30] sm:$0xff pattern:$0x75643120] %v451
        %s1781 = scalar_lea.vmem [#allocation1], 49
        %v1782 = vld [vmem:[%s1781] ss:$2 sm:$0xff]
        %1783 = vst [vmem:[#allocation1] ss:$2 sm:$0xff] %v1773
        %v1784 = vld.sshfl [vmem:[#allocation1] sm:$0xff pattern:$0x75643120]
        %s1786 = scalar_lea.vmem [#allocation1], 16
        %1787 = vst [vmem:[%s1786] ss:$2 sm:$0xff] %v1776
        %v1788 = vld.sshfl [vmem:[#allocation1 + $0x10] sm:$0xff pattern:$0x75643120]
        %s1790 = scalar_lea.vmem [#allocation1], 32
        %1791 = vst [vmem:[%s1790] ss:$2 sm:$0xff] %v1779
        %v1792 = vld.sshfl [vmem:[#allocation1 + $0x20] sm:$0xff pattern:$0x75643120]
        %s1794 = scalar_lea.vmem [#allocation1], 48
        %1795 = vst [vmem:[%s1794] ss:$2 sm:$0xff] %v1782
        %v1796 = vld.sshfl [vmem:[#allocation1 + $0x30] sm:$0xff pattern:$0x75643120]
        %v1798 = vunpack.c.l.b16 %v1784
        %v1799 = vunpack.c.l.b16 %v1788
        %v1800 = vunpack.c.l.b16 %v1792
        %v1801 = vunpack.c.l.b16 %v1796
        %v1802 = vrot.slane %v1798, 1
        %v1803 = vsel %vm493, %v1799, %v1802
        %v1804 = vrot.slane %v1800, 7
        %v1805 = vsel %vm496, %v1804, %v1803
        %v1806 = vrot.slane %v1801, 6
        %v1807 = vsel %vm499, %v1806, %v1805
        %v1808 = vpack.c.b16 %v1807, %v1807
        %v1809 = vrot.slane %v1808, 2
        %v1812 = vsel %vm460, %v1808, %v1809
        %1814 = vrot.lane.b32.xlu0 %v1812, 124
        %v1815 = vpop.permute.xlu0 %1814
        %v1816 = vrot.slane %v1815, 6
        %vm1817 = vcmask 1014784
        %v1818 = vsel %vm1817, %v1816, %v1815
        %vm1820 = vcmask 1042400
        %vm1821 = vcmask 240642
        %vm1822 = vmor %vm1821, %vm1820
        %1823 = vst.msk [vmem:[#allocation2 + $0xe] sm:$0xf] %vm1822, %v1818
        %1824 = vst.sshfl [vmem:[#allocation1] sm:$0xff pattern:$0x75643120] %v439
        %s1825 = scalar_lea.vmem [#allocation1], 1
        %v1826 = vld [vmem:[%s1825] ss:$2 sm:$0xff]
        %1827 = vst.sshfl [vmem:[#allocation1 + $0x10] sm:$0xff pattern:$0x75643120] %v443
        %s1828 = scalar_lea.vmem [#allocation1], 17
        %v1829 = vld [vmem:[%s1828] ss:$2 sm:$0xff]
        %1830 = vst.sshfl [vmem:[#allocation1 + $0x20] sm:$0xff pattern:$0x75643120] %v447
        %s1831 = scalar_lea.vmem [#allocation1], 33
        %v1832 = vld [vmem:[%s1831] ss:$2 sm:$0xff]
        %1833 = vst.sshfl [vmem:[#allocation1 + $0x30] sm:$0xff pattern:$0x75643120] %v451
        %s1834 = scalar_lea.vmem [#allocation1], 49
        %v1835 = vld [vmem:[%s1834] ss:$2 sm:$0xff]
        %1836 = vst [vmem:[#allocation1] ss:$2 sm:$0xff] %v1826
        %v1837 = vld.sshfl [vmem:[#allocation1] sm:$0xff pattern:$0x75643120]
        %s1839 = scalar_lea.vmem [#allocation1], 16
        %1840 = vst [vmem:[%s1839] ss:$2 sm:$0xff] %v1829
        %v1841 = vld.sshfl [vmem:[#allocation1 + $0x10] sm:$0xff pattern:$0x75643120]
        %s1843 = scalar_lea.vmem [#allocation1], 32
        %1844 = vst [vmem:[%s1843] ss:$2 sm:$0xff] %v1832
        %v1845 = vld.sshfl [vmem:[#allocation1 + $0x20] sm:$0xff pattern:$0x75643120]
        %s1847 = scalar_lea.vmem [#allocation1], 48
        %1848 = vst [vmem:[%s1847] ss:$2 sm:$0xff] %v1835
        %v1849 = vld.sshfl [vmem:[#allocation1 + $0x30] sm:$0xff pattern:$0x75643120]
        %v1851 = vunpack.c.l.b16 %v1837
        %v1852 = vunpack.c.l.b16 %v1841
        %v1853 = vunpack.c.l.b16 %v1845
        %v1854 = vunpack.c.l.b16 %v1849
        %v1855 = vrot.slane %v1851, 2
        %v1856 = vrot.slane %v1852, 1
        %v1857 = vsel %vm493, %v1856, %v1855
        %v1858 = vsel %vm496, %v1853, %v1857
        %v1859 = vrot.slane %v1854, 7
        %v1860 = vsel %vm499, %v1859, %v1858
        %v1861 = vpack.c.b16 %v1860, %v1860
        %v1862 = vrot.slane %v1861, 2
        %v1865 = vsel %vm460, %v1861, %v1862
        %1867 = vrot.lane.b32.xlu0 %v1865, 30
        %v1868 = vpop.permute.xlu0 %1867
        %vm1870 = vcmask 517360
        %1871 = vst.msk [vmem:[#allocation2 + $0x10] sm:$0x3] %vm1870, %v1868
        %1872 = vst.sshfl [vmem:[#allocation1] sm:$0xff pattern:$0x75643120] %v439
        %s1873 = scalar_lea.vmem [#allocation1], 1
        %v1874 = vld [vmem:[%s1873] ss:$2 sm:$0xff]
        %1875 = vst.sshfl [vmem:[#allocation1 + $0x10] sm:$0xff pattern:$0x75643120] %v443
        %s1876 = scalar_lea.vmem [#allocation1], 17
        %v1877 = vld [vmem:[%s1876] ss:$2 sm:$0xff]
        %1878 = vst.sshfl [vmem:[#allocation1 + $0x20] sm:$0xff pattern:$0x75643120] %v447
        %s1879 = scalar_lea.vmem [#allocation1], 33
        %v1880 = vld [vmem:[%s1879] ss:$2 sm:$0xff]
        %1881 = vst.sshfl [vmem:[#allocation1 + $0x30] sm:$0xff pattern:$0x75643120] %v451
        %s1882 = scalar_lea.vmem [#allocation1], 49
        %v1883 = vld [vmem:[%s1882] ss:$2 sm:$0xff]
        %1884 = vst [vmem:[#allocation1] ss:$2 sm:$0xff] %v1874
        %v1885 = vld.sshfl [vmem:[#allocation1] sm:$0xff pattern:$0x75643120]
        %s1887 = scalar_lea.vmem [#allocation1], 16
        %1888 = vst [vmem:[%s1887] ss:$2 sm:$0xff] %v1877
        %v1889 = vld.sshfl [vmem:[#allocation1 + $0x10] sm:$0xff pattern:$0x75643120]
        %s1891 = scalar_lea.vmem [#allocation1], 32
        %1892 = vst [vmem:[%s1891] ss:$2 sm:$0xff] %v1880
        %v1893 = vld.sshfl [vmem:[#allocation1 + $0x20] sm:$0xff pattern:$0x75643120]
        %s1895 = scalar_lea.vmem [#allocation1], 48
        %1896 = vst [vmem:[%s1895] ss:$2 sm:$0xff] %v1883
        %v1897 = vld.sshfl [vmem:[#allocation1 + $0x30] sm:$0xff pattern:$0x75643120]
        %v1899 = vunpack.c.l.b16 %v1885
        %v1900 = vunpack.c.l.b16 %v1889
        %v1901 = vunpack.c.l.b16 %v1893
        %v1902 = vunpack.c.l.b16 %v1897
        %v1903 = vrot.slane %v1899, 3
        %v1904 = vrot.slane %v1900, 2
        %v1905 = vsel %vm493, %v1904, %v1903
        %v1906 = vrot.slane %v1901, 1
        %v1907 = vsel %vm496, %v1906, %v1905
        %v1908 = vsel %vm499, %v1902, %v1907
        %v1909 = vpack.c.b16 %v1908, %v1908
        %v1910 = vrot.slane %v1909, 2
        %v1913 = vsel %vm460, %v1909, %v1910
        %1915 = vrot.lane.b32.xlu0 %v1913, 64
        %v1916 = vpop.permute.xlu0 %1915
        %vm1918 = vcmask 796160
        %1919 = vst.msk [vmem:[#allocation2 + $0x10] sm:$0x3] %vm1918, %v1916
        %v1920 = vld [vmem:[#allocation2] sm:$0xff]
        %v1921 = vld [vmem:[#allocation2 + $0x8] sm:$0xff]
        %v1922 = vld [vmem:[#allocation2 + $0x10] sm:$0x3]
        %v1923 = vld [vmem:[%s3] sm:$0xf]
        %s1924 = scalar_lea.vmem %s3, 4
        %v1925 = vld [vmem:[%s1924] sm:$0xf]
        %1927 = vst [vmem:[#allocation1] ss:$4 sm:$0xff] %v1920
        %s1929 = scalar_lea.vmem [#allocation1], 32
        %1930 = vst [vmem:[%s1929] ss:$4 sm:$0xff] %v1921
        %v1931 = vld.sshfl [vmem:[#allocation1] sm:$0xff pattern:$0x73625140]
        %v1933 = vld.sshfl [vmem:[#allocation1 + $0x8] sm:$0xff pattern:$0x73625140]
        %v1935 = vld.sshfl [vmem:[#allocation1 + $0x10] sm:$0xff pattern:$0x73625140]
        %v1937 = vld.sshfl [vmem:[#allocation1 + $0x18] sm:$0xff pattern:$0x73625140]
        %v1939 = vld.sshfl [vmem:[#allocation1 + $0x20] sm:$0xff pattern:$0x73625140]
        %v1941 = vld.sshfl [vmem:[#allocation1 + $0x28] sm:$0xff pattern:$0x73625140]
        %v1943 = vld.sshfl [vmem:[#allocation1 + $0x30] sm:$0xff pattern:$0x73625140]
        %v1945 = vld.sshfl [vmem:[#allocation1 + $0x38] sm:$0xff pattern:$0x73625140]
        %1948 = vst [vmem:[#allocation1] ss:$4 sm:$0xff] %v1922
        %v1949 = vld.sshfl [vmem:[#allocation1] sm:$0xff pattern:$0x73625140]
        %1951 = vrot.lane.b32.xlu0 %v1931, 127
        %v1952 = vpop.permute.xlu0 %1951
        %1953 = vrot.lane.b32.xlu0 %v1933, 127
        %v1954 = vpop.permute.xlu0 %1953
        %1955 = vrot.lane.b32.xlu0 %v1935, 127
        %v1956 = vpop.permute.xlu0 %1955
        %1957 = vrot.lane.b32.xlu0 %v1937, 127
        %v1958 = vpop.permute.xlu0 %1957
        %1959 = vrot.lane.b32.xlu0 %v1939, 127
        %v1960 = vpop.permute.xlu0 %1959
        %1961 = vrot.lane.b32.xlu0 %v1941, 127
        %v1962 = vpop.permute.xlu0 %1961
        %1963 = vrot.lane.b32.xlu0 %v1943, 127
        %v1964 = vpop.permute.xlu0 %1963
        %1965 = vrot.lane.b32.xlu0 %v1945, 127
        %v1966 = vpop.permute.xlu0 %1965
        %1967 = vrot.lane.b32.xlu0 %v1949, 127
        %v1968 = vpop.permute.xlu0 %1967
        %vm1969 = vcmask 1039360
        %v1970 = vsel %vm1969, %v1952, %v1954
        %v1971 = vsel %vm1969, %v1954, %v1956
        %v1972 = vsel %vm1969, %v1956, %v1958
        %v1973 = vsel %vm1969, %v1958, %v1960
        %v1974 = vsel %vm1969, %v1960, %v1962
        %v1975 = vsel %vm1969, %v1962, %v1964
        %v1976 = vsel %vm1969, %v1964, %v1966
        %v1977 = vsel %vm1969, %v1966, %v1968
        %vm1978 = vcmask 31744
        %v1980 = vsel %vm1978, %v1925, 0
        %v1983 = vsel %vm460, %v1970, 0
        %v1986 = vsel %vm460, %v1971, 0
        %v1989 = vsel %vm460, %v1972, 0
        %v1992 = vsel %vm460, %v1973, 0
        %v1995 = vsel %vm460, %v1974, 0
        %v1998 = vsel %vm460, %v1975, 0
        %v2001 = vsel %vm460, %v1976, 0
        %v2004 = vsel %vm460, %v1977, 0
        %v2007 = vsel %vm460, %v1968, 0
        %2009 = vmatpush.bf16.msra.mxu0 0
        %2010 = vmatpush.bf16.msra.mxu0 0
        %2011 = vmatpush.bf16.msra.mxu0 0
        %2012 = vmatpush.bf16.msra.mxu0 0
        %2013 = vmatpush.bf16.msra.mxu0 0
        %2014 = vmatpush.bf16.msra.mxu0 0
        %2015 = vmatpush.bf16.msra.mxu0 0
        %2016 = vmatpush.bf16.msra.mxu0 %v1983
        %2017 = vmatmul.bf16.gmra.mxu0 %v1980
        %v2018 = vpop.f32.mrf.mxu0
        %v2019 = vadd.f32 0.0, %v2018
        %v2020 = vpop.f32.mrf.mxu0
        %2021 = vdwg.mxu0
        %2022 = vmatpush.bf16.msra.mxu0 0
        %2023 = vmatpush.bf16.msra.mxu0 0
        %2024 = vmatpush.bf16.msra.mxu0 0
        %2025 = vmatpush.bf16.msra.mxu0 0
        %2026 = vmatpush.bf16.msra.mxu0 0
        %2027 = vmatpush.bf16.msra.mxu0 0
        %2028 = vmatpush.bf16.msra.mxu0 0
        %2029 = vmatpush.bf16.msra.mxu0 %v1986
        %2030 = vmatmul.bf16.gmra.mxu0 %v1980
        %v2031 = vpop.f32.mrf.mxu0
        %v2032 = vadd.f32 0.0, %v2031
        %v2033 = vpop.f32.mrf.mxu0
        %2034 = vdwg.mxu0
        %2035 = vmatpush.bf16.msra.mxu0 0
        %2036 = vmatpush.bf16.msra.mxu0 0
        %2037 = vmatpush.bf16.msra.mxu0 0
        %2038 = vmatpush.bf16.msra.mxu0 0
        %2039 = vmatpush.bf16.msra.mxu0 0
        %2040 = vmatpush.bf16.msra.mxu0 0
        %2041 = vmatpush.bf16.msra.mxu0 0
        %2042 = vmatpush.bf16.msra.mxu0 %v1989
        %2043 = vmatmul.bf16.gmra.mxu0 %v1980
        %v2044 = vpop.f32.mrf.mxu0
        %v2045 = vadd.f32 0.0, %v2044
        %v2046 = vpop.f32.mrf.mxu0
        %2047 = vdwg.mxu0
        %2048 = vmatpush.bf16.msra.mxu0 0
        %2049 = vmatpush.bf16.msra.mxu0 0
        %2050 = vmatpush.bf16.msra.mxu0 0
        %2051 = vmatpush.bf16.msra.mxu0 0
        %2052 = vmatpush.bf16.msra.mxu0 0
        %2053 = vmatpush.bf16.msra.mxu0 0
        %2054 = vmatpush.bf16.msra.mxu0 0
        %2055 = vmatpush.bf16.msra.mxu0 %v1992
        %2056 = vmatmul.bf16.gmra.mxu0 %v1980
        %v2057 = vpop.f32.mrf.mxu0
        %v2058 = vadd.f32 0.0, %v2057
        %v2059 = vpop.f32.mrf.mxu0
        %2060 = vdwg.mxu0
        %2061 = vmatpush.bf16.msra.mxu0 0
        %2062 = vmatpush.bf16.msra.mxu0 0
        %2063 = vmatpush.bf16.msra.mxu0 0
        %2064 = vmatpush.bf16.msra.mxu0 0
        %2065 = vmatpush.bf16.msra.mxu0 0
        %2066 = vmatpush.bf16.msra.mxu0 0
        %2067 = vmatpush.bf16.msra.mxu0 0
        %2068 = vmatpush.bf16.msra.mxu0 %v1995
        %2069 = vmatmul.bf16.gmra.mxu0 %v1980
        %v2070 = vpop.f32.mrf.mxu0
        %v2071 = vadd.f32 0.0, %v2070
        %v2072 = vpop.f32.mrf.mxu0
        %2073 = vdwg.mxu0
        %2074 = vmatpush.bf16.msra.mxu0 0
        %2075 = vmatpush.bf16.msra.mxu0 0
        %2076 = vmatpush.bf16.msra.mxu0 0
        %2077 = vmatpush.bf16.msra.mxu0 0
        %2078 = vmatpush.bf16.msra.mxu0 0
        %2079 = vmatpush.bf16.msra.mxu0 0
        %2080 = vmatpush.bf16.msra.mxu0 0
        %2081 = vmatpush.bf16.msra.mxu0 %v1998
        %2082 = vmatmul.bf16.gmra.mxu0 %v1980
        %v2083 = vpop.f32.mrf.mxu0
        %v2084 = vadd.f32 0.0, %v2083
        %v2085 = vpop.f32.mrf.mxu0
        %2086 = vdwg.mxu0
        %2087 = vmatpush.bf16.msra.mxu0 0
        %2088 = vmatpush.bf16.msra.mxu0 0
        %2089 = vmatpush.bf16.msra.mxu0 0
        %2090 = vmatpush.bf16.msra.mxu0 0
        %2091 = vmatpush.bf16.msra.mxu0 0
        %2092 = vmatpush.bf16.msra.mxu0 0
        %2093 = vmatpush.bf16.msra.mxu0 0
        %2094 = vmatpush.bf16.msra.mxu0 %v2001
        %2095 = vmatmul.bf16.gmra.mxu0 %v1980
        %v2096 = vpop.f32.mrf.mxu0
        %v2097 = vadd.f32 0.0, %v2096
        %v2098 = vpop.f32.mrf.mxu0
        %2099 = vdwg.mxu0
        %2100 = vmatpush.bf16.msra.mxu0 0
        %2101 = vmatpush.bf16.msra.mxu0 0
        %2102 = vmatpush.bf16.msra.mxu0 0
        %2103 = vmatpush.bf16.msra.mxu0 0
        %2104 = vmatpush.bf16.msra.mxu0 0
        %2105 = vmatpush.bf16.msra.mxu0 0
        %2106 = vmatpush.bf16.msra.mxu0 0
        %2107 = vmatpush.bf16.msra.mxu0 %v2004
        %2108 = vmatmul.bf16.gmra.mxu0 %v1980
        %v2109 = vpop.f32.mrf.mxu0
        %v2110 = vadd.f32 0.0, %v2109
        %v2111 = vpop.f32.mrf.mxu0
        %2112 = vdwg.mxu0
        %2113 = vmatpush.bf16.msra.mxu0 0
        %2114 = vmatpush.bf16.msra.mxu0 0
        %2115 = vmatpush.bf16.msra.mxu0 0
        %2116 = vmatpush.bf16.msra.mxu0 0
        %2117 = vmatpush.bf16.msra.mxu0 0
        %2118 = vmatpush.bf16.msra.mxu0 0
        %2119 = vmatpush.bf16.msra.mxu0 0
        %2120 = vmatpush.bf16.msra.mxu0 %v2007
        %2121 = vmatmul.bf16.gmra.mxu0 %v1980
        %v2122 = vpop.f32.mrf.mxu0
        %v2123 = vadd.f32 0.0, %v2122
        %v2124 = vpop.f32.mrf.mxu0
        %2125 = vdwg.mxu0
        %2126 = vst [vmem:[#allocation1] ss:$4 sm:$0xff] %v1920
        %s2127 = scalar_lea.vmem [#allocation1], 32
        %2128 = vst [vmem:[%s2127] ss:$4 sm:$0xff] %v1921
        %v2129 = vld.sshfl [vmem:[#allocation1] sm:$0xff pattern:$0x73625140]
        %v2130 = vld.sshfl [vmem:[#allocation1 + $0x8] sm:$0xff pattern:$0x73625140]
        %v2131 = vld.sshfl [vmem:[#allocation1 + $0x10] sm:$0xff pattern:$0x73625140]
        %v2132 = vld.sshfl [vmem:[#allocation1 + $0x18] sm:$0xff pattern:$0x73625140]
        %v2133 = vld.sshfl [vmem:[#allocation1 + $0x20] sm:$0xff pattern:$0x73625140]
        %v2134 = vld.sshfl [vmem:[#allocation1 + $0x28] sm:$0xff pattern:$0x73625140]
        %v2135 = vld.sshfl [vmem:[#allocation1 + $0x30] sm:$0xff pattern:$0x73625140]
        %v2136 = vld.sshfl [vmem:[#allocation1 + $0x38] sm:$0xff pattern:$0x73625140]
        %2137 = vst [vmem:[#allocation1] ss:$4 sm:$0xff] %v1922
        %v2138 = vld.sshfl [vmem:[#allocation1] sm:$0xff pattern:$0x73625140]
        %v2140 = vsel %vm1978, %v1923, 0
        %v2142 = vsel %vm460, %v2129, 0
        %v2144 = vsel %vm460, %v2130, 0
        %v2146 = vsel %vm460, %v2131, 0
        %v2148 = vsel %vm460, %v2132, 0
        %v2150 = vsel %vm460, %v2133, 0
        %v2152 = vsel %vm460, %v2134, 0
        %v2154 = vsel %vm460, %v2135, 0
        %v2156 = vsel %vm460, %v2136, 0
        %v2158 = vsel %vm460, %v2138, 0
        %2160 = vmatpush.bf16.msra.mxu0 0
        %2161 = vmatpush.bf16.msra.mxu0 0
        %2162 = vmatpush.bf16.msra.mxu0 0
        %2163 = vmatpush.bf16.msra.mxu0 0
        %2164 = vmatpush.bf16.msra.mxu0 0
        %2165 = vmatpush.bf16.msra.mxu0 0
        %2166 = vmatpush.bf16.msra.mxu0 0
        %2167 = vmatpush.bf16.msra.mxu0 %v2142
        %2168 = vmatmul.bf16.gmra.mxu0 %v2140
        %v2169 = vpop.f32.mrf.mxu0
        %v2170 = vadd.f32 %v2019, %v2169
        %v2171 = vpop.f32.mrf.mxu0
        %2172 = vdwg.mxu0
        %2173 = vmatpush.bf16.msra.mxu0 0
        %2174 = vmatpush.bf16.msra.mxu0 0
        %2175 = vmatpush.bf16.msra.mxu0 0
        %2176 = vmatpush.bf16.msra.mxu0 0
        %2177 = vmatpush.bf16.msra.mxu0 0
        %2178 = vmatpush.bf16.msra.mxu0 0
        %2179 = vmatpush.bf16.msra.mxu0 0
        %2180 = vmatpush.bf16.msra.mxu0 %v2144
        %2181 = vmatmul.bf16.gmra.mxu0 %v2140
        %v2182 = vpop.f32.mrf.mxu0
        %v2183 = vadd.f32 %v2032, %v2182
        %v2184 = vpop.f32.mrf.mxu0
        %2185 = vdwg.mxu0
        %2186 = vmatpush.bf16.msra.mxu0 0
        %2187 = vmatpush.bf16.msra.mxu0 0
        %2188 = vmatpush.bf16.msra.mxu0 0
        %2189 = vmatpush.bf16.msra.mxu0 0
        %2190 = vmatpush.bf16.msra.mxu0 0
        %2191 = vmatpush.bf16.msra.mxu0 0
        %2192 = vmatpush.bf16.msra.mxu0 0
        %2193 = vmatpush.bf16.msra.mxu0 %v2146
        %2194 = vmatmul.bf16.gmra.mxu0 %v2140
        %v2195 = vpop.f32.mrf.mxu0
        %v2196 = vadd.f32 %v2045, %v2195
        %v2197 = vpop.f32.mrf.mxu0
        %2198 = vdwg.mxu0
        %2199 = vmatpush.bf16.msra.mxu0 0
        %2200 = vmatpush.bf16.msra.mxu0 0
        %2201 = vmatpush.bf16.msra.mxu0 0
        %2202 = vmatpush.bf16.msra.mxu0 0
        %2203 = vmatpush.bf16.msra.mxu0 0
        %2204 = vmatpush.bf16.msra.mxu0 0
        %2205 = vmatpush.bf16.msra.mxu0 0
        %2206 = vmatpush.bf16.msra.mxu0 %v2148
        %2207 = vmatmul.bf16.gmra.mxu0 %v2140
        %v2208 = vpop.f32.mrf.mxu0
        %v2209 = vadd.f32 %v2058, %v2208
        %v2210 = vpop.f32.mrf.mxu0
        %2211 = vdwg.mxu0
        %2212 = vmatpush.bf16.msra.mxu0 0
        %2213 = vmatpush.bf16.msra.mxu0 0
        %2214 = vmatpush.bf16.msra.mxu0 0
        %2215 = vmatpush.bf16.msra.mxu0 0
        %2216 = vmatpush.bf16.msra.mxu0 0
        %2217 = vmatpush.bf16.msra.mxu0 0
        %2218 = vmatpush.bf16.msra.mxu0 0
        %2219 = vmatpush.bf16.msra.mxu0 %v2150
        %2220 = vmatmul.bf16.gmra.mxu0 %v2140
        %v2221 = vpop.f32.mrf.mxu0
        %v2222 = vadd.f32 %v2071, %v2221
        %v2223 = vpop.f32.mrf.mxu0
        %2224 = vdwg.mxu0
        %2225 = vmatpush.bf16.msra.mxu0 0
        %2226 = vmatpush.bf16.msra.mxu0 0
        %2227 = vmatpush.bf16.msra.mxu0 0
        %2228 = vmatpush.bf16.msra.mxu0 0
        %2229 = vmatpush.bf16.msra.mxu0 0
        %2230 = vmatpush.bf16.msra.mxu0 0
        %2231 = vmatpush.bf16.msra.mxu0 0
        %2232 = vmatpush.bf16.msra.mxu0 %v2152
        %2233 = vmatmul.bf16.gmra.mxu0 %v2140
        %v2234 = vpop.f32.mrf.mxu0
        %v2235 = vadd.f32 %v2084, %v2234
        %v2236 = vpop.f32.mrf.mxu0
        %2237 = vdwg.mxu0
        %2238 = vmatpush.bf16.msra.mxu0 0
        %2239 = vmatpush.bf16.msra.mxu0 0
        %2240 = vmatpush.bf16.msra.mxu0 0
        %2241 = vmatpush.bf16.msra.mxu0 0
        %2242 = vmatpush.bf16.msra.mxu0 0
        %2243 = vmatpush.bf16.msra.mxu0 0
        %2244 = vmatpush.bf16.msra.mxu0 0
        %2245 = vmatpush.bf16.msra.mxu0 %v2154
        %2246 = vmatmul.bf16.gmra.mxu0 %v2140
        %v2247 = vpop.f32.mrf.mxu0
        %v2248 = vadd.f32 %v2097, %v2247
        %v2249 = vpop.f32.mrf.mxu0
        %2250 = vdwg.mxu0
        %2251 = vmatpush.bf16.msra.mxu0 0
        %2252 = vmatpush.bf16.msra.mxu0 0
        %2253 = vmatpush.bf16.msra.mxu0 0
        %2254 = vmatpush.bf16.msra.mxu0 0
        %2255 = vmatpush.bf16.msra.mxu0 0
        %2256 = vmatpush.bf16.msra.mxu0 0
        %2257 = vmatpush.bf16.msra.mxu0 0
        %2258 = vmatpush.bf16.msra.mxu0 %v2156
        %2259 = vmatmul.bf16.gmra.mxu0 %v2140
        %v2260 = vpop.f32.mrf.mxu0
        %v2261 = vadd.f32 %v2110, %v2260
        %v2262 = vpop.f32.mrf.mxu0
        %2263 = vdwg.mxu0
        %2264 = vmatpush.bf16.msra.mxu0 0
        %2265 = vmatpush.bf16.msra.mxu0 0
        %2266 = vmatpush.bf16.msra.mxu0 0
        %2267 = vmatpush.bf16.msra.mxu0 0
        %2268 = vmatpush.bf16.msra.mxu0 0
        %2269 = vmatpush.bf16.msra.mxu0 0
        %2270 = vmatpush.bf16.msra.mxu0 0
        %2271 = vmatpush.bf16.msra.mxu0 %v2158
        %2272 = vmatmul.bf16.gmra.mxu0 %v2140
        %v2273 = vpop.f32.mrf.mxu0
        %v2274 = vadd.f32 %v2123, %v2273
        %v2275 = vpop.f32.mrf.mxu0
        %2276 = vdwg.mxu0
        %v2277 = vld [vmem:[#allocation2] sm:$0xff]
        %v2278 = vld [vmem:[#allocation2 + $0x8] sm:$0xff]
        %v2279 = vld [vmem:[#allocation2 + $0x10] sm:$0x3]
        %s2280 = scalar_lea.vmem %s3, 8
        %v2281 = vld [vmem:[%s2280] sm:$0xf]
        %2283 = vst [vmem:[#allocation1] ss:$4 sm:$0xff] %v2277
        %s2285 = scalar_lea.vmem [#allocation1], 32
        %2286 = vst [vmem:[%s2285] ss:$4 sm:$0xff] %v2278
        %v2287 = vld.sshfl [vmem:[#allocation1] sm:$0xff pattern:$0x73625140]
        %v2289 = vld.sshfl [vmem:[#allocation1 + $0x8] sm:$0xff pattern:$0x73625140]
        %v2291 = vld.sshfl [vmem:[#allocation1 + $0x10] sm:$0xff pattern:$0x73625140]
        %v2293 = vld.sshfl [vmem:[#allocation1 + $0x18] sm:$0xff pattern:$0x73625140]
        %v2295 = vld.sshfl [vmem:[#allocation1 + $0x20] sm:$0xff pattern:$0x73625140]
        %v2297 = vld.sshfl [vmem:[#allocation1 + $0x28] sm:$0xff pattern:$0x73625140]
        %v2299 = vld.sshfl [vmem:[#allocation1 + $0x30] sm:$0xff pattern:$0x73625140]
        %v2301 = vld.sshfl [vmem:[#allocation1 + $0x38] sm:$0xff pattern:$0x73625140]
        %2304 = vst [vmem:[#allocation1] ss:$4 sm:$0xff] %v2279
        %v2305 = vld.sshfl [vmem:[#allocation1] sm:$0xff pattern:$0x73625140]
        %2307 = vrot.lane.b32.xlu0 %v2287, 126
        %v2308 = vpop.permute.xlu0 %2307
        %2309 = vrot.lane.b32.xlu0 %v2289, 126
        %v2310 = vpop.permute.xlu0 %2309
        %2311 = vrot.lane.b32.xlu0 %v2291, 126
        %v2312 = vpop.permute.xlu0 %2311
        %2313 = vrot.lane.b32.xlu0 %v2293, 126
        %v2314 = vpop.permute.xlu0 %2313
        %2315 = vrot.lane.b32.xlu0 %v2295, 126
        %v2316 = vpop.permute.xlu0 %2315
        %2317 = vrot.lane.b32.xlu0 %v2297, 126
        %v2318 = vpop.permute.xlu0 %2317
        %2319 = vrot.lane.b32.xlu0 %v2299, 126
        %v2320 = vpop.permute.xlu0 %2319
        %2321 = vrot.lane.b32.xlu0 %v2301, 126
        %v2322 = vpop.permute.xlu0 %2321
        %2323 = vrot.lane.b32.xlu0 %v2305, 126
        %v2324 = vpop.permute.xlu0 %2323
        %v2325 = vsel %vm1133, %v2308, %v2310
        %v2326 = vsel %vm1133, %v2310, %v2312
        %v2327 = vsel %vm1133, %v2312, %v2314
        %v2328 = vsel %vm1133, %v2314, %v2316
        %v2329 = vsel %vm1133, %v2316, %v2318
        %v2330 = vsel %vm1133, %v2318, %v2320
        %v2331 = vsel %vm1133, %v2320, %v2322
        %v2332 = vsel %vm1133, %v2322, %v2324
        %v2334 = vsel %vm1978, %v2281, 0
        %v2337 = vsel %vm460, %v2325, 0
        %v2340 = vsel %vm460, %v2326, 0
        %v2343 = vsel %vm460, %v2327, 0
        %v2346 = vsel %vm460, %v2328, 0
        %v2349 = vsel %vm460, %v2329, 0
        %v2352 = vsel %vm460, %v2330, 0
        %v2355 = vsel %vm460, %v2331, 0
        %v2358 = vsel %vm460, %v2332, 0
        %v2361 = vsel %vm460, %v2324, 0
        %2363 = vmatpush.bf16.msra.mxu0 0
        %2364 = vmatpush.bf16.msra.mxu0 0
        %2365 = vmatpush.bf16.msra.mxu0 0
        %2366 = vmatpush.bf16.msra.mxu0 0
        %2367 = vmatpush.bf16.msra.mxu0 0
        %2368 = vmatpush.bf16.msra.mxu0 0
        %2369 = vmatpush.bf16.msra.mxu0 0
        %2370 = vmatpush.bf16.msra.mxu0 %v2337
        %2371 = vmatmul.bf16.gmra.mxu0 %v2334
        %v2372 = vpop.f32.mrf.mxu0
        %v2373 = vadd.f32 0.0, %v2372
        %v2374 = vpop.f32.mrf.mxu0
        %2375 = vdwg.mxu0
        %2376 = vmatpush.bf16.msra.mxu0 0
        %2377 = vmatpush.bf16.msra.mxu0 0
        %2378 = vmatpush.bf16.msra.mxu0 0
        %2379 = vmatpush.bf16.msra.mxu0 0
        %2380 = vmatpush.bf16.msra.mxu0 0
        %2381 = vmatpush.bf16.msra.mxu0 0
        %2382 = vmatpush.bf16.msra.mxu0 0
        %2383 = vmatpush.bf16.msra.mxu0 %v2340
        %2384 = vmatmul.bf16.gmra.mxu0 %v2334
        %v2385 = vpop.f32.mrf.mxu0
        %v2386 = vadd.f32 0.0, %v2385
        %v2387 = vpop.f32.mrf.mxu0
        %2388 = vdwg.mxu0
        %2389 = vmatpush.bf16.msra.mxu0 0
        %2390 = vmatpush.bf16.msra.mxu0 0
        %2391 = vmatpush.bf16.msra.mxu0 0
        %2392 = vmatpush.bf16.msra.mxu0 0
        %2393 = vmatpush.bf16.msra.mxu0 0
        %2394 = vmatpush.bf16.msra.mxu0 0
        %2395 = vmatpush.bf16.msra.mxu0 0
        %2396 = vmatpush.bf16.msra.mxu0 %v2343
        %2397 = vmatmul.bf16.gmra.mxu0 %v2334
        %v2398 = vpop.f32.mrf.mxu0
        %v2399 = vadd.f32 0.0, %v2398
        %v2400 = vpop.f32.mrf.mxu0
        %2401 = vdwg.mxu0
        %2402 = vmatpush.bf16.msra.mxu0 0
        %2403 = vmatpush.bf16.msra.mxu0 0
        %2404 = vmatpush.bf16.msra.mxu0 0
        %2405 = vmatpush.bf16.msra.mxu0 0
        %2406 = vmatpush.bf16.msra.mxu0 0
        %2407 = vmatpush.bf16.msra.mxu0 0
        %2408 = vmatpush.bf16.msra.mxu0 0
        %2409 = vmatpush.bf16.msra.mxu0 %v2346
        %2410 = vmatmul.bf16.gmra.mxu0 %v2334
        %v2411 = vpop.f32.mrf.mxu0
        %v2412 = vadd.f32 0.0, %v2411
        %v2413 = vpop.f32.mrf.mxu0
        %2414 = vdwg.mxu0
        %2415 = vmatpush.bf16.msra.mxu0 0
        %2416 = vmatpush.bf16.msra.mxu0 0
        %2417 = vmatpush.bf16.msra.mxu0 0
        %2418 = vmatpush.bf16.msra.mxu0 0
        %2419 = vmatpush.bf16.msra.mxu0 0
        %2420 = vmatpush.bf16.msra.mxu0 0
        %2421 = vmatpush.bf16.msra.mxu0 0
        %2422 = vmatpush.bf16.msra.mxu0 %v2349
        %2423 = vmatmul.bf16.gmra.mxu0 %v2334
        %v2424 = vpop.f32.mrf.mxu0
        %v2425 = vadd.f32 0.0, %v2424
        %v2426 = vpop.f32.mrf.mxu0
        %2427 = vdwg.mxu0
        %2428 = vmatpush.bf16.msra.mxu0 0
        %2429 = vmatpush.bf16.msra.mxu0 0
        %2430 = vmatpush.bf16.msra.mxu0 0
        %2431 = vmatpush.bf16.msra.mxu0 0
        %2432 = vmatpush.bf16.msra.mxu0 0
        %2433 = vmatpush.bf16.msra.mxu0 0
        %2434 = vmatpush.bf16.msra.mxu0 0
        %2435 = vmatpush.bf16.msra.mxu0 %v2352
        %2436 = vmatmul.bf16.gmra.mxu0 %v2334
        %v2437 = vpop.f32.mrf.mxu0
        %v2438 = vadd.f32 0.0, %v2437
        %v2439 = vpop.f32.mrf.mxu0
        %2440 = vdwg.mxu0
        %2441 = vmatpush.bf16.msra.mxu0 0
        %2442 = vmatpush.bf16.msra.mxu0 0
        %2443 = vmatpush.bf16.msra.mxu0 0
        %2444 = vmatpush.bf16.msra.mxu0 0
        %2445 = vmatpush.bf16.msra.mxu0 0
        %2446 = vmatpush.bf16.msra.mxu0 0
        %2447 = vmatpush.bf16.msra.mxu0 0
        %2448 = vmatpush.bf16.msra.mxu0 %v2355
        %2449 = vmatmul.bf16.gmra.mxu0 %v2334
        %v2450 = vpop.f32.mrf.mxu0
        %v2451 = vadd.f32 0.0, %v2450
        %v2452 = vpop.f32.mrf.mxu0
        %2453 = vdwg.mxu0
        %2454 = vmatpush.bf16.msra.mxu0 0
        %2455 = vmatpush.bf16.msra.mxu0 0
        %2456 = vmatpush.bf16.msra.mxu0 0
        %2457 = vmatpush.bf16.msra.mxu0 0
        %2458 = vmatpush.bf16.msra.mxu0 0
        %2459 = vmatpush.bf16.msra.mxu0 0
        %2460 = vmatpush.bf16.msra.mxu0 0
        %2461 = vmatpush.bf16.msra.mxu0 %v2358
        %2462 = vmatmul.bf16.gmra.mxu0 %v2334
        %v2463 = vpop.f32.mrf.mxu0
        %v2464 = vadd.f32 0.0, %v2463
        %v2465 = vpop.f32.mrf.mxu0
        %2466 = vdwg.mxu0
        %2467 = vmatpush.bf16.msra.mxu0 0
        %2468 = vmatpush.bf16.msra.mxu0 0
        %2469 = vmatpush.bf16.msra.mxu0 0
        %2470 = vmatpush.bf16.msra.mxu0 0
        %2471 = vmatpush.bf16.msra.mxu0 0
        %2472 = vmatpush.bf16.msra.mxu0 0
        %2473 = vmatpush.bf16.msra.mxu0 0
        %2474 = vmatpush.bf16.msra.mxu0 %v2361
        %2475 = vmatmul.bf16.gmra.mxu0 %v2334
        %v2476 = vpop.f32.mrf.mxu0
        %v2477 = vadd.f32 0.0, %v2476
        %v2478 = vpop.f32.mrf.mxu0
        %2479 = vdwg.mxu0
        %v2480 = vadd.f32 %v2170, %v2373
        %v2481 = vadd.f32 %v2183, %v2386
        %v2482 = vadd.f32 %v2196, %v2399
        %v2483 = vadd.f32 %v2209, %v2412
        %v2484 = vadd.f32 %v2222, %v2425
        %v2485 = vadd.f32 %v2235, %v2438
        %v2486 = vadd.f32 %v2248, %v2451
        %v2487 = vadd.f32 %v2261, %v2464
        %v2488 = vadd.f32 %v2274, %v2477
        %v2489 = vld [vmem:[#allocation2] sm:$0xff]
        %v2490 = vld [vmem:[#allocation2 + $0x8] sm:$0xff]
        %v2491 = vld [vmem:[#allocation2 + $0x10] sm:$0x3]
        %s2492 = scalar_lea.vmem %s3, 12
        %v2493 = vld [vmem:[%s2492] sm:$0xf]
        %2495 = vst [vmem:[#allocation1] ss:$4 sm:$0xff] %v2489
        %s2497 = scalar_lea.vmem [#allocation1], 32
        %2498 = vst [vmem:[%s2497] ss:$4 sm:$0xff] %v2490
        %v2499 = vld.sshfl [vmem:[#allocation1] sm:$0xff pattern:$0x73625140]
        %v2501 = vld.sshfl [vmem:[#allocation1 + $0x8] sm:$0xff pattern:$0x73625140]
        %v2503 = vld.sshfl [vmem:[#allocation1 + $0x10] sm:$0xff pattern:$0x73625140]
        %v2505 = vld.sshfl [vmem:[#allocation1 + $0x18] sm:$0xff pattern:$0x73625140]
        %v2507 = vld.sshfl [vmem:[#allocation1 + $0x20] sm:$0xff pattern:$0x73625140]
        %v2509 = vld.sshfl [vmem:[#allocation1 + $0x28] sm:$0xff pattern:$0x73625140]
        %v2511 = vld.sshfl [vmem:[#allocation1 + $0x30] sm:$0xff pattern:$0x73625140]
        %v2513 = vld.sshfl [vmem:[#allocation1 + $0x38] sm:$0xff pattern:$0x73625140]
        %2516 = vst [vmem:[#allocation1] ss:$4 sm:$0xff] %v2491
        %v2517 = vld.sshfl [vmem:[#allocation1] sm:$0xff pattern:$0x73625140]
        %2519 = vrot.lane.b32.xlu0 %v2499, 94
        %v2520 = vpop.permute.xlu0 %2519
        %2521 = vrot.lane.b32.xlu0 %v2501, 94
        %v2522 = vpop.permute.xlu0 %2521
        %2523 = vrot.lane.b32.xlu0 %v2503, 94
        %v2524 = vpop.permute.xlu0 %2523
        %2525 = vrot.lane.b32.xlu0 %v2505, 94
        %v2526 = vpop.permute.xlu0 %2525
        %2527 = vrot.lane.b32.xlu0 %v2507, 94
        %v2528 = vpop.permute.xlu0 %2527
        %2529 = vrot.lane.b32.xlu0 %v2509, 94
        %v2530 = vpop.permute.xlu0 %2529
        %2531 = vrot.lane.b32.xlu0 %v2511, 94
        %v2532 = vpop.permute.xlu0 %2531
        %2533 = vrot.lane.b32.xlu0 %v2513, 94
        %v2534 = vpop.permute.xlu0 %2533
        %2535 = vrot.lane.b32.xlu0 %v2517, 94
        %v2536 = vpop.permute.xlu0 %2535
        %vm2537 = vcmask 769024
        %v2538 = vsel %vm2537, %v2520, %v2522
        %v2539 = vsel %vm2537, %v2522, %v2524
        %v2540 = vsel %vm2537, %v2524, %v2526
        %v2541 = vsel %vm2537, %v2526, %v2528
        %v2542 = vsel %vm2537, %v2528, %v2530
        %v2543 = vsel %vm2537, %v2530, %v2532
        %v2544 = vsel %vm2537, %v2532, %v2534
        %v2545 = vsel %vm2537, %v2534, %v2536
        %v2547 = vsel %vm1978, %v2493, 0
        %v2550 = vsel %vm460, %v2538, 0
        %v2553 = vsel %vm460, %v2539, 0
        %v2556 = vsel %vm460, %v2540, 0
        %v2559 = vsel %vm460, %v2541, 0
        %v2562 = vsel %vm460, %v2542, 0
        %v2565 = vsel %vm460, %v2543, 0
        %v2568 = vsel %vm460, %v2544, 0
        %v2571 = vsel %vm460, %v2545, 0
        %v2574 = vsel %vm460, %v2536, 0
        %2576 = vmatpush.bf16.msra.mxu0 0
        %2577 = vmatpush.bf16.msra.mxu0 0
        %2578 = vmatpush.bf16.msra.mxu0 0
        %2579 = vmatpush.bf16.msra.mxu0 0
        %2580 = vmatpush.bf16.msra.mxu0 0
        %2581 = vmatpush.bf16.msra.mxu0 0
        %2582 = vmatpush.bf16.msra.mxu0 0
        %2583 = vmatpush.bf16.msra.mxu0 %v2550
        %2584 = vmatmul.bf16.gmra.mxu0 %v2547
        %v2585 = vpop.f32.mrf.mxu0
        %v2586 = vadd.f32 0.0, %v2585
        %v2587 = vpop.f32.mrf.mxu0
        %2588 = vdwg.mxu0
        %2589 = vmatpush.bf16.msra.mxu0 0
        %2590 = vmatpush.bf16.msra.mxu0 0
        %2591 = vmatpush.bf16.msra.mxu0 0
        %2592 = vmatpush.bf16.msra.mxu0 0
        %2593 = vmatpush.bf16.msra.mxu0 0
        %2594 = vmatpush.bf16.msra.mxu0 0
        %2595 = vmatpush.bf16.msra.mxu0 0
        %2596 = vmatpush.bf16.msra.mxu0 %v2553
        %2597 = vmatmul.bf16.gmra.mxu0 %v2547
        %v2598 = vpop.f32.mrf.mxu0
        %v2599 = vadd.f32 0.0, %v2598
        %v2600 = vpop.f32.mrf.mxu0
        %2601 = vdwg.mxu0
        %2602 = vmatpush.bf16.msra.mxu0 0
        %2603 = vmatpush.bf16.msra.mxu0 0
        %2604 = vmatpush.bf16.msra.mxu0 0
        %2605 = vmatpush.bf16.msra.mxu0 0
        %2606 = vmatpush.bf16.msra.mxu0 0
        %2607 = vmatpush.bf16.msra.mxu0 0
        %2608 = vmatpush.bf16.msra.mxu0 0
        %2609 = vmatpush.bf16.msra.mxu0 %v2556
        %2610 = vmatmul.bf16.gmra.mxu0 %v2547
        %v2611 = vpop.f32.mrf.mxu0
        %v2612 = vadd.f32 0.0, %v2611
        %v2613 = vpop.f32.mrf.mxu0
        %2614 = vdwg.mxu0
        %2615 = vmatpush.bf16.msra.mxu0 0
        %2616 = vmatpush.bf16.msra.mxu0 0
        %2617 = vmatpush.bf16.msra.mxu0 0
        %2618 = vmatpush.bf16.msra.mxu0 0
        %2619 = vmatpush.bf16.msra.mxu0 0
        %2620 = vmatpush.bf16.msra.mxu0 0
        %2621 = vmatpush.bf16.msra.mxu0 0
        %2622 = vmatpush.bf16.msra.mxu0 %v2559
        %2623 = vmatmul.bf16.gmra.mxu0 %v2547
        %v2624 = vpop.f32.mrf.mxu0
        %v2625 = vadd.f32 0.0, %v2624
        %v2626 = vpop.f32.mrf.mxu0
        %2627 = vdwg.mxu0
        %2628 = vmatpush.bf16.msra.mxu0 0
        %2629 = vmatpush.bf16.msra.mxu0 0
        %2630 = vmatpush.bf16.msra.mxu0 0
        %2631 = vmatpush.bf16.msra.mxu0 0
        %2632 = vmatpush.bf16.msra.mxu0 0
        %2633 = vmatpush.bf16.msra.mxu0 0
        %2634 = vmatpush.bf16.msra.mxu0 0
        %2635 = vmatpush.bf16.msra.mxu0 %v2562
        %2636 = vmatmul.bf16.gmra.mxu0 %v2547
        %v2637 = vpop.f32.mrf.mxu0
        %v2638 = vadd.f32 0.0, %v2637
        %v2639 = vpop.f32.mrf.mxu0
        %2640 = vdwg.mxu0
        %2641 = vmatpush.bf16.msra.mxu0 0
        %2642 = vmatpush.bf16.msra.mxu0 0
        %2643 = vmatpush.bf16.msra.mxu0 0
        %2644 = vmatpush.bf16.msra.mxu0 0
        %2645 = vmatpush.bf16.msra.mxu0 0
        %2646 = vmatpush.bf16.msra.mxu0 0
        %2647 = vmatpush.bf16.msra.mxu0 0
        %2648 = vmatpush.bf16.msra.mxu0 %v2565
        %2649 = vmatmul.bf16.gmra.mxu0 %v2547
        %v2650 = vpop.f32.mrf.mxu0
        %v2651 = vadd.f32 0.0, %v2650
        %v2652 = vpop.f32.mrf.mxu0
        %2653 = vdwg.mxu0
        %2654 = vmatpush.bf16.msra.mxu0 0
        %2655 = vmatpush.bf16.msra.mxu0 0
        %2656 = vmatpush.bf16.msra.mxu0 0
        %2657 = vmatpush.bf16.msra.mxu0 0
        %2658 = vmatpush.bf16.msra.mxu0 0
        %2659 = vmatpush.bf16.msra.mxu0 0
        %2660 = vmatpush.bf16.msra.mxu0 0
        %2661 = vmatpush.bf16.msra.mxu0 %v2568
        %2662 = vmatmul.bf16.gmra.mxu0 %v2547
        %v2663 = vpop.f32.mrf.mxu0
        %v2664 = vadd.f32 0.0, %v2663
        %v2665 = vpop.f32.mrf.mxu0
        %2666 = vdwg.mxu0
        %2667 = vmatpush.bf16.msra.mxu0 0
        %2668 = vmatpush.bf16.msra.mxu0 0
        %2669 = vmatpush.bf16.msra.mxu0 0
        %2670 = vmatpush.bf16.msra.mxu0 0
        %2671 = vmatpush.bf16.msra.mxu0 0
        %2672 = vmatpush.bf16.msra.mxu0 0
        %2673 = vmatpush.bf16.msra.mxu0 0
        %2674 = vmatpush.bf16.msra.mxu0 %v2571
        %2675 = vmatmul.bf16.gmra.mxu0 %v2547
        %v2676 = vpop.f32.mrf.mxu0
        %v2677 = vadd.f32 0.0, %v2676
        %v2678 = vpop.f32.mrf.mxu0
        %2679 = vdwg.mxu0
        %2680 = vmatpush.bf16.msra.mxu0 0
        %2681 = vmatpush.bf16.msra.mxu0 0
        %2682 = vmatpush.bf16.msra.mxu0 0
        %2683 = vmatpush.bf16.msra.mxu0 0
        %2684 = vmatpush.bf16.msra.mxu0 0
        %2685 = vmatpush.bf16.msra.mxu0 0
        %2686 = vmatpush.bf16.msra.mxu0 0
        %2687 = vmatpush.bf16.msra.mxu0 %v2574
        %2688 = vmatmul.bf16.gmra.mxu0 %v2547
        %v2689 = vpop.f32.mrf.mxu0
        %v2690 = vadd.f32 0.0, %v2689
        %v2691 = vpop.f32.mrf.mxu0
        %2692 = vdwg.mxu0
        %v2693 = vadd.f32 %v2480, %v2586
        %v2694 = vadd.f32 %v2481, %v2599
        %v2695 = vadd.f32 %v2482, %v2612
        %v2696 = vadd.f32 %v2483, %v2625
        %v2697 = vadd.f32 %v2484, %v2638
        %v2698 = vadd.f32 %v2485, %v2651
        %v2699 = vadd.f32 %v2486, %v2664
        %v2700 = vadd.f32 %v2487, %v2677
        %v2701 = vadd.f32 %v2488, %v2690
        %v2702 = vld [vmem:[#allocation2] sm:$0xff]
        %v2703 = vld [vmem:[#allocation2 + $0x8] sm:$0xff]
        %v2704 = vld [vmem:[#allocation2 + $0x10] sm:$0x3]
        %s2705 = scalar_lea.vmem %s3, 16
        %v2706 = vld [vmem:[%s2705] sm:$0xf]
        %2708 = vst [vmem:[#allocation1] ss:$4 sm:$0xff] %v2702
        %s2710 = scalar_lea.vmem [#allocation1], 32
        %2711 = vst [vmem:[%s2710] ss:$4 sm:$0xff] %v2703
        %v2712 = vld.sshfl [vmem:[#allocation1] sm:$0xff pattern:$0x73625140]
        %v2714 = vld.sshfl [vmem:[#allocation1 + $0x8] sm:$0xff pattern:$0x73625140]
        %v2716 = vld.sshfl [vmem:[#allocation1 + $0x10] sm:$0xff pattern:$0x73625140]
        %v2718 = vld.sshfl [vmem:[#allocation1 + $0x18] sm:$0xff pattern:$0x73625140]
        %v2720 = vld.sshfl [vmem:[#allocation1 + $0x20] sm:$0xff pattern:$0x73625140]
        %v2722 = vld.sshfl [vmem:[#allocation1 + $0x28] sm:$0xff pattern:$0x73625140]
        %v2724 = vld.sshfl [vmem:[#allocation1 + $0x30] sm:$0xff pattern:$0x73625140]
        %v2726 = vld.sshfl [vmem:[#allocation1 + $0x38] sm:$0xff pattern:$0x73625140]
        %2729 = vst [vmem:[#allocation1] ss:$4 sm:$0xff] %v2704
        %v2730 = vld.sshfl [vmem:[#allocation1] sm:$0xff pattern:$0x73625140]
        %2732 = vrot.lane.b32.xlu0 %v2712, 93
        %v2733 = vpop.permute.xlu0 %2732
        %2734 = vrot.lane.b32.xlu0 %v2714, 93
        %v2735 = vpop.permute.xlu0 %2734
        %2736 = vrot.lane.b32.xlu0 %v2716, 93
        %v2737 = vpop.permute.xlu0 %2736
        %2738 = vrot.lane.b32.xlu0 %v2718, 93
        %v2739 = vpop.permute.xlu0 %2738
        %2740 = vrot.lane.b32.xlu0 %v2720, 93
        %v2741 = vpop.permute.xlu0 %2740
        %2742 = vrot.lane.b32.xlu0 %v2722, 93
        %v2743 = vpop.permute.xlu0 %2742
        %2744 = vrot.lane.b32.xlu0 %v2724, 93
        %v2745 = vpop.permute.xlu0 %2744
        %2746 = vrot.lane.b32.xlu0 %v2726, 93
        %v2747 = vpop.permute.xlu0 %2746
        %2748 = vrot.lane.b32.xlu0 %v2730, 93
        %v2749 = vpop.permute.xlu0 %2748
        %vm2750 = vcmask 760832
        %v2751 = vsel %vm2750, %v2733, %v2735
        %v2752 = vsel %vm2750, %v2735, %v2737
        %v2753 = vsel %vm2750, %v2737, %v2739
        %v2754 = vsel %vm2750, %v2739, %v2741
        %v2755 = vsel %vm2750, %v2741, %v2743
        %v2756 = vsel %vm2750, %v2743, %v2745
        %v2757 = vsel %vm2750, %v2745, %v2747
        %v2758 = vsel %vm2750, %v2747, %v2749
        %v2760 = vsel %vm1978, %v2706, 0
        %v2763 = vsel %vm460, %v2751, 0
        %v2766 = vsel %vm460, %v2752, 0
        %v2769 = vsel %vm460, %v2753, 0
        %v2772 = vsel %vm460, %v2754, 0
        %v2775 = vsel %vm460, %v2755, 0
        %v2778 = vsel %vm460, %v2756, 0
        %v2781 = vsel %vm460, %v2757, 0
        %v2784 = vsel %vm460, %v2758, 0
        %v2787 = vsel %vm460, %v2749, 0
        %2789 = vmatpush.bf16.msra.mxu0 0
        %2790 = vmatpush.bf16.msra.mxu0 0
        %2791 = vmatpush.bf16.msra.mxu0 0
        %2792 = vmatpush.bf16.msra.mxu0 0
        %2793 = vmatpush.bf16.msra.mxu0 0
        %2794 = vmatpush.bf16.msra.mxu0 0
        %2795 = vmatpush.bf16.msra.mxu0 0
        %2796 = vmatpush.bf16.msra.mxu0 %v2763
        %2797 = vmatmul.bf16.gmra.mxu0 %v2760
        %v2798 = vpop.f32.mrf.mxu0
        %v2799 = vadd.f32 0.0, %v2798
        %v2800 = vpop.f32.mrf.mxu0
        %2801 = vdwg.mxu0
        %2802 = vmatpush.bf16.msra.mxu0 0
        %2803 = vmatpush.bf16.msra.mxu0 0
        %2804 = vmatpush.bf16.msra.mxu0 0
        %2805 = vmatpush.bf16.msra.mxu0 0
        %2806 = vmatpush.bf16.msra.mxu0 0
        %2807 = vmatpush.bf16.msra.mxu0 0
        %2808 = vmatpush.bf16.msra.mxu0 0
        %2809 = vmatpush.bf16.msra.mxu0 %v2766
        %2810 = vmatmul.bf16.gmra.mxu0 %v2760
        %v2811 = vpop.f32.mrf.mxu0
        %v2812 = vadd.f32 0.0, %v2811
        %v2813 = vpop.f32.mrf.mxu0
        %2814 = vdwg.mxu0
        %2815 = vmatpush.bf16.msra.mxu0 0
        %2816 = vmatpush.bf16.msra.mxu0 0
        %2817 = vmatpush.bf16.msra.mxu0 0
        %2818 = vmatpush.bf16.msra.mxu0 0
        %2819 = vmatpush.bf16.msra.mxu0 0
        %2820 = vmatpush.bf16.msra.mxu0 0
        %2821 = vmatpush.bf16.msra.mxu0 0
        %2822 = vmatpush.bf16.msra.mxu0 %v2769
        %2823 = vmatmul.bf16.gmra.mxu0 %v2760
        %v2824 = vpop.f32.mrf.mxu0
        %v2825 = vadd.f32 0.0, %v2824
        %v2826 = vpop.f32.mrf.mxu0
        %2827 = vdwg.mxu0
        %2828 = vmatpush.bf16.msra.mxu0 0
        %2829 = vmatpush.bf16.msra.mxu0 0
        %2830 = vmatpush.bf16.msra.mxu0 0
        %2831 = vmatpush.bf16.msra.mxu0 0
        %2832 = vmatpush.bf16.msra.mxu0 0
        %2833 = vmatpush.bf16.msra.mxu0 0
        %2834 = vmatpush.bf16.msra.mxu0 0
        %2835 = vmatpush.bf16.msra.mxu0 %v2772
        %2836 = vmatmul.bf16.gmra.mxu0 %v2760
        %v2837 = vpop.f32.mrf.mxu0
        %v2838 = vadd.f32 0.0, %v2837
        %v2839 = vpop.f32.mrf.mxu0
        %2840 = vdwg.mxu0
        %2841 = vmatpush.bf16.msra.mxu0 0
        %2842 = vmatpush.bf16.msra.mxu0 0
        %2843 = vmatpush.bf16.msra.mxu0 0
        %2844 = vmatpush.bf16.msra.mxu0 0
        %2845 = vmatpush.bf16.msra.mxu0 0
        %2846 = vmatpush.bf16.msra.mxu0 0
        %2847 = vmatpush.bf16.msra.mxu0 0
        %2848 = vmatpush.bf16.msra.mxu0 %v2775
        %2849 = vmatmul.bf16.gmra.mxu0 %v2760
        %v2850 = vpop.f32.mrf.mxu0
        %v2851 = vadd.f32 0.0, %v2850
        %v2852 = vpop.f32.mrf.mxu0
        %2853 = vdwg.mxu0
        %2854 = vmatpush.bf16.msra.mxu0 0
        %2855 = vmatpush.bf16.msra.mxu0 0
        %2856 = vmatpush.bf16.msra.mxu0 0
        %2857 = vmatpush.bf16.msra.mxu0 0
        %2858 = vmatpush.bf16.msra.mxu0 0
        %2859 = vmatpush.bf16.msra.mxu0 0
        %2860 = vmatpush.bf16.msra.mxu0 0
        %2861 = vmatpush.bf16.msra.mxu0 %v2778
        %2862 = vmatmul.bf16.gmra.mxu0 %v2760
        %v2863 = vpop.f32.mrf.mxu0
        %v2864 = vadd.f32 0.0, %v2863
        %v2865 = vpop.f32.mrf.mxu0
        %2866 = vdwg.mxu0
        %2867 = vmatpush.bf16.msra.mxu0 0
        %2868 = vmatpush.bf16.msra.mxu0 0
        %2869 = vmatpush.bf16.msra.mxu0 0
        %2870 = vmatpush.bf16.msra.mxu0 0
        %2871 = vmatpush.bf16.msra.mxu0 0
        %2872 = vmatpush.bf16.msra.mxu0 0
        %2873 = vmatpush.bf16.msra.mxu0 0
        %2874 = vmatpush.bf16.msra.mxu0 %v2781
        %2875 = vmatmul.bf16.gmra.mxu0 %v2760
        %v2876 = vpop.f32.mrf.mxu0
        %v2877 = vadd.f32 0.0, %v2876
        %v2878 = vpop.f32.mrf.mxu0
        %2879 = vdwg.mxu0
        %2880 = vmatpush.bf16.msra.mxu0 0
        %2881 = vmatpush.bf16.msra.mxu0 0
        %2882 = vmatpush.bf16.msra.mxu0 0
        %2883 = vmatpush.bf16.msra.mxu0 0
        %2884 = vmatpush.bf16.msra.mxu0 0
        %2885 = vmatpush.bf16.msra.mxu0 0
        %2886 = vmatpush.bf16.msra.mxu0 0
        %2887 = vmatpush.bf16.msra.mxu0 %v2784
        %2888 = vmatmul.bf16.gmra.mxu0 %v2760
        %v2889 = vpop.f32.mrf.mxu0
        %v2890 = vadd.f32 0.0, %v2889
        %v2891 = vpop.f32.mrf.mxu0
        %2892 = vdwg.mxu0
        %2893 = vmatpush.bf16.msra.mxu0 0
        %2894 = vmatpush.bf16.msra.mxu0 0
        %2895 = vmatpush.bf16.msra.mxu0 0
        %2896 = vmatpush.bf16.msra.mxu0 0
        %2897 = vmatpush.bf16.msra.mxu0 0
        %2898 = vmatpush.bf16.msra.mxu0 0
        %2899 = vmatpush.bf16.msra.mxu0 0
        %2900 = vmatpush.bf16.msra.mxu0 %v2787
        %2901 = vmatmul.bf16.gmra.mxu0 %v2760
        %v2902 = vpop.f32.mrf.mxu0
        %v2903 = vadd.f32 0.0, %v2902
        %v2904 = vpop.f32.mrf.mxu0
        %2905 = vdwg.mxu0
        %v2906 = vadd.f32 %v2693, %v2799
        %v2907 = vadd.f32 %v2694, %v2812
        %v2908 = vadd.f32 %v2695, %v2825
        %v2909 = vadd.f32 %v2696, %v2838
        %v2910 = vadd.f32 %v2697, %v2851
        %v2911 = vadd.f32 %v2698, %v2864
        %v2912 = vadd.f32 %v2699, %v2877
        %v2913 = vadd.f32 %v2700, %v2890
        %v2914 = vadd.f32 %v2701, %v2903
        %v2915 = vld [vmem:[#allocation2] sm:$0xff]
        %v2916 = vld [vmem:[#allocation2 + $0x8] sm:$0xff]
        %v2917 = vld [vmem:[#allocation2 + $0x10] sm:$0x3]
        %s2918 = scalar_lea.vmem %s3, 20
        %v2919 = vld [vmem:[%s2918] sm:$0xf]
        %2921 = vst [vmem:[#allocation1] ss:$4 sm:$0xff] %v2915
        %s2923 = scalar_lea.vmem [#allocation1], 32
        %2924 = vst [vmem:[%s2923] ss:$4 sm:$0xff] %v2916
        %v2925 = vld.sshfl [vmem:[#allocation1] sm:$0xff pattern:$0x73625140]
        %v2927 = vld.sshfl [vmem:[#allocation1 + $0x8] sm:$0xff pattern:$0x73625140]
        %v2929 = vld.sshfl [vmem:[#allocation1 + $0x10] sm:$0xff pattern:$0x73625140]
        %v2931 = vld.sshfl [vmem:[#allocation1 + $0x18] sm:$0xff pattern:$0x73625140]
        %v2933 = vld.sshfl [vmem:[#allocation1 + $0x20] sm:$0xff pattern:$0x73625140]
        %v2935 = vld.sshfl [vmem:[#allocation1 + $0x28] sm:$0xff pattern:$0x73625140]
        %v2937 = vld.sshfl [vmem:[#allocation1 + $0x30] sm:$0xff pattern:$0x73625140]
        %v2939 = vld.sshfl [vmem:[#allocation1 + $0x38] sm:$0xff pattern:$0x73625140]
        %2942 = vst [vmem:[#allocation1] ss:$4 sm:$0xff] %v2917
        %v2943 = vld.sshfl [vmem:[#allocation1] sm:$0xff pattern:$0x73625140]
        %2945 = vrot.lane.b32.xlu0 %v2925, 92
        %v2946 = vpop.permute.xlu0 %2945
        %2947 = vrot.lane.b32.xlu0 %v2927, 92
        %v2948 = vpop.permute.xlu0 %2947
        %2949 = vrot.lane.b32.xlu0 %v2929, 92
        %v2950 = vpop.permute.xlu0 %2949
        %2951 = vrot.lane.b32.xlu0 %v2931, 92
        %v2952 = vpop.permute.xlu0 %2951
        %2953 = vrot.lane.b32.xlu0 %v2933, 92
        %v2954 = vpop.permute.xlu0 %2953
        %2955 = vrot.lane.b32.xlu0 %v2935, 92
        %v2956 = vpop.permute.xlu0 %2955
        %2957 = vrot.lane.b32.xlu0 %v2937, 92
        %v2958 = vpop.permute.xlu0 %2957
        %2959 = vrot.lane.b32.xlu0 %v2939, 92
        %v2960 = vpop.permute.xlu0 %2959
        %2961 = vrot.lane.b32.xlu0 %v2943, 92
        %v2962 = vpop.permute.xlu0 %2961
        %vm2963 = vcmask 752640
        %v2964 = vsel %vm2963, %v2946, %v2948
        %v2965 = vsel %vm2963, %v2948, %v2950
        %v2966 = vsel %vm2963, %v2950, %v2952
        %v2967 = vsel %vm2963, %v2952, %v2954
        %v2968 = vsel %vm2963, %v2954, %v2956
        %v2969 = vsel %vm2963, %v2956, %v2958
        %v2970 = vsel %vm2963, %v2958, %v2960
        %v2971 = vsel %vm2963, %v2960, %v2962
        %v2973 = vsel %vm1978, %v2919, 0
        %v2976 = vsel %vm460, %v2964, 0
        %v2979 = vsel %vm460, %v2965, 0
        %v2982 = vsel %vm460, %v2966, 0
        %v2985 = vsel %vm460, %v2967, 0
        %v2988 = vsel %vm460, %v2968, 0
        %v2991 = vsel %vm460, %v2969, 0
        %v2994 = vsel %vm460, %v2970, 0
        %v2997 = vsel %vm460, %v2971, 0
        %v3000 = vsel %vm460, %v2962, 0
        %3002 = vmatpush.bf16.msra.mxu0 0
        %3003 = vmatpush.bf16.msra.mxu0 0
        %3004 = vmatpush.bf16.msra.mxu0 0
        %3005 = vmatpush.bf16.msra.mxu0 0
        %3006 = vmatpush.bf16.msra.mxu0 0
        %3007 = vmatpush.bf16.msra.mxu0 0
        %3008 = vmatpush.bf16.msra.mxu0 0
        %3009 = vmatpush.bf16.msra.mxu0 %v2976
        %3010 = vmatmul.bf16.gmra.mxu0 %v2973
        %v3011 = vpop.f32.mrf.mxu0
        %v3012 = vadd.f32 0.0, %v3011
        %v3013 = vpop.f32.mrf.mxu0
        %3014 = vdwg.mxu0
        %3015 = vmatpush.bf16.msra.mxu0 0
        %3016 = vmatpush.bf16.msra.mxu0 0
        %3017 = vmatpush.bf16.msra.mxu0 0
        %3018 = vmatpush.bf16.msra.mxu0 0
        %3019 = vmatpush.bf16.msra.mxu0 0
        %3020 = vmatpush.bf16.msra.mxu0 0
        %3021 = vmatpush.bf16.msra.mxu0 0
        %3022 = vmatpush.bf16.msra.mxu0 %v2979
        %3023 = vmatmul.bf16.gmra.mxu0 %v2973
        %v3024 = vpop.f32.mrf.mxu0
        %v3025 = vadd.f32 0.0, %v3024
        %v3026 = vpop.f32.mrf.mxu0
        %3027 = vdwg.mxu0
        %3028 = vmatpush.bf16.msra.mxu0 0
        %3029 = vmatpush.bf16.msra.mxu0 0
        %3030 = vmatpush.bf16.msra.mxu0 0
        %3031 = vmatpush.bf16.msra.mxu0 0
        %3032 = vmatpush.bf16.msra.mxu0 0
        %3033 = vmatpush.bf16.msra.mxu0 0
        %3034 = vmatpush.bf16.msra.mxu0 0
        %3035 = vmatpush.bf16.msra.mxu0 %v2982
        %3036 = vmatmul.bf16.gmra.mxu0 %v2973
        %v3037 = vpop.f32.mrf.mxu0
        %v3038 = vadd.f32 0.0, %v3037
        %v3039 = vpop.f32.mrf.mxu0
        %3040 = vdwg.mxu0
        %3041 = vmatpush.bf16.msra.mxu0 0
        %3042 = vmatpush.bf16.msra.mxu0 0
        %3043 = vmatpush.bf16.msra.mxu0 0
        %3044 = vmatpush.bf16.msra.mxu0 0
        %3045 = vmatpush.bf16.msra.mxu0 0
        %3046 = vmatpush.bf16.msra.mxu0 0
        %3047 = vmatpush.bf16.msra.mxu0 0
        %3048 = vmatpush.bf16.msra.mxu0 %v2985
        %3049 = vmatmul.bf16.gmra.mxu0 %v2973
        %v3050 = vpop.f32.mrf.mxu0
        %v3051 = vadd.f32 0.0, %v3050
        %v3052 = vpop.f32.mrf.mxu0
        %3053 = vdwg.mxu0
        %3054 = vmatpush.bf16.msra.mxu0 0
        %3055 = vmatpush.bf16.msra.mxu0 0
        %3056 = vmatpush.bf16.msra.mxu0 0
        %3057 = vmatpush.bf16.msra.mxu0 0
        %3058 = vmatpush.bf16.msra.mxu0 0
        %3059 = vmatpush.bf16.msra.mxu0 0
        %3060 = vmatpush.bf16.msra.mxu0 0
        %3061 = vmatpush.bf16.msra.mxu0 %v2988
        %3062 = vmatmul.bf16.gmra.mxu0 %v2973
        %v3063 = vpop.f32.mrf.mxu0
        %v3064 = vadd.f32 0.0, %v3063
        %v3065 = vpop.f32.mrf.mxu0
        %3066 = vdwg.mxu0
        %3067 = vmatpush.bf16.msra.mxu0 0
        %3068 = vmatpush.bf16.msra.mxu0 0
        %3069 = vmatpush.bf16.msra.mxu0 0
        %3070 = vmatpush.bf16.msra.mxu0 0
        %3071 = vmatpush.bf16.msra.mxu0 0
        %3072 = vmatpush.bf16.msra.mxu0 0
        %3073 = vmatpush.bf16.msra.mxu0 0
        %3074 = vmatpush.bf16.msra.mxu0 %v2991
        %3075 = vmatmul.bf16.gmra.mxu0 %v2973
        %v3076 = vpop.f32.mrf.mxu0
        %v3077 = vadd.f32 0.0, %v3076
        %v3078 = vpop.f32.mrf.mxu0
        %3079 = vdwg.mxu0
        %3080 = vmatpush.bf16.msra.mxu0 0
        %3081 = vmatpush.bf16.msra.mxu0 0
        %3082 = vmatpush.bf16.msra.mxu0 0
        %3083 = vmatpush.bf16.msra.mxu0 0
        %3084 = vmatpush.bf16.msra.mxu0 0
        %3085 = vmatpush.bf16.msra.mxu0 0
        %3086 = vmatpush.bf16.msra.mxu0 0
        %3087 = vmatpush.bf16.msra.mxu0 %v2994
        %3088 = vmatmul.bf16.gmra.mxu0 %v2973
        %v3089 = vpop.f32.mrf.mxu0
        %v3090 = vadd.f32 0.0, %v3089
        %v3091 = vpop.f32.mrf.mxu0
        %3092 = vdwg.mxu0
        %3093 = vmatpush.bf16.msra.mxu0 0
        %3094 = vmatpush.bf16.msra.mxu0 0
        %3095 = vmatpush.bf16.msra.mxu0 0
        %3096 = vmatpush.bf16.msra.mxu0 0
        %3097 = vmatpush.bf16.msra.mxu0 0
        %3098 = vmatpush.bf16.msra.mxu0 0
        %3099 = vmatpush.bf16.msra.mxu0 0
        %3100 = vmatpush.bf16.msra.mxu0 %v2997
        %3101 = vmatmul.bf16.gmra.mxu0 %v2973
        %v3102 = vpop.f32.mrf.mxu0
        %v3103 = vadd.f32 0.0, %v3102
        %v3104 = vpop.f32.mrf.mxu0
        %3105 = vdwg.mxu0
        %3106 = vmatpush.bf16.msra.mxu0 0
        %3107 = vmatpush.bf16.msra.mxu0 0
        %3108 = vmatpush.bf16.msra.mxu0 0
        %3109 = vmatpush.bf16.msra.mxu0 0
        %3110 = vmatpush.bf16.msra.mxu0 0
        %3111 = vmatpush.bf16.msra.mxu0 0
        %3112 = vmatpush.bf16.msra.mxu0 0
        %3113 = vmatpush.bf16.msra.mxu0 %v3000
        %3114 = vmatmul.bf16.gmra.mxu0 %v2973
        %v3115 = vpop.f32.mrf.mxu0
        %v3116 = vadd.f32 0.0, %v3115
        %v3117 = vpop.f32.mrf.mxu0
        %3118 = vdwg.mxu0
        %v3119 = vadd.f32 %v2906, %v3012
        %v3120 = vadd.f32 %v2907, %v3025
        %v3121 = vadd.f32 %v2908, %v3038
        %v3122 = vadd.f32 %v2909, %v3051
        %v3123 = vadd.f32 %v2910, %v3064
        %v3124 = vadd.f32 %v2911, %v3077
        %v3125 = vadd.f32 %v2912, %v3090
        %v3126 = vadd.f32 %v2913, %v3103
        %v3127 = vadd.f32 %v2914, %v3116
        %v3128 = vld [vmem:[#allocation2] sm:$0xff]
        %v3129 = vld [vmem:[#allocation2 + $0x8] sm:$0xff]
        %v3130 = vld [vmem:[#allocation2 + $0x10] sm:$0xf]
        %s3131 = scalar_lea.vmem %s3, 24
        %v3132 = vld [vmem:[%s3131] sm:$0xf]
        %3134 = vst [vmem:[#allocation1] ss:$4 sm:$0xff] %v3128
        %s3136 = scalar_lea.vmem [#allocation1], 32
        %3137 = vst [vmem:[%s3136] ss:$4 sm:$0xff] %v3129
        %v3138 = vld.sshfl [vmem:[#allocation1] sm:$0xff pattern:$0x73625140]
        %v3140 = vld.sshfl [vmem:[#allocation1 + $0x8] sm:$0xff pattern:$0x73625140]
        %v3142 = vld.sshfl [vmem:[#allocation1 + $0x10] sm:$0xff pattern:$0x73625140]
        %v3144 = vld.sshfl [vmem:[#allocation1 + $0x18] sm:$0xff pattern:$0x73625140]
        %v3146 = vld.sshfl [vmem:[#allocation1 + $0x20] sm:$0xff pattern:$0x73625140]
        %v3148 = vld.sshfl [vmem:[#allocation1 + $0x28] sm:$0xff pattern:$0x73625140]
        %v3150 = vld.sshfl [vmem:[#allocation1 + $0x30] sm:$0xff pattern:$0x73625140]
        %v3152 = vld.sshfl [vmem:[#allocation1 + $0x38] sm:$0xff pattern:$0x73625140]
        %3155 = vst [vmem:[#allocation1] ss:$4 sm:$0xff] %v3130
        %v3156 = vld.sshfl [vmem:[#allocation1] sm:$0xff pattern:$0x73625140]
        %v3158 = vld.sshfl [vmem:[#allocation1 + $0x8] sm:$0xff pattern:$0x73625140]
        %3160 = vrot.lane.b32.xlu0 %v3138, 60
        %v3161 = vpop.permute.xlu0 %3160
        %3162 = vrot.lane.b32.xlu0 %v3140, 60
        %v3163 = vpop.permute.xlu0 %3162
        %3164 = vrot.lane.b32.xlu0 %v3142, 60
        %v3165 = vpop.permute.xlu0 %3164
        %3166 = vrot.lane.b32.xlu0 %v3144, 60
        %v3167 = vpop.permute.xlu0 %3166
        %3168 = vrot.lane.b32.xlu0 %v3146, 60
        %v3169 = vpop.permute.xlu0 %3168
        %3170 = vrot.lane.b32.xlu0 %v3148, 60
        %v3171 = vpop.permute.xlu0 %3170
        %3172 = vrot.lane.b32.xlu0 %v3150, 60
        %v3173 = vpop.permute.xlu0 %3172
        %3174 = vrot.lane.b32.xlu0 %v3152, 60
        %v3175 = vpop.permute.xlu0 %3174
        %3176 = vrot.lane.b32.xlu0 %v3156, 60
        %v3177 = vpop.permute.xlu0 %3176
        %3178 = vrot.lane.b32.xlu0 %v3158, 60
        %v3179 = vpop.permute.xlu0 %3178
        %vm3180 = vcmask 490496
        %v3181 = vsel %vm3180, %v3161, %v3163
        %v3182 = vsel %vm3180, %v3163, %v3165
        %v3183 = vsel %vm3180, %v3165, %v3167
        %v3184 = vsel %vm3180, %v3167, %v3169
        %v3185 = vsel %vm3180, %v3169, %v3171
        %v3186 = vsel %vm3180, %v3171, %v3173
        %v3187 = vsel %vm3180, %v3173, %v3175
        %v3188 = vsel %vm3180, %v3175, %v3177
        %v3189 = vsel %vm3180, %v3177, %v3179
        %v3191 = vsel %vm1978, %v3132, 0
        %v3194 = vsel %vm460, %v3181, 0
        %v3197 = vsel %vm460, %v3182, 0
        %v3200 = vsel %vm460, %v3183, 0
        %v3203 = vsel %vm460, %v3184, 0
        %v3206 = vsel %vm460, %v3185, 0
        %v3209 = vsel %vm460, %v3186, 0
        %v3212 = vsel %vm460, %v3187, 0
        %v3215 = vsel %vm460, %v3188, 0
        %v3218 = vsel %vm460, %v3189, 0
        %3220 = vmatpush.bf16.msra.mxu0 0
        %3221 = vmatpush.bf16.msra.mxu0 0
        %3222 = vmatpush.bf16.msra.mxu0 0
        %3223 = vmatpush.bf16.msra.mxu0 0
        %3224 = vmatpush.bf16.msra.mxu0 0
        %3225 = vmatpush.bf16.msra.mxu0 0
        %3226 = vmatpush.bf16.msra.mxu0 0
        %3227 = vmatpush.bf16.msra.mxu0 %v3194
        %3228 = vmatmul.bf16.gmra.mxu0 %v3191
        %v3229 = vpop.f32.mrf.mxu0
        %v3230 = vadd.f32 0.0, %v3229
        %v3231 = vpop.f32.mrf.mxu0
        %3232 = vdwg.mxu0
        %3233 = vmatpush.bf16.msra.mxu0 0
        %3234 = vmatpush.bf16.msra.mxu0 0
        %3235 = vmatpush.bf16.msra.mxu0 0
        %3236 = vmatpush.bf16.msra.mxu0 0
        %3237 = vmatpush.bf16.msra.mxu0 0
        %3238 = vmatpush.bf16.msra.mxu0 0
        %3239 = vmatpush.bf16.msra.mxu0 0
        %3240 = vmatpush.bf16.msra.mxu0 %v3197
        %3241 = vmatmul.bf16.gmra.mxu0 %v3191
        %v3242 = vpop.f32.mrf.mxu0
        %v3243 = vadd.f32 0.0, %v3242
        %v3244 = vpop.f32.mrf.mxu0
        %3245 = vdwg.mxu0
        %3246 = vmatpush.bf16.msra.mxu0 0
        %3247 = vmatpush.bf16.msra.mxu0 0
        %3248 = vmatpush.bf16.msra.mxu0 0
        %3249 = vmatpush.bf16.msra.mxu0 0
        %3250 = vmatpush.bf16.msra.mxu0 0
        %3251 = vmatpush.bf16.msra.mxu0 0
        %3252 = vmatpush.bf16.msra.mxu0 0
        %3253 = vmatpush.bf16.msra.mxu0 %v3200
        %3254 = vmatmul.bf16.gmra.mxu0 %v3191
        %v3255 = vpop.f32.mrf.mxu0
        %v3256 = vadd.f32 0.0, %v3255
        %v3257 = vpop.f32.mrf.mxu0
        %3258 = vdwg.mxu0
        %3259 = vmatpush.bf16.msra.mxu0 0
        %3260 = vmatpush.bf16.msra.mxu0 0
        %3261 = vmatpush.bf16.msra.mxu0 0
        %3262 = vmatpush.bf16.msra.mxu0 0
        %3263 = vmatpush.bf16.msra.mxu0 0
        %3264 = vmatpush.bf16.msra.mxu0 0
        %3265 = vmatpush.bf16.msra.mxu0 0
        %3266 = vmatpush.bf16.msra.mxu0 %v3203
        %3267 = vmatmul.bf16.gmra.mxu0 %v3191
        %v3268 = vpop.f32.mrf.mxu0
        %v3269 = vadd.f32 0.0, %v3268
        %v3270 = vpop.f32.mrf.mxu0
        %3271 = vdwg.mxu0
        %3272 = vmatpush.bf16.msra.mxu0 0
        %3273 = vmatpush.bf16.msra.mxu0 0
        %3274 = vmatpush.bf16.msra.mxu0 0
        %3275 = vmatpush.bf16.msra.mxu0 0
        %3276 = vmatpush.bf16.msra.mxu0 0
        %3277 = vmatpush.bf16.msra.mxu0 0
        %3278 = vmatpush.bf16.msra.mxu0 0
        %3279 = vmatpush.bf16.msra.mxu0 %v3206
        %3280 = vmatmul.bf16.gmra.mxu0 %v3191
        %v3281 = vpop.f32.mrf.mxu0
        %v3282 = vadd.f32 0.0, %v3281
        %v3283 = vpop.f32.mrf.mxu0
        %3284 = vdwg.mxu0
        %3285 = vmatpush.bf16.msra.mxu0 0
        %3286 = vmatpush.bf16.msra.mxu0 0
        %3287 = vmatpush.bf16.msra.mxu0 0
        %3288 = vmatpush.bf16.msra.mxu0 0
        %3289 = vmatpush.bf16.msra.mxu0 0
        %3290 = vmatpush.bf16.msra.mxu0 0
        %3291 = vmatpush.bf16.msra.mxu0 0
        %3292 = vmatpush.bf16.msra.mxu0 %v3209
        %3293 = vmatmul.bf16.gmra.mxu0 %v3191
        %v3294 = vpop.f32.mrf.mxu0
        %v3295 = vadd.f32 0.0, %v3294
        %v3296 = vpop.f32.mrf.mxu0
        %3297 = vdwg.mxu0
        %3298 = vmatpush.bf16.msra.mxu0 0
        %3299 = vmatpush.bf16.msra.mxu0 0
        %3300 = vmatpush.bf16.msra.mxu0 0
        %3301 = vmatpush.bf16.msra.mxu0 0
        %3302 = vmatpush.bf16.msra.mxu0 0
        %3303 = vmatpush.bf16.msra.mxu0 0
        %3304 = vmatpush.bf16.msra.mxu0 0
        %3305 = vmatpush.bf16.msra.mxu0 %v3212
        %3306 = vmatmul.bf16.gmra.mxu0 %v3191
        %v3307 = vpop.f32.mrf.mxu0
        %v3308 = vadd.f32 0.0, %v3307
        %v3309 = vpop.f32.mrf.mxu0
        %3310 = vdwg.mxu0
        %3311 = vmatpush.bf16.msra.mxu0 0
        %3312 = vmatpush.bf16.msra.mxu0 0
        %3313 = vmatpush.bf16.msra.mxu0 0
        %3314 = vmatpush.bf16.msra.mxu0 0
        %3315 = vmatpush.bf16.msra.mxu0 0
        %3316 = vmatpush.bf16.msra.mxu0 0
        %3317 = vmatpush.bf16.msra.mxu0 0
        %3318 = vmatpush.bf16.msra.mxu0 %v3215
        %3319 = vmatmul.bf16.gmra.mxu0 %v3191
        %v3320 = vpop.f32.mrf.mxu0
        %v3321 = vadd.f32 0.0, %v3320
        %v3322 = vpop.f32.mrf.mxu0
        %3323 = vdwg.mxu0
        %3324 = vmatpush.bf16.msra.mxu0 0
        %3325 = vmatpush.bf16.msra.mxu0 0
        %3326 = vmatpush.bf16.msra.mxu0 0
        %3327 = vmatpush.bf16.msra.mxu0 0
        %3328 = vmatpush.bf16.msra.mxu0 0
        %3329 = vmatpush.bf16.msra.mxu0 0
        %3330 = vmatpush.bf16.msra.mxu0 0
        %3331 = vmatpush.bf16.msra.mxu0 %v3218
        %3332 = vmatmul.bf16.gmra.mxu0 %v3191
        %v3333 = vpop.f32.mrf.mxu0
        %v3334 = vadd.f32 0.0, %v3333
        %v3335 = vpop.f32.mrf.mxu0
        %3336 = vdwg.mxu0
        %v3337 = vadd.f32 %v3119, %v3230
        %v3338 = vadd.f32 %v3120, %v3243
        %v3339 = vadd.f32 %v3121, %v3256
        %v3340 = vadd.f32 %v3122, %v3269
        %v3341 = vadd.f32 %v3123, %v3282
        %v3342 = vadd.f32 %v3124, %v3295
        %v3343 = vadd.f32 %v3125, %v3308
        %v3344 = vadd.f32 %v3126, %v3321
        %v3345 = vadd.f32 %v3127, %v3334
        %v3346 = vld [vmem:[#allocation2] sm:$0xff]
        %v3347 = vld [vmem:[#allocation2 + $0x8] sm:$0xff]
        %v3348 = vld [vmem:[#allocation2 + $0x10] sm:$0xf]
        %s3349 = scalar_lea.vmem %s3, 28
        %v3350 = vld [vmem:[%s3349] sm:$0xf]
        %3352 = vst [vmem:[#allocation1] ss:$4 sm:$0xff] %v3346
        %s3354 = scalar_lea.vmem [#allocation1], 32
        %3355 = vst [vmem:[%s3354] ss:$4 sm:$0xff] %v3347
        %v3356 = vld.sshfl [vmem:[#allocation1] sm:$0xff pattern:$0x73625140]
        %v3358 = vld.sshfl [vmem:[#allocation1 + $0x8] sm:$0xff pattern:$0x73625140]
        %v3360 = vld.sshfl [vmem:[#allocation1 + $0x10] sm:$0xff pattern:$0x73625140]
        %v3362 = vld.sshfl [vmem:[#allocation1 + $0x18] sm:$0xff pattern:$0x73625140]
        %v3364 = vld.sshfl [vmem:[#allocation1 + $0x20] sm:$0xff pattern:$0x73625140]
        %v3366 = vld.sshfl [vmem:[#allocation1 + $0x28] sm:$0xff pattern:$0x73625140]
        %v3368 = vld.sshfl [vmem:[#allocation1 + $0x30] sm:$0xff pattern:$0x73625140]
        %v3370 = vld.sshfl [vmem:[#allocation1 + $0x38] sm:$0xff pattern:$0x73625140]
        %3373 = vst [vmem:[#allocation1] ss:$4 sm:$0xff] %v3348
        %v3374 = vld.sshfl [vmem:[#allocation1] sm:$0xff pattern:$0x73625140]
        %v3376 = vld.sshfl [vmem:[#allocation1 + $0x8] sm:$0xff pattern:$0x73625140]
        %3378 = vrot.lane.b32.xlu0 %v3356, 59
        %v3379 = vpop.permute.xlu0 %3378
        %3380 = vrot.lane.b32.xlu0 %v3358, 59
        %v3381 = vpop.permute.xlu0 %3380
        %3382 = vrot.lane.b32.xlu0 %v3360, 59
        %v3383 = vpop.permute.xlu0 %3382
        %3384 = vrot.lane.b32.xlu0 %v3362, 59
        %v3385 = vpop.permute.xlu0 %3384
        %3386 = vrot.lane.b32.xlu0 %v3364, 59
        %v3387 = vpop.permute.xlu0 %3386
        %3388 = vrot.lane.b32.xlu0 %v3366, 59
        %v3389 = vpop.permute.xlu0 %3388
        %3390 = vrot.lane.b32.xlu0 %v3368, 59
        %v3391 = vpop.permute.xlu0 %3390
        %3392 = vrot.lane.b32.xlu0 %v3370, 59
        %v3393 = vpop.permute.xlu0 %3392
        %3394 = vrot.lane.b32.xlu0 %v3374, 59
        %v3395 = vpop.permute.xlu0 %3394
        %3396 = vrot.lane.b32.xlu0 %v3376, 59
        %v3397 = vpop.permute.xlu0 %3396
        %vm3398 = vcmask 482304
        %v3399 = vsel %vm3398, %v3379, %v3381
        %v3400 = vsel %vm3398, %v3381, %v3383
        %v3401 = vsel %vm3398, %v3383, %v3385
        %v3402 = vsel %vm3398, %v3385, %v3387
        %v3403 = vsel %vm3398, %v3387, %v3389
        %v3404 = vsel %vm3398, %v3389, %v3391
        %v3405 = vsel %vm3398, %v3391, %v3393
        %v3406 = vsel %vm3398, %v3393, %v3395
        %v3407 = vsel %vm3398, %v3395, %v3397
        %v3409 = vsel %vm1978, %v3350, 0
        %v3412 = vsel %vm460, %v3399, 0
        %v3415 = vsel %vm460, %v3400, 0
        %v3418 = vsel %vm460, %v3401, 0
        %v3421 = vsel %vm460, %v3402, 0
        %v3424 = vsel %vm460, %v3403, 0
        %v3427 = vsel %vm460, %v3404, 0
        %v3430 = vsel %vm460, %v3405, 0
        %v3433 = vsel %vm460, %v3406, 0
        %v3436 = vsel %vm460, %v3407, 0
        %3438 = vmatpush.bf16.msra.mxu0 0
        %3439 = vmatpush.bf16.msra.mxu0 0
        %3440 = vmatpush.bf16.msra.mxu0 0
        %3441 = vmatpush.bf16.msra.mxu0 0
        %3442 = vmatpush.bf16.msra.mxu0 0
        %3443 = vmatpush.bf16.msra.mxu0 0
        %3444 = vmatpush.bf16.msra.mxu0 0
        %3445 = vmatpush.bf16.msra.mxu0 %v3412
        %3446 = vmatmul.bf16.gmra.mxu0 %v3409
        %v3447 = vpop.f32.mrf.mxu0
        %v3448 = vadd.f32 0.0, %v3447
        %v3449 = vpop.f32.mrf.mxu0
        %3450 = vdwg.mxu0
        %3451 = vmatpush.bf16.msra.mxu0 0
        %3452 = vmatpush.bf16.msra.mxu0 0
        %3453 = vmatpush.bf16.msra.mxu0 0
        %3454 = vmatpush.bf16.msra.mxu0 0
        %3455 = vmatpush.bf16.msra.mxu0 0
        %3456 = vmatpush.bf16.msra.mxu0 0
        %3457 = vmatpush.bf16.msra.mxu0 0
        %3458 = vmatpush.bf16.msra.mxu0 %v3415
        %3459 = vmatmul.bf16.gmra.mxu0 %v3409
        %v3460 = vpop.f32.mrf.mxu0
        %v3461 = vadd.f32 0.0, %v3460
        %v3462 = vpop.f32.mrf.mxu0
        %3463 = vdwg.mxu0
        %3464 = vmatpush.bf16.msra.mxu0 0
        %3465 = vmatpush.bf16.msra.mxu0 0
        %3466 = vmatpush.bf16.msra.mxu0 0
        %3467 = vmatpush.bf16.msra.mxu0 0
        %3468 = vmatpush.bf16.msra.mxu0 0
        %3469 = vmatpush.bf16.msra.mxu0 0
        %3470 = vmatpush.bf16.msra.mxu0 0
        %3471 = vmatpush.bf16.msra.mxu0 %v3418
        %3472 = vmatmul.bf16.gmra.mxu0 %v3409
        %v3473 = vpop.f32.mrf.mxu0
        %v3474 = vadd.f32 0.0, %v3473
        %v3475 = vpop.f32.mrf.mxu0
        %3476 = vdwg.mxu0
        %3477 = vmatpush.bf16.msra.mxu0 0
        %3478 = vmatpush.bf16.msra.mxu0 0
        %3479 = vmatpush.bf16.msra.mxu0 0
        %3480 = vmatpush.bf16.msra.mxu0 0
        %3481 = vmatpush.bf16.msra.mxu0 0
        %3482 = vmatpush.bf16.msra.mxu0 0
        %3483 = vmatpush.bf16.msra.mxu0 0
        %3484 = vmatpush.bf16.msra.mxu0 %v3421
        %3485 = vmatmul.bf16.gmra.mxu0 %v3409
        %v3486 = vpop.f32.mrf.mxu0
        %v3487 = vadd.f32 0.0, %v3486
        %v3488 = vpop.f32.mrf.mxu0
        %3489 = vdwg.mxu0
        %3490 = vmatpush.bf16.msra.mxu0 0
        %3491 = vmatpush.bf16.msra.mxu0 0
        %3492 = vmatpush.bf16.msra.mxu0 0
        %3493 = vmatpush.bf16.msra.mxu0 0
        %3494 = vmatpush.bf16.msra.mxu0 0
        %3495 = vmatpush.bf16.msra.mxu0 0
        %3496 = vmatpush.bf16.msra.mxu0 0
        %3497 = vmatpush.bf16.msra.mxu0 %v3424
        %3498 = vmatmul.bf16.gmra.mxu0 %v3409
        %v3499 = vpop.f32.mrf.mxu0
        %v3500 = vadd.f32 0.0, %v3499
        %v3501 = vpop.f32.mrf.mxu0
        %3502 = vdwg.mxu0
        %3503 = vmatpush.bf16.msra.mxu0 0
        %3504 = vmatpush.bf16.msra.mxu0 0
        %3505 = vmatpush.bf16.msra.mxu0 0
        %3506 = vmatpush.bf16.msra.mxu0 0
        %3507 = vmatpush.bf16.msra.mxu0 0
        %3508 = vmatpush.bf16.msra.mxu0 0
        %3509 = vmatpush.bf16.msra.mxu0 0
        %3510 = vmatpush.bf16.msra.mxu0 %v3427
        %3511 = vmatmul.bf16.gmra.mxu0 %v3409
        %v3512 = vpop.f32.mrf.mxu0
        %v3513 = vadd.f32 0.0, %v3512
        %v3514 = vpop.f32.mrf.mxu0
        %3515 = vdwg.mxu0
        %3516 = vmatpush.bf16.msra.mxu0 0
        %3517 = vmatpush.bf16.msra.mxu0 0
        %3518 = vmatpush.bf16.msra.mxu0 0
        %3519 = vmatpush.bf16.msra.mxu0 0
        %3520 = vmatpush.bf16.msra.mxu0 0
        %3521 = vmatpush.bf16.msra.mxu0 0
        %3522 = vmatpush.bf16.msra.mxu0 0
        %3523 = vmatpush.bf16.msra.mxu0 %v3430
        %3524 = vmatmul.bf16.gmra.mxu0 %v3409
        %v3525 = vpop.f32.mrf.mxu0
        %v3526 = vadd.f32 0.0, %v3525
        %v3527 = vpop.f32.mrf.mxu0
        %3528 = vdwg.mxu0
        %3529 = vmatpush.bf16.msra.mxu0 0
        %3530 = vmatpush.bf16.msra.mxu0 0
        %3531 = vmatpush.bf16.msra.mxu0 0
        %3532 = vmatpush.bf16.msra.mxu0 0
        %3533 = vmatpush.bf16.msra.mxu0 0
        %3534 = vmatpush.bf16.msra.mxu0 0
        %3535 = vmatpush.bf16.msra.mxu0 0
        %3536 = vmatpush.bf16.msra.mxu0 %v3433
        %3537 = vmatmul.bf16.gmra.mxu0 %v3409
        %v3538 = vpop.f32.mrf.mxu0
        %v3539 = vadd.f32 0.0, %v3538
        %v3540 = vpop.f32.mrf.mxu0
        %3541 = vdwg.mxu0
        %3542 = vmatpush.bf16.msra.mxu0 0
        %3543 = vmatpush.bf16.msra.mxu0 0
        %3544 = vmatpush.bf16.msra.mxu0 0
        %3545 = vmatpush.bf16.msra.mxu0 0
        %3546 = vmatpush.bf16.msra.mxu0 0
        %3547 = vmatpush.bf16.msra.mxu0 0
        %3548 = vmatpush.bf16.msra.mxu0 0
        %3549 = vmatpush.bf16.msra.mxu0 %v3436
        %3550 = vmatmul.bf16.gmra.mxu0 %v3409
        %v3551 = vpop.f32.mrf.mxu0
        %v3552 = vadd.f32 0.0, %v3551
        %v3553 = vpop.f32.mrf.mxu0
        %3554 = vdwg.mxu0
        %v3555 = vadd.f32 %v3337, %v3448
        %v3556 = vadd.f32 %v3338, %v3461
        %v3557 = vadd.f32 %v3339, %v3474
        %v3558 = vadd.f32 %v3340, %v3487
        %v3559 = vadd.f32 %v3341, %v3500
        %v3560 = vadd.f32 %v3342, %v3513
        %v3561 = vadd.f32 %v3343, %v3526
        %v3562 = vadd.f32 %v3344, %v3539
        %v3563 = vadd.f32 %v3345, %v3552
        %v3564 = vld [vmem:[#allocation2] sm:$0xff]
        %v3565 = vld [vmem:[#allocation2 + $0x8] sm:$0xff]
        %v3566 = vld [vmem:[#allocation2 + $0x10] sm:$0xf]
        %s3567 = scalar_lea.vmem %s3, 32
        %v3568 = vld [vmem:[%s3567] sm:$0xf]
        %3570 = vst [vmem:[#allocation1] ss:$4 sm:$0xff] %v3564
        %s3572 = scalar_lea.vmem [#allocation1], 32
        %3573 = vst [vmem:[%s3572] ss:$4 sm:$0xff] %v3565
        %v3574 = vld.sshfl [vmem:[#allocation1] sm:$0xff pattern:$0x73625140]
        %v3576 = vld.sshfl [vmem:[#allocation1 + $0x8] sm:$0xff pattern:$0x73625140]
        %v3578 = vld.sshfl [vmem:[#allocation1 + $0x10] sm:$0xff pattern:$0x73625140]
        %v3580 = vld.sshfl [vmem:[#allocation1 + $0x18] sm:$0xff pattern:$0x73625140]
        %v3582 = vld.sshfl [vmem:[#allocation1 + $0x20] sm:$0xff pattern:$0x73625140]
        %v3584 = vld.sshfl [vmem:[#allocation1 + $0x28] sm:$0xff pattern:$0x73625140]
        %v3586 = vld.sshfl [vmem:[#allocation1 + $0x30] sm:$0xff pattern:$0x73625140]
        %v3588 = vld.sshfl [vmem:[#allocation1 + $0x38] sm:$0xff pattern:$0x73625140]
        %3591 = vst [vmem:[#allocation1] ss:$4 sm:$0xff] %v3566
        %v3592 = vld.sshfl [vmem:[#allocation1] sm:$0xff pattern:$0x73625140]
        %v3594 = vld.sshfl [vmem:[#allocation1 + $0x8] sm:$0xff pattern:$0x73625140]
        %3596 = vrot.lane.b32.xlu0 %v3574, 58
        %v3597 = vpop.permute.xlu0 %3596
        %3598 = vrot.lane.b32.xlu0 %v3576, 58
        %v3599 = vpop.permute.xlu0 %3598
        %3600 = vrot.lane.b32.xlu0 %v3578, 58
        %v3601 = vpop.permute.xlu0 %3600
        %3602 = vrot.lane.b32.xlu0 %v3580, 58
        %v3603 = vpop.permute.xlu0 %3602
        %3604 = vrot.lane.b32.xlu0 %v3582, 58
        %v3605 = vpop.permute.xlu0 %3604
        %3606 = vrot.lane.b32.xlu0 %v3584, 58
        %v3607 = vpop.permute.xlu0 %3606
        %3608 = vrot.lane.b32.xlu0 %v3586, 58
        %v3609 = vpop.permute.xlu0 %3608
        %3610 = vrot.lane.b32.xlu0 %v3588, 58
        %v3611 = vpop.permute.xlu0 %3610
        %3612 = vrot.lane.b32.xlu0 %v3592, 58
        %v3613 = vpop.permute.xlu0 %3612
        %3614 = vrot.lane.b32.xlu0 %v3594, 58
        %v3615 = vpop.permute.xlu0 %3614
        %vm3616 = vcmask 474112
        %v3617 = vsel %vm3616, %v3597, %v3599
        %v3618 = vsel %vm3616, %v3599, %v3601
        %v3619 = vsel %vm3616, %v3601, %v3603
        %v3620 = vsel %vm3616, %v3603, %v3605
        %v3621 = vsel %vm3616, %v3605, %v3607
        %v3622 = vsel %vm3616, %v3607, %v3609
        %v3623 = vsel %vm3616, %v3609, %v3611
        %v3624 = vsel %vm3616, %v3611, %v3613
        %v3625 = vsel %vm3616, %v3613, %v3615
        %v3627 = vsel %vm1978, %v3568, 0
        %v3630 = vsel %vm460, %v3617, 0
        %v3633 = vsel %vm460, %v3618, 0
        %v3636 = vsel %vm460, %v3619, 0
        %v3639 = vsel %vm460, %v3620, 0
        %v3642 = vsel %vm460, %v3621, 0
        %v3645 = vsel %vm460, %v3622, 0
        %v3648 = vsel %vm460, %v3623, 0
        %v3651 = vsel %vm460, %v3624, 0
        %v3654 = vsel %vm460, %v3625, 0
        %3656 = vmatpush.bf16.msra.mxu0 0
        %3657 = vmatpush.bf16.msra.mxu0 0
        %3658 = vmatpush.bf16.msra.mxu0 0
        %3659 = vmatpush.bf16.msra.mxu0 0
        %3660 = vmatpush.bf16.msra.mxu0 0
        %3661 = vmatpush.bf16.msra.mxu0 0
        %3662 = vmatpush.bf16.msra.mxu0 0
        %3663 = vmatpush.bf16.msra.mxu0 %v3630
        %3664 = vmatmul.bf16.gmra.mxu0 %v3627
        %v3665 = vpop.f32.mrf.mxu0
        %v3666 = vadd.f32 0.0, %v3665
        %v3667 = vpop.f32.mrf.mxu0
        %3668 = vdwg.mxu0
        %3669 = vmatpush.bf16.msra.mxu0 0
        %3670 = vmatpush.bf16.msra.mxu0 0
        %3671 = vmatpush.bf16.msra.mxu0 0
        %3672 = vmatpush.bf16.msra.mxu0 0
        %3673 = vmatpush.bf16.msra.mxu0 0
        %3674 = vmatpush.bf16.msra.mxu0 0
        %3675 = vmatpush.bf16.msra.mxu0 0
        %3676 = vmatpush.bf16.msra.mxu0 %v3633
        %3677 = vmatmul.bf16.gmra.mxu0 %v3627
        %v3678 = vpop.f32.mrf.mxu0
        %v3679 = vadd.f32 0.0, %v3678
        %v3680 = vpop.f32.mrf.mxu0
        %3681 = vdwg.mxu0
        %3682 = vmatpush.bf16.msra.mxu0 0
        %3683 = vmatpush.bf16.msra.mxu0 0
        %3684 = vmatpush.bf16.msra.mxu0 0
        %3685 = vmatpush.bf16.msra.mxu0 0
        %3686 = vmatpush.bf16.msra.mxu0 0
        %3687 = vmatpush.bf16.msra.mxu0 0
        %3688 = vmatpush.bf16.msra.mxu0 0
        %3689 = vmatpush.bf16.msra.mxu0 %v3636
        %3690 = vmatmul.bf16.gmra.mxu0 %v3627
        %v3691 = vpop.f32.mrf.mxu0
        %v3692 = vadd.f32 0.0, %v3691
        %v3693 = vpop.f32.mrf.mxu0
        %3694 = vdwg.mxu0
        %3695 = vmatpush.bf16.msra.mxu0 0
        %3696 = vmatpush.bf16.msra.mxu0 0
        %3697 = vmatpush.bf16.msra.mxu0 0
        %3698 = vmatpush.bf16.msra.mxu0 0
        %3699 = vmatpush.bf16.msra.mxu0 0
        %3700 = vmatpush.bf16.msra.mxu0 0
        %3701 = vmatpush.bf16.msra.mxu0 0
        %3702 = vmatpush.bf16.msra.mxu0 %v3639
        %3703 = vmatmul.bf16.gmra.mxu0 %v3627
        %v3704 = vpop.f32.mrf.mxu0
        %v3705 = vadd.f32 0.0, %v3704
        %v3706 = vpop.f32.mrf.mxu0
        %3707 = vdwg.mxu0
        %3708 = vmatpush.bf16.msra.mxu0 0
        %3709 = vmatpush.bf16.msra.mxu0 0
        %3710 = vmatpush.bf16.msra.mxu0 0
        %3711 = vmatpush.bf16.msra.mxu0 0
        %3712 = vmatpush.bf16.msra.mxu0 0
        %3713 = vmatpush.bf16.msra.mxu0 0
        %3714 = vmatpush.bf16.msra.mxu0 0
        %3715 = vmatpush.bf16.msra.mxu0 %v3642
        %3716 = vmatmul.bf16.gmra.mxu0 %v3627
        %v3717 = vpop.f32.mrf.mxu0
        %v3718 = vadd.f32 0.0, %v3717
        %v3719 = vpop.f32.mrf.mxu0
        %3720 = vdwg.mxu0
        %3721 = vmatpush.bf16.msra.mxu0 0
        %3722 = vmatpush.bf16.msra.mxu0 0
        %3723 = vmatpush.bf16.msra.mxu0 0
        %3724 = vmatpush.bf16.msra.mxu0 0
        %3725 = vmatpush.bf16.msra.mxu0 0
        %3726 = vmatpush.bf16.msra.mxu0 0
        %3727 = vmatpush.bf16.msra.mxu0 0
        %3728 = vmatpush.bf16.msra.mxu0 %v3645
        %3729 = vmatmul.bf16.gmra.mxu0 %v3627
        %v3730 = vpop.f32.mrf.mxu0
        %v3731 = vadd.f32 0.0, %v3730
        %v3732 = vpop.f32.mrf.mxu0
        %3733 = vdwg.mxu0
        %3734 = vmatpush.bf16.msra.mxu0 0
        %3735 = vmatpush.bf16.msra.mxu0 0
        %3736 = vmatpush.bf16.msra.mxu0 0
        %3737 = vmatpush.bf16.msra.mxu0 0
        %3738 = vmatpush.bf16.msra.mxu0 0
        %3739 = vmatpush.bf16.msra.mxu0 0
        %3740 = vmatpush.bf16.msra.mxu0 0
        %3741 = vmatpush.bf16.msra.mxu0 %v3648
        %3742 = vmatmul.bf16.gmra.mxu0 %v3627
        %v3743 = vpop.f32.mrf.mxu0
        %v3744 = vadd.f32 0.0, %v3743
        %v3745 = vpop.f32.mrf.mxu0
        %3746 = vdwg.mxu0
        %3747 = vmatpush.bf16.msra.mxu0 0
        %3748 = vmatpush.bf16.msra.mxu0 0
        %3749 = vmatpush.bf16.msra.mxu0 0
        %3750 = vmatpush.bf16.msra.mxu0 0
        %3751 = vmatpush.bf16.msra.mxu0 0
        %3752 = vmatpush.bf16.msra.mxu0 0
        %3753 = vmatpush.bf16.msra.mxu0 0
        %3754 = vmatpush.bf16.msra.mxu0 %v3651
        %3755 = vmatmul.bf16.gmra.mxu0 %v3627
        %v3756 = vpop.f32.mrf.mxu0
        %v3757 = vadd.f32 0.0, %v3756
        %v3758 = vpop.f32.mrf.mxu0
        %3759 = vdwg.mxu0
        %3760 = vmatpush.bf16.msra.mxu0 0
        %3761 = vmatpush.bf16.msra.mxu0 0
        %3762 = vmatpush.bf16.msra.mxu0 0
        %3763 = vmatpush.bf16.msra.mxu0 0
        %3764 = vmatpush.bf16.msra.mxu0 0
        %3765 = vmatpush.bf16.msra.mxu0 0
        %3766 = vmatpush.bf16.msra.mxu0 0
        %3767 = vmatpush.bf16.msra.mxu0 %v3654
        %3768 = vmatmul.bf16.gmra.mxu0 %v3627
        %v3769 = vpop.f32.mrf.mxu0
        %v3770 = vadd.f32 0.0, %v3769
        %v3771 = vpop.f32.mrf.mxu0
        %3772 = vdwg.mxu0
        %v3773 = vadd.f32 %v3555, %v3666
        %v3774 = vadd.f32 %v3556, %v3679
        %v3775 = vadd.f32 %v3557, %v3692
        %v3776 = vadd.f32 %v3558, %v3705
        %v3777 = vadd.f32 %v3559, %v3718
        %v3778 = vadd.f32 %v3560, %v3731
        %v3779 = vadd.f32 %v3561, %v3744
        %v3780 = vadd.f32 %v3562, %v3757
        %v3781 = vadd.f32 %v3563, %v3770
        %v3782 = vld [vmem:[%s4] sm:$0xff]
        %3784 = vset.pattern.permute.xlu0 0
        %3785 = vperm.xlu0 %3784, %v3782
        %v3786 = vpop.permute.xlu0 %3785
        %v3788 = vadd.f32 %v3773, %v3786
        %v3789 = vadd.f32 %v3774, %v3786
        %v3790 = vadd.f32 %v3775, %v3786
        %v3791 = vadd.f32 %v3776, %v3786
        %v3792 = vadd.f32 %v3777, %v3786
        %v3793 = vadd.f32 %v3778, %v3786
        %v3794 = vadd.f32 %v3779, %v3786
        %v3795 = vadd.f32 %v3780, %v3786
        %v3796 = vadd.f32 %v3781, %v3786
        %vm3797 = vcmp.gt.f32.partialorder %v3788, 0.0
        %vm3798 = vcmp.gt.f32.partialorder %v3789, 0.0
        %vm3799 = vcmp.gt.f32.partialorder %v3790, 0.0
        %vm3800 = vcmp.gt.f32.partialorder %v3791, 0.0
        %vm3801 = vcmp.gt.f32.partialorder %v3792, 0.0
        %vm3802 = vcmp.gt.f32.partialorder %v3793, 0.0
        %vm3803 = vcmp.gt.f32.partialorder %v3794, 0.0
        %vm3804 = vcmp.gt.f32.partialorder %v3795, 0.0
        %vm3805 = vcmp.gt.f32.partialorder %v3796, 0.0
        %v3806 = vmin.f32 %v3788, 0.0
        %v3807 = vmin.f32 %v3789, 0.0
        %v3808 = vmin.f32 %v3790, 0.0
        %v3809 = vmin.f32 %v3791, 0.0
        %v3810 = vmin.f32 %v3792, 0.0
        %v3811 = vmin.f32 %v3793, 0.0
        %v3812 = vmin.f32 %v3794, 0.0
        %v3813 = vmin.f32 %v3795, 0.0
        %v3814 = vmin.f32 %v3796, 0.0
        %v3815 = vmul.f32 %v3806, 1.442695
        %v3816 = vpow.pop %v3815
        %v3817 = vmul.f32 %v3807, 1.442695
        %v3818 = vpow.pop %v3817
        %v3819 = vmul.f32 %v3808, 1.442695
        %v3820 = vpow.pop %v3819
        %v3821 = vmul.f32 %v3809, 1.442695
        %v3822 = vpow.pop %v3821
        %v3823 = vmul.f32 %v3810, 1.442695
        %v3824 = vpow.pop %v3823
        %v3825 = vmul.f32 %v3811, 1.442695
        %v3826 = vpow.pop %v3825
        %v3827 = vmul.f32 %v3812, 1.442695
        %v3828 = vpow.pop %v3827
        %v3829 = vmul.f32 %v3813, 1.442695
        %v3830 = vpow.pop %v3829
        %v3831 = vmul.f32 %v3814, 1.442695
        %v3832 = vpow.pop %v3831
        %v3833 = vsub.f32 %v3816, 1.0
        %v3834 = vsub.f32 %v3818, 1.0
        %v3835 = vsub.f32 %v3820, 1.0
        %v3836 = vsub.f32 %v3822, 1.0
        %v3837 = vsub.f32 %v3824, 1.0
        %v3838 = vsub.f32 %v3826, 1.0
        %v3839 = vsub.f32 %v3828, 1.0
        %v3840 = vsub.f32 %v3830, 1.0
        %v3841 = vsub.f32 %v3832, 1.0
        %v3842 = vsel %vm3797, %v3788, %v3833
        %v3843 = vsel %vm3798, %v3789, %v3834
        %v3844 = vsel %vm3799, %v3790, %v3835
        %v3845 = vsel %vm3800, %v3791, %v3836
        %v3846 = vsel %vm3801, %v3792, %v3837
        %v3847 = vsel %vm3802, %v3793, %v3838
        %v3848 = vsel %vm3803, %v3794, %v3839
        %v3849 = vsel %vm3804, %v3795, %v3840
        %v3850 = vsel %vm3805, %v3796, %v3841
        %3851 = vst [vmem:[%s217] sm:$0xff] %v3842
        %3852 = vst [vmem:[%s217 + $0x8] sm:$0xff] %v3843
        %3853 = vst [vmem:[%s217 + $0x10] sm:$0xff] %v3844
        %3854 = vst [vmem:[%s217 + $0x18] sm:$0xff] %v3845
        %3855 = vst [vmem:[%s217 + $0x20] sm:$0xff] %v3846
        %3856 = vst [vmem:[%s217 + $0x28] sm:$0xff] %v3847
        %3857 = vst [vmem:[%s217 + $0x30] sm:$0xff] %v3848
        %3858 = vst [vmem:[%s217 + $0x38] sm:$0xff] %v3849
        %vm3859 = vcmask 523264
        %3860 = vst.msk [vmem:[%s217 + $0x40] sm:$0xff] %vm3859, %v3850
        %s3861 = sand.u32 %s137, 1
        %s3862 = scalar_lea.sflag [#allocation4], %s3861
        %s3863 = sand.u32 %s137, 1
        %s3864 = smul.addr %s3863, 72
        %s3865 = scalar_lea.vmem [#allocation3], %s3864
        // Predicated region
        $region41: #{tpu_custom_call.1} parent=39 // pred_check
          %p3866 = pneg %p147
        $region42: #{tpu_custom_call.1} parent=39 // pred_check_branch
          %3868 = sbr.rel (%p3866) target = $region44
        $region43: #{tpu_custom_call.1} parent=39 // pred_region
          %3870 = vsyncadd %s3862, 0
          %s3871 = smul.addr %s19, 9
          %s3872 = smul.addr %s3871, 8
          %s3873 = scalar_lea.hbm %s5, %s3872
          %s3875 = sshll.u32 %s3865, 4
          %s3876 = int_to_ptr.vmem [resolvable:$true] %s3875
          %s3877 = sshll.u32 %s3873, 4
          %s3878 = int_to_ptr.hbm [resolvable:$true] %s3877
          %3880 = dma.vmem_to_hbm [thread:$0]  %s3876, 1152, %s3878, %s3862
        $region44: #{tpu_custom_call.1} parent=39 // pred_fallthru
          _
      $region40: #{tpu_custom_call.1} parent=5 // pred_fallthru
        _
      %p3881 = scmp.le.s32.totalorder 2, %s14
      // Predicated region
      $region45: #{tpu_custom_call.1} parent=5 // pred_check
        %p3882 = pneg %p3881
      $region46: #{tpu_custom_call.1} parent=5 // pred_check_branch
        %3884 = sbr.rel (%p3882) target = $region48
      $region47: #{tpu_custom_call.1} parent=5 // pred_region
        %s3885 = ssub.s32 %s14, 2
        // Predicated region
        $region49: #{tpu_custom_call.1} parent=47 // pred_check
          %p3886 = pneg %p153
        $region50: #{tpu_custom_call.1} parent=47 // pred_check_branch
          %3888 = sbr.rel (%p3886) target = $region52
        $region51: #{tpu_custom_call.1} parent=47 // pred_region
          %s3889 = sand.u32 %s138, 1
          %s3890 = scalar_lea.sflag [#allocation4], %s3889
          %s3891 = sand.u32 %s138, 1
          %s3892 = smul.addr %s3891, 72
          %s3893 = scalar_lea.vmem [#allocation3], %s3892
          %3895 = dma.done %s3890, 1152
        $region52: #{tpu_custom_call.1} parent=47 // pred_fallthru
          _
      $region48: #{tpu_custom_call.1} parent=5 // pred_fallthru
        _
    $region6: #{tpu_custom_call.1} parent=1 // loop_footer
      %s18 = sadd.s32 1, %s14
    $region7: #{tpu_custom_call.1} parent=1 // loop_footer_branch
      %13 = sbr.rel target = $region3
    $region8: #{tpu_custom_call.1} parent=1 // loop_exit
      _
    %3896 = vsyncpa [#allocation4], 1
    %s3897 = scalar_lea.sflag [#allocation4], 1
    %3898 = vsyncpa %s3897, 1

</llo_original>
